<compile_context>
chip_gen: v7x
topology: tpu7x:2x2x1
jax: 0.10.0
libtpu: 0.0.40
codegen_flags: <defaults>
</compile_context>

<pallas_src>
import jax
import jax.numpy as jnp
from jax import lax
from jax.experimental import pallas as pl
from jax.experimental.pallas import tpu as pltpu

# bitsandbytes NF4 codebook (16 entries).
NF4_CODE = (
    -1.0, -0.6961928009986877, -0.5250730514526367, -0.39491748809814453,
    -0.28444138169288635, -0.18477343022823334, -0.09105003625154495, 0.0,
    0.07958029955625534, 0.16093020141124725, 0.24611230194568634,
    0.33791524171829224, 0.44070982933044434, 0.5626170039176941,
    0.7229568362236023, 1.0,
)

BLOCKSIZE = 64  # bnb default quantization blocksize


# ---------------------------------------------------------------------------
# Tiling helpers (shared between packing and the kernel wrapper).
# ---------------------------------------------------------------------------
def nf4_block_k(k_in):
    """K-tile size used both for packing layout and the kernel grid."""
    return 1024 if (k_in % 1024 == 0 and k_in > 1024) else k_in


def _pick_tile(dim, candidates):
    for c in candidates:
        if dim % c == 0:
            return c
    return dim  # fall back to the full (un-tiled) dimension — always legal.


# ---------------------------------------------------------------------------
# Quantization (host-side, done once at weight-load time).
# ---------------------------------------------------------------------------
def quantize_nf4(weight):
    """Blockwise NF4 quantization of weight (N, K) -> (codes int32, absmax f32)."""
    n_out, k_in = weight.shape
    assert k_in % BLOCKSIZE == 0
    n_blocks = k_in // BLOCKSIZE
    blocks = weight.reshape(n_out, n_blocks, BLOCKSIZE).astype(jnp.float32)
    absmax = jnp.max(jnp.abs(blocks), axis=-1)                  # (N, NB)
    safe = jnp.where(absmax == 0, 1.0, absmax)
    normed = blocks / safe[:, :, None]                          # in [-1, 1]
    code = jnp.asarray(NF4_CODE, dtype=jnp.float32)             # (16,)
    codes = jnp.argmin(
        jnp.abs(normed[..., None] - code[None, None, None, :]), axis=-1
    ).astype(jnp.int32).reshape(n_out, k_in)
    return codes, absmax


def pack_nf4(codes, absmax):
    """Repack NF4 codes into the kernel's K-major, 8-codes-per-uint32 layout.

    Returns:
      packed_t: (K//8, N) uint32 — nibble j of row (t*tk/8 + p) holds the code
                for original k = t*tk + j*(tk//8) + p (planar per K-tile, so an
                in-kernel sublane concat of the 8 nibble planes restores the
                original K order).
      absmax_t: (K//64, N) f32 — per-block scales, K-major.
    """
    n_out, k_in = codes.shape
    tk = nf4_block_k(k_in)
    tkp = tk // 8
    ct = codes.T.astype(jnp.uint32).reshape(k_in // tk, 8, tkp, n_out)
    packed = ct[:, 0]
    for j in range(1, 8):
        packed = packed | (ct[:, j] << jnp.uint32(4 * j))
    packed_t = packed.reshape(k_in // 8, n_out)
    absmax_t = absmax.T.astype(jnp.float32)                     # (K//64, N)
    return packed_t, absmax_t


def dequantize_nf4(codes, absmax):
    """Reference (plain-JAX) dequantization for checking."""
    code = jnp.asarray(NF4_CODE, dtype=jnp.float32)
    n_out, k_in = codes.shape
    w = code[codes]
    scale = jnp.repeat(absmax, BLOCKSIZE, axis=1)
    return (w * scale).reshape(n_out, k_in)


# ---------------------------------------------------------------------------
# Pallas kernel.
# ---------------------------------------------------------------------------
def _linear4bit_kernel(x_ref, packed_ref, absmax_ref, bias_ref, o_ref, acc_ref):
    k_idx = pl.program_id(2)

    @pl.when(k_idx == 0)
    def _init():
        acc_ref[...] = jnp.zeros_like(acc_ref)

    packed = packed_ref[...]                       # (tk//8, tn) uint32
    tkp = packed.shape[0]
    tk = 8 * tkp
    tn = packed.shape[1]

    # Unpack 8 NF4 nibbles per uint32.  Planes are planar along K, so a sublane
    # concatenation restores the original K order — no lane interleaving.
    planes = [((packed >> jnp.uint32(4 * j)) & jnp.uint32(0xF)).astype(jnp.int32)
              for j in range(8)]
    codes = jnp.concatenate(planes, axis=0)        # (tk, tn) int32 in [0, 15]

    # 16-entry NF4 codebook lookup as a 4-level binary select tree (15 selects,
    # dependent depth 4) instead of a 15-deep where chain.
    b0 = (codes & 1) != 0
    b1 = (codes & 2) != 0
    b2 = (codes & 4) != 0
    b3 = (codes & 8) != 0
    lvl = [jnp.where(b0, jnp.float32(NF4_CODE[2 * i + 1]),
                     jnp.float32(NF4_CODE[2 * i])) for i in range(8)]
    lvl = [jnp.where(b1, lvl[2 * i + 1], lvl[2 * i]) for i in range(4)]
    lvl = [jnp.where(b2, lvl[2 * i + 1], lvl[2 * i]) for i in range(2)]
    w = jnp.where(b3, lvl[1], lvl[0])              # (tk, tn) f32 in [-1, 1]

    # Per-block absmax scaling: one broadcast multiply along sublanes
    # (blocksize divides the sublane tiling, so the reshapes are layout-free).
    am = absmax_ref[...]                           # (tk//BLOCKSIZE, tn) f32
    nb = am.shape[0]
    w = (w.reshape(nb, tk // nb, tn) * am[:, None, :]).reshape(tk, tn)

    # MXU matmul: weight tile is already (K, N), so no transpose/relayout.
    # x stays in its native dtype; accumulate in f32.
    acc_ref[...] += jnp.dot(x_ref[...], w.astype(x_ref.dtype),
                            preferred_element_type=jnp.float32)

    @pl.when(k_idx == pl.num_programs(2) - 1)
    def _epilogue():
        acc = acc_ref[...] + bias_ref[...].astype(jnp.float32)
        o_ref[...] = acc.astype(o_ref.dtype)


@jax.jit
def linear4bit(x, packed_t, absmax_t, bias):
    """Forward pass of Linear4bit: out = x @ dequant(W).T + bias (out in x.dtype)."""
    inp_dtype = x.dtype
    *lead, k_in = x.shape
    kp8, n_out = packed_t.shape
    assert kp8 * 8 == k_in
    m = 1
    for d in lead:
        m *= d
    x2d = x.reshape(m, k_in)                       # native dtype, no f32 upcast

    bias2d = (jnp.zeros((1, n_out), inp_dtype) if bias is None
              else bias.reshape(1, n_out).astype(inp_dtype))

    tm = _pick_tile(m, (512, 256, 128, 64, 32, 16, 8))
    tn = _pick_tile(n_out, (512, 256, 128))
    tk = nf4_block_k(k_in)
    grid = (m // tm, n_out // tn, k_in // tk)

    itemsize = jnp.dtype(inp_dtype).itemsize
    cost = pl.CostEstimate(
        flops=2 * m * n_out * k_in,
        transcendentals=0,
        bytes_accessed=(m * k_in * itemsize            # x
                        + kp8 * n_out * 4              # packed 4-bit weight
                        + absmax_t.size * 4            # scales
                        + n_out * itemsize             # bias
                        + m * n_out * itemsize))       # output

    out2d = pl.pallas_call(
        _linear4bit_kernel,
        out_shape=jax.ShapeDtypeStruct((m, n_out), inp_dtype),
        grid=grid,
        in_specs=[
            pl.BlockSpec((tm, tk), lambda i, j, k: (i, k)),               # x
            pl.BlockSpec((tk // 8, tn), lambda i, j, k: (k, j)),          # packed codes
            pl.BlockSpec((tk // BLOCKSIZE, tn), lambda i, j, k: (k, j)),  # absmax
            pl.BlockSpec((1, tn), lambda i, j, k: (0, j)),                # bias
        ],
        out_specs=pl.BlockSpec((tm, tn), lambda i, j, k: (i, j)),
        scratch_shapes=[pltpu.VMEM((tm, tn), jnp.float32)],
        compiler_params=pltpu.CompilerParams(
            dimension_semantics=("parallel", "parallel", "arbitrary"),
            vmem_limit_bytes=64 * 1024 * 1024),
        cost_estimate=cost,
    )(x2d, packed_t, absmax_t, bias2d)

    return out2d.reshape(*lead, n_out)


if __name__ == "__main__":
    key = jax.random.PRNGKey(0)
    k_x, k_w, k_b = jax.random.split(key, 3)

    batch, seq = 2, 8
    in_features, out_features = 2048, 384   # exercises N-parallel and K-reduction tiling

    x = jax.random.normal(k_x, (batch, seq, in_features), dtype=jnp.float32)
    weight = jax.random.normal(k_w, (out_features, in_features),
                               dtype=jnp.float32) * 0.05
    bias = jax.random.normal(k_b, (out_features,), dtype=jnp.float32) * 0.01

    # Deterministic in-script NF4 quantization (what Params4bit.cuda() would do),
    # followed by a one-time repack into the kernel's 4-bit K-major layout.
    codes, absmax = quantize_nf4(weight)
    packed_t, absmax_t = pack_nf4(codes, absmax)

    out = linear4bit(x, packed_t, absmax_t, bias)
    out = jax.block_until_ready(out)

    # Reference: dequantize then plain matmul + bias (matches bnb.matmul_4bit math).
    w_deq = dequantize_nf4(codes, absmax)
    ref = (jnp.dot(x.reshape(-1, in_features), w_deq.T,
                   precision=jax.lax.Precision.HIGHEST)
           + bias[None, :]).reshape(batch, seq, out_features).astype(x.dtype)

    assert out.shape == (batch, seq, out_features)
    assert out.dtype == x.dtype
    assert jnp.allclose(out, ref, atol=5e-3, rtol=5e-3), \
        float(jnp.max(jnp.abs(out - ref)))

    print("KERNEL_OK")
</pallas_src>

<mosaic_0001>
module attributes {stable_mosaic.version = 11 : i64} {
  func.func @_linear4bit_kernel(%arg0: i32, %arg1: i32, %arg2: i32, %arg3: memref<16x1024xf32, #tpu.memory_space<vmem>>, %arg4: memref<128x128xi32, #tpu.memory_space<vmem>>, %arg5: memref<16x128xf32, #tpu.memory_space<vmem>>, %arg6: memref<1x128xf32, #tpu.memory_space<vmem>>, %arg7: memref<16x128xf32, #tpu.memory_space<vmem>>, %arg8: memref<16x128xf32, #tpu.memory_space<vmem>>) attributes {dimension_semantics = [#tpu.dimension_semantics<parallel>, #tpu.dimension_semantics<parallel>, #tpu.dimension_semantics<arbitrary>], iteration_bounds = array<i64: 1, 3, 2>, scalar_prefetch = 0 : i64, scratch_operands = 1 : i64, tpu.core_type = #tpu.core_type<tc>, window_params = [{transform_indices = @transform_0, window_bounds = array<i64: 16, 1024>}, {transform_indices = @transform_1, window_bounds = array<i64: 128, 128>}, {transform_indices = @transform_2, window_bounds = array<i64: 16, 128>}, {transform_indices = @transform_3, window_bounds = array<i64: 1, 128>}, {transform_indices = @transform_4, window_bounds = array<i64: 16, 128>}]} {
    %c0_i32 = arith.constant 0 : i32
    %0 = arith.cmpi eq, %arg2, %c0_i32 : i32
    %1 = arith.extui %0 : i1 to i32
    %c0_i32_0 = arith.constant 0 : i32
    %2 = arith.cmpi ne, %1, %c0_i32_0 : i32
    scf.if %2 {
      %cst_42 = arith.constant 0.000000e+00 : f32
      %98 = vector.broadcast %cst_42 : f32 to vector<16x128xf32>
      %c0_43 = arith.constant 0 : index
      %c0_44 = arith.constant 0 : index
      %99 = vector.load %arg8[%c0_43, %c0_44] : memref<16x128xf32, #tpu.memory_space<vmem>>, vector<16x128xf32>
      tpu.vector_store %arg8[%c0_43, %c0_44], %98 {strides = array<i32>} : memref<16x128xf32, #tpu.memory_space<vmem>>, vector<16x128xf32>,
    } else {
    }
    %c0 = arith.constant 0 : index
    %c0_1 = arith.constant 0 : index
    %3 = vector.load %arg4[%c0, %c0_1] : memref<128x128xi32, #tpu.memory_space<vmem>>, vector<128x128xi32>
    %c0_i32_2 = arith.constant 0 : i32
    %4 = vector.broadcast %c0_i32_2 : i32 to vector<128x128xi32>
    %5 = arith.shrui %3, %4 : vector<128x128xi32>
    %c15_i32 = arith.constant 15 : i32
    %6 = vector.broadcast %c15_i32 : i32 to vector<128x128xi32>
    %7 = arith.andi %5, %6 : vector<128x128xi32>
    %c4_i32 = arith.constant 4 : i32
    %8 = vector.broadcast %c4_i32 : i32 to vector<128x128xi32>
    %9 = arith.shrui %3, %8 : vector<128x128xi32>
    %c15_i32_3 = arith.constant 15 : i32
    %10 = vector.broadcast %c15_i32_3 : i32 to vector<128x128xi32>
    %11 = arith.andi %9, %10 : vector<128x128xi32>
    %c8_i32 = arith.constant 8 : i32
    %12 = vector.broadcast %c8_i32 : i32 to vector<128x128xi32>
    %13 = arith.shrui %3, %12 : vector<128x128xi32>
    %c15_i32_4 = arith.constant 15 : i32
    %14 = vector.broadcast %c15_i32_4 : i32 to vector<128x128xi32>
    %15 = arith.andi %13, %14 : vector<128x128xi32>
    %c12_i32 = arith.constant 12 : i32
    %16 = vector.broadcast %c12_i32 : i32 to vector<128x128xi32>
    %17 = arith.shrui %3, %16 : vector<128x128xi32>
    %c15_i32_5 = arith.constant 15 : i32
    %18 = vector.broadcast %c15_i32_5 : i32 to vector<128x128xi32>
    %19 = arith.andi %17, %18 : vector<128x128xi32>
    %c16_i32 = arith.constant 16 : i32
    %20 = vector.broadcast %c16_i32 : i32 to vector<128x128xi32>
    %21 = arith.shrui %3, %20 : vector<128x128xi32>
    %c15_i32_6 = arith.constant 15 : i32
    %22 = vector.broadcast %c15_i32_6 : i32 to vector<128x128xi32>
    %23 = arith.andi %21, %22 : vector<128x128xi32>
    %c20_i32 = arith.constant 20 : i32
    %24 = vector.broadcast %c20_i32 : i32 to vector<128x128xi32>
    %25 = arith.shrui %3, %24 : vector<128x128xi32>
    %c15_i32_7 = arith.constant 15 : i32
    %26 = vector.broadcast %c15_i32_7 : i32 to vector<128x128xi32>
    %27 = arith.andi %25, %26 : vector<128x128xi32>
    %c24_i32 = arith.constant 24 : i32
    %28 = vector.broadcast %c24_i32 : i32 to vector<128x128xi32>
    %29 = arith.shrui %3, %28 : vector<128x128xi32>
    %c15_i32_8 = arith.constant 15 : i32
    %30 = vector.broadcast %c15_i32_8 : i32 to vector<128x128xi32>
    %31 = arith.andi %29, %30 : vector<128x128xi32>
    %c28_i32 = arith.constant 28 : i32
    %32 = vector.broadcast %c28_i32 : i32 to vector<128x128xi32>
    %33 = arith.shrui %3, %32 : vector<128x128xi32>
    %c15_i32_9 = arith.constant 15 : i32
    %34 = vector.broadcast %c15_i32_9 : i32 to vector<128x128xi32>
    %35 = arith.andi %33, %34 : vector<128x128xi32>
    %36 = tpu.concatenate %7, %11, %15, %19, %23, %27, %31, %35 in 0 : vector<128x128xi32>, vector<128x128xi32>, vector<128x128xi32>, vector<128x128xi32>, vector<128x128xi32>, vector<128x128xi32>, vector<128x128xi32>, vector<128x128xi32> -> vector<1024x128xi32>
    %c1_i32 = arith.constant 1 : i32
    %37 = vector.broadcast %c1_i32 : i32 to vector<1024x128xi32>
    %38 = arith.andi %36, %37 : vector<1024x128xi32>
    %c0_i32_10 = arith.constant 0 : i32
    %39 = vector.broadcast %c0_i32_10 : i32 to vector<1024x128xi32>
    %40 = arith.cmpi ne, %38, %39 : vector<1024x128xi32>
    %c2_i32 = arith.constant 2 : i32
    %41 = vector.broadcast %c2_i32 : i32 to vector<1024x128xi32>
    %42 = arith.andi %36, %41 : vector<1024x128xi32>
    %c0_i32_11 = arith.constant 0 : i32
    %43 = vector.broadcast %c0_i32_11 : i32 to vector<1024x128xi32>
    %44 = arith.cmpi ne, %42, %43 : vector<1024x128xi32>
    %c4_i32_12 = arith.constant 4 : i32
    %45 = vector.broadcast %c4_i32_12 : i32 to vector<1024x128xi32>
    %46 = arith.andi %36, %45 : vector<1024x128xi32>
    %c0_i32_13 = arith.constant 0 : i32
    %47 = vector.broadcast %c0_i32_13 : i32 to vector<1024x128xi32>
    %48 = arith.cmpi ne, %46, %47 : vector<1024x128xi32>
    %c8_i32_14 = arith.constant 8 : i32
    %49 = vector.broadcast %c8_i32_14 : i32 to vector<1024x128xi32>
    %50 = arith.andi %36, %49 : vector<1024x128xi32>
    %c0_i32_15 = arith.constant 0 : i32
    %51 = vector.broadcast %c0_i32_15 : i32 to vector<1024x128xi32>
    %52 = arith.cmpi ne, %50, %51 : vector<1024x128xi32>
    %cst = arith.constant -0.6961928 : f32
    %cst_16 = arith.constant -1.000000e+00 : f32
    %53 = vector.broadcast %cst : f32 to vector<1024x128xf32>
    %54 = vector.broadcast %cst_16 : f32 to vector<1024x128xf32>
    %55 = arith.select %40, %53, %54 : vector<1024x128xi1>, vector<1024x128xf32>
    %cst_17 = arith.constant -0.394917488 : f32
    %cst_18 = arith.constant -0.525073051 : f32
    %56 = vector.broadcast %cst_17 : f32 to vector<1024x128xf32>
    %57 = vector.broadcast %cst_18 : f32 to vector<1024x128xf32>
    %58 = arith.select %40, %56, %57 : vector<1024x128xi1>, vector<1024x128xf32>
    %cst_19 = arith.constant -0.18477343 : f32
    %cst_20 = arith.constant -0.284441382 : f32
    %59 = vector.broadcast %cst_19 : f32 to vector<1024x128xf32>
    %60 = vector.broadcast %cst_20 : f32 to vector<1024x128xf32>
    %61 = arith.select %40, %59, %60 : vector<1024x128xi1>, vector<1024x128xf32>
    %cst_21 = arith.constant 0.000000e+00 : f32
    %cst_22 = arith.constant -0.0910500362 : f32
    %62 = vector.broadcast %cst_21 : f32 to vector<1024x128xf32>
    %63 = vector.broadcast %cst_22 : f32 to vector<1024x128xf32>
    %64 = arith.select %40, %62, %63 : vector<1024x128xi1>, vector<1024x128xf32>
    %cst_23 = arith.constant 0.160930201 : f32
    %cst_24 = arith.constant 0.0795802995 : f32
    %65 = vector.broadcast %cst_23 : f32 to vector<1024x128xf32>
    %66 = vector.broadcast %cst_24 : f32 to vector<1024x128xf32>
    %67 = arith.select %40, %65, %66 : vector<1024x128xi1>, vector<1024x128xf32>
    %cst_25 = arith.constant 0.337915242 : f32
    %cst_26 = arith.constant 0.246112302 : f32
    %68 = vector.broadcast %cst_25 : f32 to vector<1024x128xf32>
    %69 = vector.broadcast %cst_26 : f32 to vector<1024x128xf32>
    %70 = arith.select %40, %68, %69 : vector<1024x128xi1>, vector<1024x128xf32>
    %cst_27 = arith.constant 5.626170e-01 : f32
    %cst_28 = arith.constant 0.440709829 : f32
    %71 = vector.broadcast %cst_27 : f32 to vector<1024x128xf32>
    %72 = vector.broadcast %cst_28 : f32 to vector<1024x128xf32>
    %73 = arith.select %40, %71, %72 : vector<1024x128xi1>, vector<1024x128xf32>
    %cst_29 = arith.constant 1.000000e+00 : f32
    %cst_30 = arith.constant 0.722956836 : f32
    %74 = vector.broadcast %cst_29 : f32 to vector<1024x128xf32>
    %75 = vector.broadcast %cst_30 : f32 to vector<1024x128xf32>
    %76 = arith.select %40, %74, %75 : vector<1024x128xi1>, vector<1024x128xf32>
    %77 = arith.select %44, %58, %55 : vector<1024x128xi1>, vector<1024x128xf32>
    %78 = arith.select %44, %64, %61 : vector<1024x128xi1>, vector<1024x128xf32>
    %79 = arith.select %44, %70, %67 : vector<1024x128xi1>, vector<1024x128xf32>
    %80 = arith.select %44, %76, %73 : vector<1024x128xi1>, vector<1024x128xf32>
    %81 = arith.select %48, %78, %77 : vector<1024x128xi1>, vector<1024x128xf32>
    %82 = arith.select %48, %80, %79 : vector<1024x128xi1>, vector<1024x128xf32>
    %83 = arith.select %52, %82, %81 : vector<1024x128xi1>, vector<1024x128xf32>
    %c0_31 = arith.constant 0 : index
    %c0_32 = arith.constant 0 : index
    %84 = vector.load %arg5[%c0_31, %c0_32] : memref<16x128xf32, #tpu.memory_space<vmem>>, vector<16x128xf32>
    %85 = vector.shape_cast %83 : vector<1024x128xf32> to vector<16x64x128xf32>
    %86 = vector.shape_cast %84 : vector<16x128xf32> to vector<16x1x128xf32>
    %87 = vector.broadcast %86 : vector<16x1x128xf32> to vector<16x64x128xf32>
    %88 = arith.mulf %85, %87 : vector<16x64x128xf32>
    %89 = vector.shape_cast %88 : vector<16x64x128xf32> to vector<1024x128xf32>
    %c0_33 = arith.constant 0 : index
    %c0_34 = arith.constant 0 : index
    %90 = vector.load %arg8[%c0_33, %c0_34] : memref<16x128xf32, #tpu.memory_space<vmem>>, vector<16x128xf32>
    %c0_35 = arith.constant 0 : index
    %c0_36 = arith.constant 0 : index
    %91 = vector.load %arg3[%c0_35, %c0_36] : memref<16x1024xf32, #tpu.memory_space<vmem>>, vector<16x1024xf32>
    %cst_37 = arith.constant dense<0.000000e+00> : vector<16x128xf32>
    %92 = tpu.matmul %91, %89, %cst_37 {dimension_numbers = #tpu.dot_dimension_numbers<[1], [0], [0], [1], [0, 0, 1, 1], [], []>} : vector<16x1024xf32>, vector<1024x128xf32>, vector<16x128xf32> -> vector<16x128xf32>
    %93 = arith.addf %90, %92 : vector<16x128xf32>
    %c0_38 = arith.constant 0 : index
    %c0_39 = arith.constant 0 : index
    %94 = vector.load %arg8[%c0_38, %c0_39] : memref<16x128xf32, #tpu.memory_space<vmem>>, vector<16x128xf32>
    tpu.vector_store %arg8[%c0_38, %c0_39], %93 {strides = array<i32>} : memref<16x128xf32, #tpu.memory_space<vmem>>, vector<16x128xf32>,
    %c1_i32_40 = arith.constant 1 : i32
    %95 = arith.cmpi eq, %arg2, %c1_i32_40 : i32
    %96 = arith.extui %95 : i1 to i32
    %c0_i32_41 = arith.constant 0 : i32
    %97 = arith.cmpi ne, %96, %c0_i32_41 : i32
    scf.if %97 {
      %c0_42 = arith.constant 0 : index
      %c0_43 = arith.constant 0 : index
      %98 = vector.load %arg8[%c0_42, %c0_43] : memref<16x128xf32, #tpu.memory_space<vmem>>, vector<16x128xf32>
      %c0_44 = arith.constant 0 : index
      %c0_45 = arith.constant 0 : index
      %99 = vector.load %arg6[%c0_44, %c0_45] : memref<1x128xf32, #tpu.memory_space<vmem>>, vector<1x128xf32>
      %100 = vector.broadcast %99 : vector<1x128xf32> to vector<16x128xf32>
      %101 = arith.addf %98, %100 : vector<16x128xf32>
      %c0_46 = arith.constant 0 : index
      %c0_47 = arith.constant 0 : index
      %102 = vector.load %arg7[%c0_46, %c0_47] : memref<16x128xf32, #tpu.memory_space<vmem>>, vector<16x128xf32>
      tpu.vector_store %arg7[%c0_46, %c0_47], %101 {strides = array<i32>} : memref<16x128xf32, #tpu.memory_space<vmem>>, vector<16x128xf32>,
    } else {
    }
    return
  }
  func.func @transform_0(%arg0: i32, %arg1: i32, %arg2: i32) -> (i32, i32) {
    %c0_i32 = arith.constant 0 : i32
    return %arg0, %arg2 : i32, i32
  }
  func.func @transform_1(%arg0: i32, %arg1: i32, %arg2: i32) -> (i32, i32) {
    %c0_i32 = arith.constant 0 : i32
    return %arg2, %arg1 : i32, i32
  }
  func.func @transform_2(%arg0: i32, %arg1: i32, %arg2: i32) -> (i32, i32) {
    %c0_i32 = arith.constant 0 : i32
    return %arg2, %arg1 : i32, i32
  }
  func.func @transform_3(%arg0: i32, %arg1: i32, %arg2: i32) -> (i32, i32) {
    %c0_i32 = arith.constant 0 : i32
    %c0_i32_0 = arith.constant 0 : i32
    return %c0_i32, %arg1 : i32, i32
  }
  func.func @transform_4(%arg0: i32, %arg1: i32, %arg2: i32) -> (i32, i32) {
    %c0_i32 = arith.constant 0 : i32
    return %arg0, %arg1 : i32, i32
  }
}

</mosaic_0001>

<llo_original>
// kernel: linear4bit.1
$region0: #{linear4bit.1}
  #allocation0 [shape = 'u32[]', space=smem, size = 0x4, offset = 0x4, fixed_abs, tag = 'smem constant byte address 0x4 - core index']
  #allocation1 [shape = 'u32[144,128]{1,0:T(1,128)}', space=vmem, size = 0x12000, scoped, tag = 'internal scratch']
  #allocation2 [shape = 'f32[16,128]{1,0:T(8,128)}', space=vmem, size = 0x2000, scoped, tag = 'scratch operand']
  %s0 = inlined_call_operand.hbm [shape: f32[16,2048], index: 0, kind: input, shape index: {}]
  %s1 = inlined_call_operand.hbm [shape: u32[256,384], index: 1, kind: input, shape index: {}]
  %s2 = inlined_call_operand.hbm [shape: f32[32,384], index: 2, kind: input, shape index: {}]
  %s3 = inlined_call_operand.hbm [shape: f32[1,384], index: 3, kind: input, shape index: {}]
  %s4 = inlined_call_operand.hbm [shape: f32[16,384], index: 4, kind: output, shape index: {}]
  %s5 = sld [smem:[#allocation0]]
  $region73: #{linear4bit.1} parent=0
    _
  %s7 = ssub.s32 1, %s5
  %s8 = scalar_select 0, %s7, %s5
  $region1: #{linear4bit.1} parent=0
    #allocation3 [shape = 'u8[131072]{0}', space=vmem, size = 0x20000, scoped, tag = 'input window, operand 0']
    #allocation4 [shape = 's32[2]{0}', space=sflag, size = 0x8, scoped, tag = 'scoped memory for linear4bit.1']
    #allocation5 [shape = 's32[2]{0}', space=sflag, size = 0x8, scoped, tag = 'scoped memory for linear4bit.1']
    #allocation6 [shape = 'u8[131072]{0}', space=vmem, size = 0x20000, scoped, tag = 'input window, operand 1']
    #allocation7 [shape = 's32[2]{0}', space=sflag, size = 0x8, scoped, tag = 'scoped memory for linear4bit.1']
    #allocation8 [shape = 'u8[16384]{0}', space=vmem, size = 0x4000, scoped, tag = 'input window, operand 2']
    #allocation9 [shape = 'u8[1024]{0}', space=vmem, size = 0x400, scoped, tag = 'input window, operand 3']
    #allocation10 [shape = 's32[2]{0}', space=sflag, size = 0x8, scoped, tag = 'scoped memory for linear4bit.1']
    #allocation11 [shape = 'u8[16384]{0}', space=vmem, size = 0x4000, scoped, tag = 'output window, operand 0']
    %9 = vsyncpa [#allocation4], 0
    %s10 = scalar_lea.sflag [#allocation4], 1
    %11 = vsyncpa %s10, 0
    %12 = vsyncpa [#allocation7], 0
    %s13 = scalar_lea.sflag [#allocation7], 1
    %14 = vsyncpa %s13, 0
    %15 = vsyncpa [#allocation10], 0
    %s16 = scalar_lea.sflag [#allocation10], 1
    %17 = vsyncpa %s16, 0
    %18 = vsyncpa [#allocation5], 0
    %s19 = scalar_lea.sflag [#allocation5], 1
    %20 = vsyncpa %s19, 0
    loop: start=0, step=1, limit=8
    $region2: #{linear4bit.1} parent=1 // loop_pre_header
      _
    $region3: #{linear4bit.1} parent=1 // loop_header
      %s22 = sphi 0, %s26
      %p23 = scmp.ge.s32.totalorder %s22, 8
      %s29 = sphi 0, %s48
      %s30 = sphi 0, %s44
      %s31 = sphi 0, %s40
      %s32 = sphi 0, %s29
      %s33 = sphi 0, %s30
      %s34 = sphi 0, %s31
      %s35 = sphi 0, %s32
      %s36 = sphi 0, %s33
      %s37 = sphi 0, %s34
      %s53 = sphi 0, %s55
      %s56 = sphi 0, %s53
      %s57 = sphi 0, %s56
      %s73 = sphi 0, %s57
      %s81 = sphi 0, %s83
      %s84 = sphi 0, %s81
      %s85 = sphi 0, %s84
      %s101 = sphi 0, %s85
      %s109 = sphi 0, %s111
      %s112 = sphi 0, %s109
      %s113 = sphi 0, %s112
      %s129 = sphi 0, %s113
      %s135 = sphi 0, %s137
      %s138 = sphi 0, %s135
      %s139 = sphi 0, %s138
      %s155 = sphi 0, %s139
      %s163 = sphi 0, %s165
      %s166 = sphi 0, %s163
      %s167 = sphi 0, %s166
      %s183 = sphi 0, %s167
    $region4: #{linear4bit.1} parent=1 // loop_header_branch
      %25 = sbr.rel (%p23) target = $region8
    $region5: #{linear4bit.1} parent=1 // loop_body
      %s27 = ssub.s32 %s22, 1
      %s28 = ssub.s32 %s22, 2
      %s38 = sadd.s32 1, %s31
      %p39 = scmp.ge.s32.totalorder %s38, 2
      %s40 = scalar_select %p39, 0, %s38
      %s41 = sadd.s32 1, %s30
      %s42 = scalar_select %p39, %s41, %s30
      %p43 = scmp.ge.s32.totalorder %s42, 3
      %s44 = scalar_select %p43, 0, %s42
      %s45 = sadd.s32 1, %s29
      %s46 = scalar_select %p43, %s45, %s29
      %p47 = scmp.ge.s32.totalorder %s46, 1
      %s48 = scalar_select %p47, 0, %s46
      %s49 = ssub.s32 %s29, %s48
      %s50 = ssub.s32 %s31, %s40
      %s51 = sor.u32 %s49, %s50
      %p52 = scmp.eq.s32.totalorder %s51, 0
      %s54 = sadd.s32 %s53, 1
      %s55 = scalar_select %p52, %s53, %s54
      %p58 = pneg %p52
      %p59 = scmp.eq.s32.totalorder %s22, 5
      %p60 = por %p58, %p59
      %p61 = scmp.ne.s32.totalorder %s53, %s56
      %p62 = scmp.eq.s32.totalorder %s22, 0
      %p63 = por %p61, %p62
      %p64 = scmp.ne.s32.totalorder %s53, %s56
      %p65 = scmp.eq.s32.totalorder %s27, 5
      %p66 = por %p64, %p65
      %p67 = scmp.ne.s32.totalorder %s56, %s57
      %p68 = scmp.eq.s32.totalorder %s27, 0
      %p69 = por %p67, %p68
      %p70 = scmp.ne.s32.totalorder %s56, %s57
      %p71 = scmp.eq.s32.totalorder %s28, 5
      %p72 = por %p70, %p71
      %p74 = scmp.ne.s32.totalorder %s57, %s73
      %p75 = scmp.eq.s32.totalorder %s28, 0
      %p76 = por %p74, %p75
      %s77 = ssub.s32 %s31, %s40
      %s78 = ssub.s32 %s30, %s44
      %s79 = sor.u32 %s77, %s78
      %p80 = scmp.eq.s32.totalorder %s79, 0
      %s82 = sadd.s32 %s81, 1
      %s83 = scalar_select %p80, %s81, %s82
      %p86 = pneg %p80
      %p87 = scmp.eq.s32.totalorder %s22, 5
      %p88 = por %p86, %p87
      %p89 = scmp.ne.s32.totalorder %s81, %s84
      %p90 = scmp.eq.s32.totalorder %s22, 0
      %p91 = por %p89, %p90
      %p92 = scmp.ne.s32.totalorder %s81, %s84
      %p93 = scmp.eq.s32.totalorder %s27, 5
      %p94 = por %p92, %p93
      %p95 = scmp.ne.s32.totalorder %s84, %s85
      %p96 = scmp.eq.s32.totalorder %s27, 0
      %p97 = por %p95, %p96
      %p98 = scmp.ne.s32.totalorder %s84, %s85
      %p99 = scmp.eq.s32.totalorder %s28, 5
      %p100 = por %p98, %p99
      %p102 = scmp.ne.s32.totalorder %s85, %s101
      %p103 = scmp.eq.s32.totalorder %s28, 0
      %p104 = por %p102, %p103
      %s105 = ssub.s32 %s31, %s40
      %s106 = ssub.s32 %s30, %s44
      %s107 = sor.u32 %s105, %s106
      %p108 = scmp.eq.s32.totalorder %s107, 0
      %s110 = sadd.s32 %s109, 1
      %s111 = scalar_select %p108, %s109, %s110
      %p114 = pneg %p108
      %p115 = scmp.eq.s32.totalorder %s22, 5
      %p116 = por %p114, %p115
      %p117 = scmp.ne.s32.totalorder %s109, %s112
      %p118 = scmp.eq.s32.totalorder %s22, 0
      %p119 = por %p117, %p118
      %p120 = scmp.ne.s32.totalorder %s109, %s112
      %p121 = scmp.eq.s32.totalorder %s27, 5
      %p122 = por %p120, %p121
      %p123 = scmp.ne.s32.totalorder %s112, %s113
      %p124 = scmp.eq.s32.totalorder %s27, 0
      %p125 = por %p123, %p124
      %p126 = scmp.ne.s32.totalorder %s112, %s113
      %p127 = scmp.eq.s32.totalorder %s28, 5
      %p128 = por %p126, %p127
      %p130 = scmp.ne.s32.totalorder %s113, %s129
      %p131 = scmp.eq.s32.totalorder %s28, 0
      %p132 = por %p130, %p131
      %s133 = ssub.s32 %s30, %s44
      %p134 = scmp.eq.s32.totalorder %s133, 0
      %s136 = sadd.s32 %s135, 1
      %s137 = scalar_select %p134, %s135, %s136
      %p140 = pneg %p134
      %p141 = scmp.eq.s32.totalorder %s22, 5
      %p142 = por %p140, %p141
      %p143 = scmp.ne.s32.totalorder %s135, %s138
      %p144 = scmp.eq.s32.totalorder %s22, 0
      %p145 = por %p143, %p144
      %p146 = scmp.ne.s32.totalorder %s135, %s138
      %p147 = scmp.eq.s32.totalorder %s27, 5
      %p148 = por %p146, %p147
      %p149 = scmp.ne.s32.totalorder %s138, %s139
      %p150 = scmp.eq.s32.totalorder %s27, 0
      %p151 = por %p149, %p150
      %p152 = scmp.ne.s32.totalorder %s138, %s139
      %p153 = scmp.eq.s32.totalorder %s28, 5
      %p154 = por %p152, %p153
      %p156 = scmp.ne.s32.totalorder %s139, %s155
      %p157 = scmp.eq.s32.totalorder %s28, 0
      %p158 = por %p156, %p157
      %s159 = ssub.s32 %s29, %s48
      %s160 = ssub.s32 %s30, %s44
      %s161 = sor.u32 %s159, %s160
      %p162 = scmp.eq.s32.totalorder %s161, 0
      %s164 = sadd.s32 %s163, 1
      %s165 = scalar_select %p162, %s163, %s164
      %p168 = pneg %p162
      %p169 = scmp.eq.s32.totalorder %s22, 5
      %p170 = por %p168, %p169
      %p171 = scmp.ne.s32.totalorder %s163, %s166
      %p172 = scmp.eq.s32.totalorder %s22, 0
      %p173 = por %p171, %p172
      %p174 = scmp.ne.s32.totalorder %s163, %s166
      %p175 = scmp.eq.s32.totalorder %s27, 5
      %p176 = por %p174, %p175
      %p177 = scmp.ne.s32.totalorder %s166, %s167
      %p178 = scmp.eq.s32.totalorder %s27, 0
      %p179 = por %p177, %p178
      %p180 = scmp.ne.s32.totalorder %s166, %s167
      %p181 = scmp.eq.s32.totalorder %s28, 5
      %p182 = por %p180, %p181
      %p184 = scmp.ne.s32.totalorder %s167, %s183
      %p185 = scmp.eq.s32.totalorder %s28, 0
      %p186 = por %p184, %p185
      %p187 = scmp.le.s32.totalorder 1, %s22
      %p188 = scmp.lt.s32.totalorder %s22, 7
      %p189 = pnand %p187, %p188
      %p190 = pneg %p189
      // Predicated region
      $region9: #{linear4bit.1} parent=5 // pred_check
        _
      $region10: #{linear4bit.1} parent=5 // pred_check_branch
        %192 = sbr.rel (%p189) target = $region12
      $region11: #{linear4bit.1} parent=5 // pred_region
        %s193 = ssub.s32 %s22, 1
      $region12: #{linear4bit.1} parent=5 // pred_fallthru
        _
      %p194 = scmp.lt.s32.totalorder %s22, 6
      // Predicated region
      $region13: #{linear4bit.1} parent=5 // pred_check
        %p195 = pneg %p194
      $region14: #{linear4bit.1} parent=5 // pred_check_branch
        %197 = sbr.rel (%p195) target = $region16
      $region15: #{linear4bit.1} parent=5 // pred_region
        // Predicated region
        $region17: #{linear4bit.1} parent=15 // pred_check
          %p198 = pneg %p63
        $region18: #{linear4bit.1} parent=15 // pred_check_branch
          %200 = sbr.rel (%p198) target = $region20
        $region19: #{linear4bit.1} parent=15 // pred_region
          %s201 = sand.u32 %s53, 1
          %s202 = scalar_lea.sflag [#allocation4], %s201
          %s203 = sand.u32 %s53, 1
          %s204 = smul.addr %s203, 128
          %s205 = scalar_lea.vmem [#allocation3], %s204
          %s206 = smul.u32 2, %s29
          %s207 = smul.u32 8, %s31
          %s209 = ssub.s32 2048, 2048
          %210 = vsyncadd %s202, %s209
          %s211 = smul.addr %s206, 16
          %s212 = sadd.s32 %s207, %s211
          %s213 = smul.addr %s212, 128
          %s214 = scalar_lea.hbm %s0, %s213
          %s215 = sshll.u32 %s205, 4
          %s216 = int_to_ptr.vmem [resolvable:$true] %s215
          %221 = dma.hbm_to_vmem [thread:$0]  %s214, 2048, %s216, %s202, 2048, 1024, 64
        $region20: #{linear4bit.1} parent=15 // pred_fallthru
          _
        // Predicated region
        $region21: #{linear4bit.1} parent=15 // pred_check
          %p222 = pneg %p91
        $region22: #{linear4bit.1} parent=15 // pred_check_branch
          %224 = sbr.rel (%p222) target = $region24
        $region23: #{linear4bit.1} parent=15 // pred_region
          %s225 = sand.u32 %s22, 1
          %s226 = scalar_lea.sflag [#allocation7], %s225
          %s227 = sand.u32 %s81, 1
          %s228 = smul.addr %s227, 128
          %s229 = scalar_lea.vmem [#allocation6], %s228
          %s230 = smul.u32 16, %s31
          %s232 = ssub.s32 2048, 2048
          %233 = vsyncadd %s226, %s232
          %s234 = smul.addr %s230, 3
          %s235 = sadd.s32 %s30, %s234
          %s236 = smul.addr %s235, 128
          %s237 = scalar_lea.hbm %s1, %s236
          %s238 = sshll.u32 %s229, 4
          %s239 = int_to_ptr.vmem [resolvable:$true] %s238
          %244 = dma.hbm_to_vmem [thread:$0]  %s237, 2048, %s239, %s226, 384, 128, 8
        $region24: #{linear4bit.1} parent=15 // pred_fallthru
          _
        // Predicated region
        $region25: #{linear4bit.1} parent=15 // pred_check
          %p245 = pneg %p119
        $region26: #{linear4bit.1} parent=15 // pred_check_branch
          %247 = sbr.rel (%p245) target = $region28
        $region27: #{linear4bit.1} parent=15 // pred_region
          %s248 = sand.u32 %s22, 1
          %s249 = scalar_lea.sflag [#allocation7], %s248
          %s250 = sand.u32 %s109, 1
          %s251 = smul.addr %s250, 16
          %s252 = scalar_lea.vmem [#allocation8], %s251
          %s253 = smul.u32 2, %s31
          %s255 = ssub.s32 256, 256
          %256 = vsyncadd %s249, %s255
          %s257 = smul.addr %s253, 3
          %s258 = sadd.s32 %s30, %s257
          %s259 = smul.addr %s258, 128
          %s260 = scalar_lea.hbm %s2, %s259
          %s261 = sshll.u32 %s252, 4
          %s262 = int_to_ptr.vmem [resolvable:$true] %s261
          %267 = dma.hbm_to_vmem [thread:$0]  %s260, 256, %s262, %s249, 384, 128, 8
        $region28: #{linear4bit.1} parent=15 // pred_fallthru
          _
        // Predicated region
        $region29: #{linear4bit.1} parent=15 // pred_check
          %p268 = pneg %p145
        $region30: #{linear4bit.1} parent=15 // pred_check_branch
          %270 = sbr.rel (%p268) target = $region32
        $region31: #{linear4bit.1} parent=15 // pred_region
          %s271 = sand.u32 %s135, 1
          %s272 = scalar_lea.sflag [#allocation10], %s271
          %s273 = sand.u32 %s135, 1
          %s274 = scalar_lea.vmem [#allocation9], %s273
          %s276 = ssub.s32 16, 16
          %277 = vsyncadd %s272, %s276
          %s278 = smul.addr %s30, 16
          %s279 = scalar_lea.hbm %s3, %s278
          %s281 = sshll.u32 %s274, 4
          %s282 = int_to_ptr.vmem [resolvable:$true] %s281
          %284 = dma.hbm_to_vmem [thread:$0]  %s279, 16, %s282, %s272
        $region32: #{linear4bit.1} parent=15 // pred_fallthru
          _
      $region16: #{linear4bit.1} parent=5 // pred_fallthru
        _
      %p285 = scmp.le.s32.totalorder 1, %s22
      %p286 = scmp.lt.s32.totalorder %s22, 7
      %p287 = pnand %p285, %p286
      %p288 = pneg %p287
      // Predicated region
      $region33: #{linear4bit.1} parent=5 // pred_check
        _
      $region34: #{linear4bit.1} parent=5 // pred_check_branch
        %290 = sbr.rel (%p287) target = $region36
      $region35: #{linear4bit.1} parent=5 // pred_region
        %s291 = ssub.s32 %s22, 1
        %s292 = sand.u32 %s56, 1
        %s293 = scalar_lea.sflag [#allocation4], %s292
        %s294 = sand.u32 %s56, 1
        %s295 = smul.addr %s294, 128
        %s296 = scalar_lea.vmem [#allocation3], %s295
        // Predicated region
        $region37: #{linear4bit.1} parent=35 // pred_check
          %p297 = pneg %p69
        $region38: #{linear4bit.1} parent=35 // pred_check_branch
          %299 = sbr.rel (%p297) target = $region40
        $region39: #{linear4bit.1} parent=35 // pred_region
          %300 = dma.done %s293, 2048
        $region40: #{linear4bit.1} parent=35 // pred_fallthru
          _
        %s301 = sand.u32 %s27, 1
        %s302 = scalar_lea.sflag [#allocation7], %s301
        %s303 = sand.u32 %s84, 1
        %s304 = smul.addr %s303, 128
        %s305 = scalar_lea.vmem [#allocation6], %s304
        // Predicated region
        $region41: #{linear4bit.1} parent=35 // pred_check
          %p306 = pneg %p97
        $region42: #{linear4bit.1} parent=35 // pred_check_branch
          %308 = sbr.rel (%p306) target = $region44
        $region43: #{linear4bit.1} parent=35 // pred_region
          %309 = dma.done %s302, 2048
        $region44: #{linear4bit.1} parent=35 // pred_fallthru
          _
        %s310 = sand.u32 %s27, 1
        %s311 = scalar_lea.sflag [#allocation7], %s310
        %s312 = sand.u32 %s112, 1
        %s313 = smul.addr %s312, 16
        %s314 = scalar_lea.vmem [#allocation8], %s313
        // Predicated region
        $region45: #{linear4bit.1} parent=35 // pred_check
          %p315 = pneg %p125
        $region46: #{linear4bit.1} parent=35 // pred_check_branch
          %317 = sbr.rel (%p315) target = $region48
        $region47: #{linear4bit.1} parent=35 // pred_region
          %318 = dma.done %s311, 256
        $region48: #{linear4bit.1} parent=35 // pred_fallthru
          _
        %s319 = sand.u32 %s138, 1
        %s320 = scalar_lea.sflag [#allocation10], %s319
        %s321 = sand.u32 %s138, 1
        %s322 = scalar_lea.vmem [#allocation9], %s321
        // Predicated region
        $region49: #{linear4bit.1} parent=35 // pred_check
          %p323 = pneg %p151
        $region50: #{linear4bit.1} parent=35 // pred_check_branch
          %325 = sbr.rel (%p323) target = $region52
        $region51: #{linear4bit.1} parent=35 // pred_region
          %326 = dma.done %s320, 16
        $region52: #{linear4bit.1} parent=35 // pred_fallthru
          _
        %s327 = sand.u32 %s56, 1
        %s328 = scalar_lea.sflag [#allocation4], %s327
        %s329 = sand.u32 %s56, 1
        %s330 = smul.addr %s329, 128
        %s331 = scalar_lea.vmem [#allocation3], %s330
        %p332 = pneg %p69
        %p333 = pneg %p66
        %s334 = sand.u32 %s27, 1
        %s335 = scalar_lea.sflag [#allocation7], %s334
        %s336 = sand.u32 %s84, 1
        %s337 = smul.addr %s336, 128
        %s338 = scalar_lea.vmem [#allocation6], %s337
        %p339 = pneg %p97
        %p340 = pneg %p94
        %s341 = sand.u32 %s27, 1
        %s342 = scalar_lea.sflag [#allocation7], %s341
        %s343 = sand.u32 %s112, 1
        %s344 = smul.addr %s343, 16
        %s345 = scalar_lea.vmem [#allocation8], %s344
        %p346 = pneg %p125
        %p347 = pneg %p122
        %s348 = sand.u32 %s138, 1
        %s349 = scalar_lea.sflag [#allocation10], %s348
        %s350 = sand.u32 %s138, 1
        %s351 = scalar_lea.vmem [#allocation9], %s350
        %p352 = pneg %p151
        %p353 = pneg %p148
        %p354 = pneg %p179
        %p355 = pneg %p176
        %s356 = sand.u32 %s166, 1
        %s357 = scalar_lea.sflag [#allocation5], %s356
        %s358 = sand.u32 %s166, 1
        %s359 = smul.addr %s358, 16
        %s360 = scalar_lea.vmem [#allocation11], %s359
        %s361 = smul.u32 2, %s32
        %s362 = smul.u32 8, %s34
        %s363 = smul.u32 16, %s34
        %s364 = smul.u32 2, %s34
        %s365 = smul.u32 2, %s32
        %p366 = scmp.eq.s32.totalorder %s34, 0
        // Predicated region
        $region53: #{linear4bit.1} parent=35 // pred_check
          %p367 = pneg %p366
        $region54: #{linear4bit.1} parent=35 // pred_check_branch
          %369 = sbr.rel (%p367) target = $region56
        $region55: #{linear4bit.1} parent=35 // pred_region
          %370 = vst [vmem:[#allocation2] sm:$0xff] 0.0
          %371 = vst [vmem:[#allocation2 + $0x8] sm:$0xff] 0.0
        $region56: #{linear4bit.1} parent=35 // pred_fallthru
          _
        %v372 = vld [vmem:[%s305] sm:$0xff]
        %v373 = vld [vmem:[%s305 + $0x8] sm:$0xff]
        %v374 = vld [vmem:[%s305 + $0x10] sm:$0xff]
        %v375 = vld [vmem:[%s305 + $0x18] sm:$0xff]
        %v376 = vld [vmem:[%s305 + $0x20] sm:$0xff]
        %v377 = vld [vmem:[%s305 + $0x28] sm:$0xff]
        %v378 = vld [vmem:[%s305 + $0x30] sm:$0xff]
        %v379 = vld [vmem:[%s305 + $0x38] sm:$0xff]
        %v380 = vld [vmem:[%s305 + $0x40] sm:$0xff]
        %v381 = vld [vmem:[%s305 + $0x48] sm:$0xff]
        %v382 = vld [vmem:[%s305 + $0x50] sm:$0xff]
        %v383 = vld [vmem:[%s305 + $0x58] sm:$0xff]
        %v384 = vld [vmem:[%s305 + $0x60] sm:$0xff]
        %v385 = vld [vmem:[%s305 + $0x68] sm:$0xff]
        %v386 = vld [vmem:[%s305 + $0x70] sm:$0xff]
        %v387 = vld [vmem:[%s305 + $0x78] sm:$0xff]
        %v388 = vand.u32 %v372, 15
        %v389 = vand.u32 %v373, 15
        %v390 = vand.u32 %v374, 15
        %v391 = vand.u32 %v375, 15
        %v392 = vand.u32 %v376, 15
        %v393 = vand.u32 %v377, 15
        %v394 = vand.u32 %v378, 15
        %v395 = vand.u32 %v379, 15
        %v396 = vand.u32 %v380, 15
        %v397 = vand.u32 %v381, 15
        %v398 = vand.u32 %v382, 15
        %v399 = vand.u32 %v383, 15
        %v400 = vand.u32 %v384, 15
        %v401 = vand.u32 %v385, 15
        %v402 = vand.u32 %v386, 15
        %v403 = vand.u32 %v387, 15
        %v404 = vshrl.u32 %v372, 4
        %v405 = vshrl.u32 %v373, 4
        %v406 = vshrl.u32 %v374, 4
        %v407 = vshrl.u32 %v375, 4
        %v408 = vshrl.u32 %v376, 4
        %v409 = vshrl.u32 %v377, 4
        %v410 = vshrl.u32 %v378, 4
        %v411 = vshrl.u32 %v379, 4
        %v412 = vshrl.u32 %v380, 4
        %v413 = vshrl.u32 %v381, 4
        %v414 = vshrl.u32 %v382, 4
        %v415 = vshrl.u32 %v383, 4
        %v416 = vshrl.u32 %v384, 4
        %v417 = vshrl.u32 %v385, 4
        %v418 = vshrl.u32 %v386, 4
        %v419 = vshrl.u32 %v387, 4
        %v420 = vand.u32 %v404, 15
        %v421 = vand.u32 %v405, 15
        %v422 = vand.u32 %v406, 15
        %v423 = vand.u32 %v407, 15
        %v424 = vand.u32 %v408, 15
        %v425 = vand.u32 %v409, 15
        %v426 = vand.u32 %v410, 15
        %v427 = vand.u32 %v411, 15
        %v428 = vand.u32 %v412, 15
        %v429 = vand.u32 %v413, 15
        %v430 = vand.u32 %v414, 15
        %v431 = vand.u32 %v415, 15
        %v432 = vand.u32 %v416, 15
        %v433 = vand.u32 %v417, 15
        %v434 = vand.u32 %v418, 15
        %v435 = vand.u32 %v419, 15
        %v436 = vshrl.u32 %v372, 8
        %v437 = vshrl.u32 %v373, 8
        %v438 = vshrl.u32 %v374, 8
        %v439 = vshrl.u32 %v375, 8
        %v440 = vshrl.u32 %v376, 8
        %v441 = vshrl.u32 %v377, 8
        %v442 = vshrl.u32 %v378, 8
        %v443 = vshrl.u32 %v379, 8
        %v444 = vshrl.u32 %v380, 8
        %v445 = vshrl.u32 %v381, 8
        %v446 = vshrl.u32 %v382, 8
        %v447 = vshrl.u32 %v383, 8
        %v448 = vshrl.u32 %v384, 8
        %v449 = vshrl.u32 %v385, 8
        %v450 = vshrl.u32 %v386, 8
        %v451 = vshrl.u32 %v387, 8
        %v452 = vand.u32 %v436, 15
        %v453 = vand.u32 %v437, 15
        %v454 = vand.u32 %v438, 15
        %v455 = vand.u32 %v439, 15
        %v456 = vand.u32 %v440, 15
        %v457 = vand.u32 %v441, 15
        %v458 = vand.u32 %v442, 15
        %v459 = vand.u32 %v443, 15
        %v460 = vand.u32 %v444, 15
        %v461 = vand.u32 %v445, 15
        %v462 = vand.u32 %v446, 15
        %v463 = vand.u32 %v447, 15
        %v464 = vand.u32 %v448, 15
        %v465 = vand.u32 %v449, 15
        %v466 = vand.u32 %v450, 15
        %v467 = vand.u32 %v451, 15
        %v468 = vshrl.u32 %v372, 12
        %v469 = vshrl.u32 %v373, 12
        %v470 = vshrl.u32 %v374, 12
        %v471 = vshrl.u32 %v375, 12
        %v472 = vshrl.u32 %v376, 12
        %v473 = vshrl.u32 %v377, 12
        %v474 = vshrl.u32 %v378, 12
        %v475 = vshrl.u32 %v379, 12
        %v476 = vshrl.u32 %v380, 12
        %v477 = vshrl.u32 %v381, 12
        %v478 = vshrl.u32 %v382, 12
        %v479 = vshrl.u32 %v383, 12
        %v480 = vshrl.u32 %v384, 12
        %v481 = vshrl.u32 %v385, 12
        %v482 = vshrl.u32 %v386, 12
        %v483 = vshrl.u32 %v387, 12
        %v484 = vand.u32 %v468, 15
        %v485 = vand.u32 %v469, 15
        %v486 = vand.u32 %v470, 15
        %v487 = vand.u32 %v471, 15
        %v488 = vand.u32 %v472, 15
        %v489 = vand.u32 %v473, 15
        %v490 = vand.u32 %v474, 15
        %v491 = vand.u32 %v475, 15
        %v492 = vand.u32 %v476, 15
        %v493 = vand.u32 %v477, 15
        %v494 = vand.u32 %v478, 15
        %v495 = vand.u32 %v479, 15
        %v496 = vand.u32 %v480, 15
        %v497 = vand.u32 %v481, 15
        %v498 = vand.u32 %v482, 15
        %v499 = vand.u32 %v483, 15
        %v500 = vshrl.u32 %v372, 16
        %v501 = vshrl.u32 %v373, 16
        %v502 = vshrl.u32 %v374, 16
        %v503 = vshrl.u32 %v375, 16
        %v504 = vshrl.u32 %v376, 16
        %v505 = vshrl.u32 %v377, 16
        %v506 = vshrl.u32 %v378, 16
        %v507 = vshrl.u32 %v379, 16
        %v508 = vshrl.u32 %v380, 16
        %v509 = vshrl.u32 %v381, 16
        %v510 = vshrl.u32 %v382, 16
        %v511 = vshrl.u32 %v383, 16
        %v512 = vshrl.u32 %v384, 16
        %v513 = vshrl.u32 %v385, 16
        %v514 = vshrl.u32 %v386, 16
        %v515 = vshrl.u32 %v387, 16
        %v516 = vand.u32 %v500, 15
        %v517 = vand.u32 %v501, 15
        %v518 = vand.u32 %v502, 15
        %v519 = vand.u32 %v503, 15
        %v520 = vand.u32 %v504, 15
        %v521 = vand.u32 %v505, 15
        %v522 = vand.u32 %v506, 15
        %v523 = vand.u32 %v507, 15
        %v524 = vand.u32 %v508, 15
        %v525 = vand.u32 %v509, 15
        %v526 = vand.u32 %v510, 15
        %v527 = vand.u32 %v511, 15
        %v528 = vand.u32 %v512, 15
        %v529 = vand.u32 %v513, 15
        %v530 = vand.u32 %v514, 15
        %v531 = vand.u32 %v515, 15
        %v532 = vshrl.u32 %v372, 20
        %v533 = vshrl.u32 %v373, 20
        %v534 = vshrl.u32 %v374, 20
        %v535 = vshrl.u32 %v375, 20
        %v536 = vshrl.u32 %v376, 20
        %v537 = vshrl.u32 %v377, 20
        %v538 = vshrl.u32 %v378, 20
        %v539 = vshrl.u32 %v379, 20
        %v540 = vshrl.u32 %v380, 20
        %v541 = vshrl.u32 %v381, 20
        %v542 = vshrl.u32 %v382, 20
        %v543 = vshrl.u32 %v383, 20
        %v544 = vshrl.u32 %v384, 20
        %v545 = vshrl.u32 %v385, 20
        %v546 = vshrl.u32 %v386, 20
        %v547 = vshrl.u32 %v387, 20
        %v548 = vand.u32 %v532, 15
        %v549 = vand.u32 %v533, 15
        %v550 = vand.u32 %v534, 15
        %v551 = vand.u32 %v535, 15
        %v552 = vand.u32 %v536, 15
        %v553 = vand.u32 %v537, 15
        %v554 = vand.u32 %v538, 15
        %v555 = vand.u32 %v539, 15
        %v556 = vand.u32 %v540, 15
        %v557 = vand.u32 %v541, 15
        %v558 = vand.u32 %v542, 15
        %v559 = vand.u32 %v543, 15
        %v560 = vand.u32 %v544, 15
        %v561 = vand.u32 %v545, 15
        %v562 = vand.u32 %v546, 15
        %v563 = vand.u32 %v547, 15
        %v564 = vshrl.u32 %v372, 24
        %v565 = vshrl.u32 %v373, 24
        %v566 = vshrl.u32 %v374, 24
        %v567 = vshrl.u32 %v375, 24
        %v568 = vshrl.u32 %v376, 24
        %v569 = vshrl.u32 %v377, 24
        %v570 = vshrl.u32 %v378, 24
        %v571 = vshrl.u32 %v379, 24
        %v572 = vshrl.u32 %v380, 24
        %v573 = vshrl.u32 %v381, 24
        %v574 = vshrl.u32 %v382, 24
        %v575 = vshrl.u32 %v383, 24
        %v576 = vshrl.u32 %v384, 24
        %v577 = vshrl.u32 %v385, 24
        %v578 = vshrl.u32 %v386, 24
        %v579 = vshrl.u32 %v387, 24
        %v580 = vand.u32 %v564, 15
        %v581 = vand.u32 %v565, 15
        %v582 = vand.u32 %v566, 15
        %v583 = vand.u32 %v567, 15
        %v584 = vand.u32 %v568, 15
        %v585 = vand.u32 %v569, 15
        %v586 = vand.u32 %v570, 15
        %v587 = vand.u32 %v571, 15
        %v588 = vand.u32 %v572, 15
        %v589 = vand.u32 %v573, 15
        %v590 = vand.u32 %v574, 15
        %v591 = vand.u32 %v575, 15
        %v592 = vand.u32 %v576, 15
        %v593 = vand.u32 %v577, 15
        %v594 = vand.u32 %v578, 15
        %v595 = vand.u32 %v579, 15
        %v596 = vshrl.u32 %v372, 28
        %v597 = vshrl.u32 %v373, 28
        %v598 = vshrl.u32 %v374, 28
        %v599 = vshrl.u32 %v375, 28
        %v600 = vshrl.u32 %v376, 28
        %v601 = vshrl.u32 %v377, 28
        %v602 = vshrl.u32 %v378, 28
        %v603 = vshrl.u32 %v379, 28
        %v604 = vshrl.u32 %v380, 28
        %v605 = vshrl.u32 %v381, 28
        %v606 = vshrl.u32 %v382, 28
        %v607 = vshrl.u32 %v383, 28
        %v608 = vshrl.u32 %v384, 28
        %v609 = vshrl.u32 %v385, 28
        %v610 = vshrl.u32 %v386, 28
        %v611 = vshrl.u32 %v387, 28
        %v612 = vand.u32 %v596, 15
        %v613 = vand.u32 %v597, 15
        %v614 = vand.u32 %v598, 15
        %v615 = vand.u32 %v599, 15
        %v616 = vand.u32 %v600, 15
        %v617 = vand.u32 %v601, 15
        %v618 = vand.u32 %v602, 15
        %v619 = vand.u32 %v603, 15
        %v620 = vand.u32 %v604, 15
        %v621 = vand.u32 %v605, 15
        %v622 = vand.u32 %v606, 15
        %v623 = vand.u32 %v607, 15
        %v624 = vand.u32 %v608, 15
        %v625 = vand.u32 %v609, 15
        %v626 = vand.u32 %v610, 15
        %v627 = vand.u32 %v611, 15
        %v628 = vand.u32 %v388, 1
        %v629 = vand.u32 %v389, 1
        %v630 = vand.u32 %v390, 1
        %v631 = vand.u32 %v391, 1
        %v632 = vand.u32 %v392, 1
        %v633 = vand.u32 %v393, 1
        %v634 = vand.u32 %v394, 1
        %v635 = vand.u32 %v395, 1
        %v636 = vand.u32 %v396, 1
        %v637 = vand.u32 %v397, 1
        %v638 = vand.u32 %v398, 1
        %v639 = vand.u32 %v399, 1
        %v640 = vand.u32 %v400, 1
        %v641 = vand.u32 %v401, 1
        %v642 = vand.u32 %v402, 1
        %v643 = vand.u32 %v403, 1
        %v644 = vand.u32 %v420, 1
        %v645 = vand.u32 %v421, 1
        %v646 = vand.u32 %v422, 1
        %v647 = vand.u32 %v423, 1
        %v648 = vand.u32 %v424, 1
        %v649 = vand.u32 %v425, 1
        %v650 = vand.u32 %v426, 1
        %v651 = vand.u32 %v427, 1
        %v652 = vand.u32 %v428, 1
        %v653 = vand.u32 %v429, 1
        %v654 = vand.u32 %v430, 1
        %v655 = vand.u32 %v431, 1
        %v656 = vand.u32 %v432, 1
        %v657 = vand.u32 %v433, 1
        %v658 = vand.u32 %v434, 1
        %v659 = vand.u32 %v435, 1
        %v660 = vand.u32 %v452, 1
        %v661 = vand.u32 %v453, 1
        %v662 = vand.u32 %v454, 1
        %v663 = vand.u32 %v455, 1
        %v664 = vand.u32 %v456, 1
        %v665 = vand.u32 %v457, 1
        %v666 = vand.u32 %v458, 1
        %v667 = vand.u32 %v459, 1
        %v668 = vand.u32 %v460, 1
        %v669 = vand.u32 %v461, 1
        %v670 = vand.u32 %v462, 1
        %v671 = vand.u32 %v463, 1
        %v672 = vand.u32 %v464, 1
        %v673 = vand.u32 %v465, 1
        %v674 = vand.u32 %v466, 1
        %v675 = vand.u32 %v467, 1
        %v676 = vand.u32 %v484, 1
        %v677 = vand.u32 %v485, 1
        %v678 = vand.u32 %v486, 1
        %v679 = vand.u32 %v487, 1
        %v680 = vand.u32 %v488, 1
        %v681 = vand.u32 %v489, 1
        %v682 = vand.u32 %v490, 1
        %v683 = vand.u32 %v491, 1
        %v684 = vand.u32 %v492, 1
        %v685 = vand.u32 %v493, 1
        %v686 = vand.u32 %v494, 1
        %v687 = vand.u32 %v495, 1
        %v688 = vand.u32 %v496, 1
        %v689 = vand.u32 %v497, 1
        %v690 = vand.u32 %v498, 1
        %v691 = vand.u32 %v499, 1
        %v692 = vand.u32 %v516, 1
        %v693 = vand.u32 %v517, 1
        %v694 = vand.u32 %v518, 1
        %v695 = vand.u32 %v519, 1
        %v696 = vand.u32 %v520, 1
        %v697 = vand.u32 %v521, 1
        %v698 = vand.u32 %v522, 1
        %v699 = vand.u32 %v523, 1
        %v700 = vand.u32 %v524, 1
        %v701 = vand.u32 %v525, 1
        %v702 = vand.u32 %v526, 1
        %v703 = vand.u32 %v527, 1
        %v704 = vand.u32 %v528, 1
        %v705 = vand.u32 %v529, 1
        %v706 = vand.u32 %v530, 1
        %v707 = vand.u32 %v531, 1
        %v708 = vand.u32 %v548, 1
        %v709 = vand.u32 %v549, 1
        %v710 = vand.u32 %v550, 1
        %v711 = vand.u32 %v551, 1
        %v712 = vand.u32 %v552, 1
        %v713 = vand.u32 %v553, 1
        %v714 = vand.u32 %v554, 1
        %v715 = vand.u32 %v555, 1
        %v716 = vand.u32 %v556, 1
        %v717 = vand.u32 %v557, 1
        %v718 = vand.u32 %v558, 1
        %v719 = vand.u32 %v559, 1
        %v720 = vand.u32 %v560, 1
        %v721 = vand.u32 %v561, 1
        %v722 = vand.u32 %v562, 1
        %v723 = vand.u32 %v563, 1
        %v724 = vand.u32 %v580, 1
        %v725 = vand.u32 %v581, 1
        %v726 = vand.u32 %v582, 1
        %v727 = vand.u32 %v583, 1
        %v728 = vand.u32 %v584, 1
        %v729 = vand.u32 %v585, 1
        %v730 = vand.u32 %v586, 1
        %v731 = vand.u32 %v587, 1
        %v732 = vand.u32 %v588, 1
        %v733 = vand.u32 %v589, 1
        %v734 = vand.u32 %v590, 1
        %v735 = vand.u32 %v591, 1
        %v736 = vand.u32 %v592, 1
        %v737 = vand.u32 %v593, 1
        %v738 = vand.u32 %v594, 1
        %v739 = vand.u32 %v595, 1
        %v740 = vand.u32 %v612, 1
        %v741 = vand.u32 %v613, 1
        %v742 = vand.u32 %v614, 1
        %v743 = vand.u32 %v615, 1
        %v744 = vand.u32 %v616, 1
        %v745 = vand.u32 %v617, 1
        %v746 = vand.u32 %v618, 1
        %v747 = vand.u32 %v619, 1
        %v748 = vand.u32 %v620, 1
        %v749 = vand.u32 %v621, 1
        %v750 = vand.u32 %v622, 1
        %v751 = vand.u32 %v623, 1
        %v752 = vand.u32 %v624, 1
        %v753 = vand.u32 %v625, 1
        %v754 = vand.u32 %v626, 1
        %v755 = vand.u32 %v627, 1
        %vm756 = vcmp.ne.s32.totalorder %v628, 0
        %vm757 = vcmp.ne.s32.totalorder %v629, 0
        %vm758 = vcmp.ne.s32.totalorder %v630, 0
        %vm759 = vcmp.ne.s32.totalorder %v631, 0
        %vm760 = vcmp.ne.s32.totalorder %v632, 0
        %vm761 = vcmp.ne.s32.totalorder %v633, 0
        %vm762 = vcmp.ne.s32.totalorder %v634, 0
        %vm763 = vcmp.ne.s32.totalorder %v635, 0
        %vm764 = vcmp.ne.s32.totalorder %v636, 0
        %vm765 = vcmp.ne.s32.totalorder %v637, 0
        %vm766 = vcmp.ne.s32.totalorder %v638, 0
        %vm767 = vcmp.ne.s32.totalorder %v639, 0
        %vm768 = vcmp.ne.s32.totalorder %v640, 0
        %vm769 = vcmp.ne.s32.totalorder %v641, 0
        %vm770 = vcmp.ne.s32.totalorder %v642, 0
        %vm771 = vcmp.ne.s32.totalorder %v643, 0
        %vm772 = vcmp.ne.s32.totalorder %v644, 0
        %vm773 = vcmp.ne.s32.totalorder %v645, 0
        %vm774 = vcmp.ne.s32.totalorder %v646, 0
        %vm775 = vcmp.ne.s32.totalorder %v647, 0
        %vm776 = vcmp.ne.s32.totalorder %v648, 0
        %vm777 = vcmp.ne.s32.totalorder %v649, 0
        %vm778 = vcmp.ne.s32.totalorder %v650, 0
        %vm779 = vcmp.ne.s32.totalorder %v651, 0
        %vm780 = vcmp.ne.s32.totalorder %v652, 0
        %vm781 = vcmp.ne.s32.totalorder %v653, 0
        %vm782 = vcmp.ne.s32.totalorder %v654, 0
        %vm783 = vcmp.ne.s32.totalorder %v655, 0
        %vm784 = vcmp.ne.s32.totalorder %v656, 0
        %vm785 = vcmp.ne.s32.totalorder %v657, 0
        %vm786 = vcmp.ne.s32.totalorder %v658, 0
        %vm787 = vcmp.ne.s32.totalorder %v659, 0
        %vm788 = vcmp.ne.s32.totalorder %v660, 0
        %vm789 = vcmp.ne.s32.totalorder %v661, 0
        %vm790 = vcmp.ne.s32.totalorder %v662, 0
        %vm791 = vcmp.ne.s32.totalorder %v663, 0
        %vm792 = vcmp.ne.s32.totalorder %v664, 0
        %vm793 = vcmp.ne.s32.totalorder %v665, 0
        %vm794 = vcmp.ne.s32.totalorder %v666, 0
        %vm795 = vcmp.ne.s32.totalorder %v667, 0
        %vm796 = vcmp.ne.s32.totalorder %v668, 0
        %vm797 = vcmp.ne.s32.totalorder %v669, 0
        %vm798 = vcmp.ne.s32.totalorder %v670, 0
        %vm799 = vcmp.ne.s32.totalorder %v671, 0
        %vm800 = vcmp.ne.s32.totalorder %v672, 0
        %vm801 = vcmp.ne.s32.totalorder %v673, 0
        %vm802 = vcmp.ne.s32.totalorder %v674, 0
        %vm803 = vcmp.ne.s32.totalorder %v675, 0
        %vm804 = vcmp.ne.s32.totalorder %v676, 0
        %vm805 = vcmp.ne.s32.totalorder %v677, 0
        %vm806 = vcmp.ne.s32.totalorder %v678, 0
        %vm807 = vcmp.ne.s32.totalorder %v679, 0
        %vm808 = vcmp.ne.s32.totalorder %v680, 0
        %vm809 = vcmp.ne.s32.totalorder %v681, 0
        %vm810 = vcmp.ne.s32.totalorder %v682, 0
        %vm811 = vcmp.ne.s32.totalorder %v683, 0
        %vm812 = vcmp.ne.s32.totalorder %v684, 0
        %vm813 = vcmp.ne.s32.totalorder %v685, 0
        %vm814 = vcmp.ne.s32.totalorder %v686, 0
        %vm815 = vcmp.ne.s32.totalorder %v687, 0
        %vm816 = vcmp.ne.s32.totalorder %v688, 0
        %vm817 = vcmp.ne.s32.totalorder %v689, 0
        %vm818 = vcmp.ne.s32.totalorder %v690, 0
        %vm819 = vcmp.ne.s32.totalorder %v691, 0
        %vm820 = vcmp.ne.s32.totalorder %v692, 0
        %vm821 = vcmp.ne.s32.totalorder %v693, 0
        %vm822 = vcmp.ne.s32.totalorder %v694, 0
        %vm823 = vcmp.ne.s32.totalorder %v695, 0
        %vm824 = vcmp.ne.s32.totalorder %v696, 0
        %vm825 = vcmp.ne.s32.totalorder %v697, 0
        %vm826 = vcmp.ne.s32.totalorder %v698, 0
        %vm827 = vcmp.ne.s32.totalorder %v699, 0
        %vm828 = vcmp.ne.s32.totalorder %v700, 0
        %vm829 = vcmp.ne.s32.totalorder %v701, 0
        %vm830 = vcmp.ne.s32.totalorder %v702, 0
        %vm831 = vcmp.ne.s32.totalorder %v703, 0
        %vm832 = vcmp.ne.s32.totalorder %v704, 0
        %vm833 = vcmp.ne.s32.totalorder %v705, 0
        %vm834 = vcmp.ne.s32.totalorder %v706, 0
        %vm835 = vcmp.ne.s32.totalorder %v707, 0
        %vm836 = vcmp.ne.s32.totalorder %v708, 0
        %vm837 = vcmp.ne.s32.totalorder %v709, 0
        %vm838 = vcmp.ne.s32.totalorder %v710, 0
        %vm839 = vcmp.ne.s32.totalorder %v711, 0
        %vm840 = vcmp.ne.s32.totalorder %v712, 0
        %vm841 = vcmp.ne.s32.totalorder %v713, 0
        %vm842 = vcmp.ne.s32.totalorder %v714, 0
        %vm843 = vcmp.ne.s32.totalorder %v715, 0
        %vm844 = vcmp.ne.s32.totalorder %v716, 0
        %vm845 = vcmp.ne.s32.totalorder %v717, 0
        %vm846 = vcmp.ne.s32.totalorder %v718, 0
        %vm847 = vcmp.ne.s32.totalorder %v719, 0
        %vm848 = vcmp.ne.s32.totalorder %v720, 0
        %vm849 = vcmp.ne.s32.totalorder %v721, 0
        %vm850 = vcmp.ne.s32.totalorder %v722, 0
        %vm851 = vcmp.ne.s32.totalorder %v723, 0
        %vm852 = vcmp.ne.s32.totalorder %v724, 0
        %vm853 = vcmp.ne.s32.totalorder %v725, 0
        %vm854 = vcmp.ne.s32.totalorder %v726, 0
        %vm855 = vcmp.ne.s32.totalorder %v727, 0
        %vm856 = vcmp.ne.s32.totalorder %v728, 0
        %vm857 = vcmp.ne.s32.totalorder %v729, 0
        %vm858 = vcmp.ne.s32.totalorder %v730, 0
        %vm859 = vcmp.ne.s32.totalorder %v731, 0
        %vm860 = vcmp.ne.s32.totalorder %v732, 0
        %vm861 = vcmp.ne.s32.totalorder %v733, 0
        %vm862 = vcmp.ne.s32.totalorder %v734, 0
        %vm863 = vcmp.ne.s32.totalorder %v735, 0
        %vm864 = vcmp.ne.s32.totalorder %v736, 0
        %vm865 = vcmp.ne.s32.totalorder %v737, 0
        %vm866 = vcmp.ne.s32.totalorder %v738, 0
        %vm867 = vcmp.ne.s32.totalorder %v739, 0
        %vm868 = vcmp.ne.s32.totalorder %v740, 0
        %vm869 = vcmp.ne.s32.totalorder %v741, 0
        %vm870 = vcmp.ne.s32.totalorder %v742, 0
        %vm871 = vcmp.ne.s32.totalorder %v743, 0
        %vm872 = vcmp.ne.s32.totalorder %v744, 0
        %vm873 = vcmp.ne.s32.totalorder %v745, 0
        %vm874 = vcmp.ne.s32.totalorder %v746, 0
        %vm875 = vcmp.ne.s32.totalorder %v747, 0
        %vm876 = vcmp.ne.s32.totalorder %v748, 0
        %vm877 = vcmp.ne.s32.totalorder %v749, 0
        %vm878 = vcmp.ne.s32.totalorder %v750, 0
        %vm879 = vcmp.ne.s32.totalorder %v751, 0
        %vm880 = vcmp.ne.s32.totalorder %v752, 0
        %vm881 = vcmp.ne.s32.totalorder %v753, 0
        %vm882 = vcmp.ne.s32.totalorder %v754, 0
        %vm883 = vcmp.ne.s32.totalorder %v755, 0
        %v884 = vand.u32 %v388, 2
        %v885 = vand.u32 %v389, 2
        %v886 = vand.u32 %v390, 2
        %v887 = vand.u32 %v391, 2
        %v888 = vand.u32 %v392, 2
        %v889 = vand.u32 %v393, 2
        %v890 = vand.u32 %v394, 2
        %v891 = vand.u32 %v395, 2
        %v892 = vand.u32 %v396, 2
        %v893 = vand.u32 %v397, 2
        %v894 = vand.u32 %v398, 2
        %v895 = vand.u32 %v399, 2
        %v896 = vand.u32 %v400, 2
        %v897 = vand.u32 %v401, 2
        %v898 = vand.u32 %v402, 2
        %v899 = vand.u32 %v403, 2
        %v900 = vand.u32 %v420, 2
        %v901 = vand.u32 %v421, 2
        %v902 = vand.u32 %v422, 2
        %v903 = vand.u32 %v423, 2
        %v904 = vand.u32 %v424, 2
        %v905 = vand.u32 %v425, 2
        %v906 = vand.u32 %v426, 2
        %v907 = vand.u32 %v427, 2
        %v908 = vand.u32 %v428, 2
        %v909 = vand.u32 %v429, 2
        %v910 = vand.u32 %v430, 2
        %v911 = vand.u32 %v431, 2
        %v912 = vand.u32 %v432, 2
        %v913 = vand.u32 %v433, 2
        %v914 = vand.u32 %v434, 2
        %v915 = vand.u32 %v435, 2
        %v916 = vand.u32 %v452, 2
        %v917 = vand.u32 %v453, 2
        %v918 = vand.u32 %v454, 2
        %v919 = vand.u32 %v455, 2
        %v920 = vand.u32 %v456, 2
        %v921 = vand.u32 %v457, 2
        %v922 = vand.u32 %v458, 2
        %v923 = vand.u32 %v459, 2
        %v924 = vand.u32 %v460, 2
        %v925 = vand.u32 %v461, 2
        %v926 = vand.u32 %v462, 2
        %v927 = vand.u32 %v463, 2
        %v928 = vand.u32 %v464, 2
        %v929 = vand.u32 %v465, 2
        %v930 = vand.u32 %v466, 2
        %v931 = vand.u32 %v467, 2
        %v932 = vand.u32 %v484, 2
        %v933 = vand.u32 %v485, 2
        %v934 = vand.u32 %v486, 2
        %v935 = vand.u32 %v487, 2
        %v936 = vand.u32 %v488, 2
        %v937 = vand.u32 %v489, 2
        %v938 = vand.u32 %v490, 2
        %v939 = vand.u32 %v491, 2
        %v940 = vand.u32 %v492, 2
        %v941 = vand.u32 %v493, 2
        %v942 = vand.u32 %v494, 2
        %v943 = vand.u32 %v495, 2
        %v944 = vand.u32 %v496, 2
        %v945 = vand.u32 %v497, 2
        %v946 = vand.u32 %v498, 2
        %v947 = vand.u32 %v499, 2
        %v948 = vand.u32 %v516, 2
        %v949 = vand.u32 %v517, 2
        %v950 = vand.u32 %v518, 2
        %v951 = vand.u32 %v519, 2
        %v952 = vand.u32 %v520, 2
        %v953 = vand.u32 %v521, 2
        %v954 = vand.u32 %v522, 2
        %v955 = vand.u32 %v523, 2
        %v956 = vand.u32 %v524, 2
        %v957 = vand.u32 %v525, 2
        %v958 = vand.u32 %v526, 2
        %v959 = vand.u32 %v527, 2
        %v960 = vand.u32 %v528, 2
        %v961 = vand.u32 %v529, 2
        %v962 = vand.u32 %v530, 2
        %v963 = vand.u32 %v531, 2
        %v964 = vand.u32 %v548, 2
        %v965 = vand.u32 %v549, 2
        %v966 = vand.u32 %v550, 2
        %v967 = vand.u32 %v551, 2
        %v968 = vand.u32 %v552, 2
        %v969 = vand.u32 %v553, 2
        %v970 = vand.u32 %v554, 2
        %v971 = vand.u32 %v555, 2
        %v972 = vand.u32 %v556, 2
        %v973 = vand.u32 %v557, 2
        %v974 = vand.u32 %v558, 2
        %v975 = vand.u32 %v559, 2
        %v976 = vand.u32 %v560, 2
        %v977 = vand.u32 %v561, 2
        %v978 = vand.u32 %v562, 2
        %v979 = vand.u32 %v563, 2
        %v980 = vand.u32 %v580, 2
        %v981 = vand.u32 %v581, 2
        %v982 = vand.u32 %v582, 2
        %v983 = vand.u32 %v583, 2
        %v984 = vand.u32 %v584, 2
        %v985 = vand.u32 %v585, 2
        %v986 = vand.u32 %v586, 2
        %v987 = vand.u32 %v587, 2
        %v988 = vand.u32 %v588, 2
        %v989 = vand.u32 %v589, 2
        %v990 = vand.u32 %v590, 2
        %v991 = vand.u32 %v591, 2
        %v992 = vand.u32 %v592, 2
        %v993 = vand.u32 %v593, 2
        %v994 = vand.u32 %v594, 2
        %v995 = vand.u32 %v595, 2
        %v996 = vand.u32 %v612, 2
        %v997 = vand.u32 %v613, 2
        %v998 = vand.u32 %v614, 2
        %v999 = vand.u32 %v615, 2
        %v1000 = vand.u32 %v616, 2
        %v1001 = vand.u32 %v617, 2
        %v1002 = vand.u32 %v618, 2
        %v1003 = vand.u32 %v619, 2
        %v1004 = vand.u32 %v620, 2
        %v1005 = vand.u32 %v621, 2
        %v1006 = vand.u32 %v622, 2
        %v1007 = vand.u32 %v623, 2
        %v1008 = vand.u32 %v624, 2
        %v1009 = vand.u32 %v625, 2
        %v1010 = vand.u32 %v626, 2
        %v1011 = vand.u32 %v627, 2
        %vm1012 = vcmp.ne.s32.totalorder %v884, 0
        %vm1013 = vcmp.ne.s32.totalorder %v885, 0
        %vm1014 = vcmp.ne.s32.totalorder %v886, 0
        %vm1015 = vcmp.ne.s32.totalorder %v887, 0
        %vm1016 = vcmp.ne.s32.totalorder %v888, 0
        %vm1017 = vcmp.ne.s32.totalorder %v889, 0
        %vm1018 = vcmp.ne.s32.totalorder %v890, 0
        %vm1019 = vcmp.ne.s32.totalorder %v891, 0
        %vm1020 = vcmp.ne.s32.totalorder %v892, 0
        %vm1021 = vcmp.ne.s32.totalorder %v893, 0
        %vm1022 = vcmp.ne.s32.totalorder %v894, 0
        %vm1023 = vcmp.ne.s32.totalorder %v895, 0
        %vm1024 = vcmp.ne.s32.totalorder %v896, 0
        %vm1025 = vcmp.ne.s32.totalorder %v897, 0
        %vm1026 = vcmp.ne.s32.totalorder %v898, 0
        %vm1027 = vcmp.ne.s32.totalorder %v899, 0
        %vm1028 = vcmp.ne.s32.totalorder %v900, 0
        %vm1029 = vcmp.ne.s32.totalorder %v901, 0
        %vm1030 = vcmp.ne.s32.totalorder %v902, 0
        %vm1031 = vcmp.ne.s32.totalorder %v903, 0
        %vm1032 = vcmp.ne.s32.totalorder %v904, 0
        %vm1033 = vcmp.ne.s32.totalorder %v905, 0
        %vm1034 = vcmp.ne.s32.totalorder %v906, 0
        %vm1035 = vcmp.ne.s32.totalorder %v907, 0
        %vm1036 = vcmp.ne.s32.totalorder %v908, 0
        %vm1037 = vcmp.ne.s32.totalorder %v909, 0
        %vm1038 = vcmp.ne.s32.totalorder %v910, 0
        %vm1039 = vcmp.ne.s32.totalorder %v911, 0
        %vm1040 = vcmp.ne.s32.totalorder %v912, 0
        %vm1041 = vcmp.ne.s32.totalorder %v913, 0
        %vm1042 = vcmp.ne.s32.totalorder %v914, 0
        %vm1043 = vcmp.ne.s32.totalorder %v915, 0
        %vm1044 = vcmp.ne.s32.totalorder %v916, 0
        %vm1045 = vcmp.ne.s32.totalorder %v917, 0
        %vm1046 = vcmp.ne.s32.totalorder %v918, 0
        %vm1047 = vcmp.ne.s32.totalorder %v919, 0
        %vm1048 = vcmp.ne.s32.totalorder %v920, 0
        %vm1049 = vcmp.ne.s32.totalorder %v921, 0
        %vm1050 = vcmp.ne.s32.totalorder %v922, 0
        %vm1051 = vcmp.ne.s32.totalorder %v923, 0
        %vm1052 = vcmp.ne.s32.totalorder %v924, 0
        %vm1053 = vcmp.ne.s32.totalorder %v925, 0
        %vm1054 = vcmp.ne.s32.totalorder %v926, 0
        %vm1055 = vcmp.ne.s32.totalorder %v927, 0
        %vm1056 = vcmp.ne.s32.totalorder %v928, 0
        %vm1057 = vcmp.ne.s32.totalorder %v929, 0
        %vm1058 = vcmp.ne.s32.totalorder %v930, 0
        %vm1059 = vcmp.ne.s32.totalorder %v931, 0
        %vm1060 = vcmp.ne.s32.totalorder %v932, 0
        %vm1061 = vcmp.ne.s32.totalorder %v933, 0
        %vm1062 = vcmp.ne.s32.totalorder %v934, 0
        %vm1063 = vcmp.ne.s32.totalorder %v935, 0
        %vm1064 = vcmp.ne.s32.totalorder %v936, 0
        %vm1065 = vcmp.ne.s32.totalorder %v937, 0
        %vm1066 = vcmp.ne.s32.totalorder %v938, 0
        %vm1067 = vcmp.ne.s32.totalorder %v939, 0
        %vm1068 = vcmp.ne.s32.totalorder %v940, 0
        %vm1069 = vcmp.ne.s32.totalorder %v941, 0
        %vm1070 = vcmp.ne.s32.totalorder %v942, 0
        %vm1071 = vcmp.ne.s32.totalorder %v943, 0
        %vm1072 = vcmp.ne.s32.totalorder %v944, 0
        %vm1073 = vcmp.ne.s32.totalorder %v945, 0
        %vm1074 = vcmp.ne.s32.totalorder %v946, 0
        %vm1075 = vcmp.ne.s32.totalorder %v947, 0
        %vm1076 = vcmp.ne.s32.totalorder %v948, 0
        %vm1077 = vcmp.ne.s32.totalorder %v949, 0
        %vm1078 = vcmp.ne.s32.totalorder %v950, 0
        %vm1079 = vcmp.ne.s32.totalorder %v951, 0
        %vm1080 = vcmp.ne.s32.totalorder %v952, 0
        %vm1081 = vcmp.ne.s32.totalorder %v953, 0
        %vm1082 = vcmp.ne.s32.totalorder %v954, 0
        %vm1083 = vcmp.ne.s32.totalorder %v955, 0
        %vm1084 = vcmp.ne.s32.totalorder %v956, 0
        %vm1085 = vcmp.ne.s32.totalorder %v957, 0
        %vm1086 = vcmp.ne.s32.totalorder %v958, 0
        %vm1087 = vcmp.ne.s32.totalorder %v959, 0
        %vm1088 = vcmp.ne.s32.totalorder %v960, 0
        %vm1089 = vcmp.ne.s32.totalorder %v961, 0
        %vm1090 = vcmp.ne.s32.totalorder %v962, 0
        %vm1091 = vcmp.ne.s32.totalorder %v963, 0
        %vm1092 = vcmp.ne.s32.totalorder %v964, 0
        %vm1093 = vcmp.ne.s32.totalorder %v965, 0
        %vm1094 = vcmp.ne.s32.totalorder %v966, 0
        %vm1095 = vcmp.ne.s32.totalorder %v967, 0
        %vm1096 = vcmp.ne.s32.totalorder %v968, 0
        %vm1097 = vcmp.ne.s32.totalorder %v969, 0
        %vm1098 = vcmp.ne.s32.totalorder %v970, 0
        %vm1099 = vcmp.ne.s32.totalorder %v971, 0
        %vm1100 = vcmp.ne.s32.totalorder %v972, 0
        %vm1101 = vcmp.ne.s32.totalorder %v973, 0
        %vm1102 = vcmp.ne.s32.totalorder %v974, 0
        %vm1103 = vcmp.ne.s32.totalorder %v975, 0
        %vm1104 = vcmp.ne.s32.totalorder %v976, 0
        %vm1105 = vcmp.ne.s32.totalorder %v977, 0
        %vm1106 = vcmp.ne.s32.totalorder %v978, 0
        %vm1107 = vcmp.ne.s32.totalorder %v979, 0
        %vm1108 = vcmp.ne.s32.totalorder %v980, 0
        %vm1109 = vcmp.ne.s32.totalorder %v981, 0
        %vm1110 = vcmp.ne.s32.totalorder %v982, 0
        %vm1111 = vcmp.ne.s32.totalorder %v983, 0
        %vm1112 = vcmp.ne.s32.totalorder %v984, 0
        %vm1113 = vcmp.ne.s32.totalorder %v985, 0
        %vm1114 = vcmp.ne.s32.totalorder %v986, 0
        %vm1115 = vcmp.ne.s32.totalorder %v987, 0
        %vm1116 = vcmp.ne.s32.totalorder %v988, 0
        %vm1117 = vcmp.ne.s32.totalorder %v989, 0
        %vm1118 = vcmp.ne.s32.totalorder %v990, 0
        %vm1119 = vcmp.ne.s32.totalorder %v991, 0
        %vm1120 = vcmp.ne.s32.totalorder %v992, 0
        %vm1121 = vcmp.ne.s32.totalorder %v993, 0
        %vm1122 = vcmp.ne.s32.totalorder %v994, 0
        %vm1123 = vcmp.ne.s32.totalorder %v995, 0
        %vm1124 = vcmp.ne.s32.totalorder %v996, 0
        %vm1125 = vcmp.ne.s32.totalorder %v997, 0
        %vm1126 = vcmp.ne.s32.totalorder %v998, 0
        %vm1127 = vcmp.ne.s32.totalorder %v999, 0
        %vm1128 = vcmp.ne.s32.totalorder %v1000, 0
        %vm1129 = vcmp.ne.s32.totalorder %v1001, 0
        %vm1130 = vcmp.ne.s32.totalorder %v1002, 0
        %vm1131 = vcmp.ne.s32.totalorder %v1003, 0
        %vm1132 = vcmp.ne.s32.totalorder %v1004, 0
        %vm1133 = vcmp.ne.s32.totalorder %v1005, 0
        %vm1134 = vcmp.ne.s32.totalorder %v1006, 0
        %vm1135 = vcmp.ne.s32.totalorder %v1007, 0
        %vm1136 = vcmp.ne.s32.totalorder %v1008, 0
        %vm1137 = vcmp.ne.s32.totalorder %v1009, 0
        %vm1138 = vcmp.ne.s32.totalorder %v1010, 0
        %vm1139 = vcmp.ne.s32.totalorder %v1011, 0
        %v1140 = vand.u32 %v388, 4
        %v1141 = vand.u32 %v389, 4
        %v1142 = vand.u32 %v390, 4
        %v1143 = vand.u32 %v391, 4
        %v1144 = vand.u32 %v392, 4
        %v1145 = vand.u32 %v393, 4
        %v1146 = vand.u32 %v394, 4
        %v1147 = vand.u32 %v395, 4
        %v1148 = vand.u32 %v396, 4
        %v1149 = vand.u32 %v397, 4
        %v1150 = vand.u32 %v398, 4
        %v1151 = vand.u32 %v399, 4
        %v1152 = vand.u32 %v400, 4
        %v1153 = vand.u32 %v401, 4
        %v1154 = vand.u32 %v402, 4
        %v1155 = vand.u32 %v403, 4
        %v1156 = vand.u32 %v420, 4
        %v1157 = vand.u32 %v421, 4
        %v1158 = vand.u32 %v422, 4
        %v1159 = vand.u32 %v423, 4
        %v1160 = vand.u32 %v424, 4
        %v1161 = vand.u32 %v425, 4
        %v1162 = vand.u32 %v426, 4
        %v1163 = vand.u32 %v427, 4
        %v1164 = vand.u32 %v428, 4
        %v1165 = vand.u32 %v429, 4
        %v1166 = vand.u32 %v430, 4
        %v1167 = vand.u32 %v431, 4
        %v1168 = vand.u32 %v432, 4
        %v1169 = vand.u32 %v433, 4
        %v1170 = vand.u32 %v434, 4
        %v1171 = vand.u32 %v435, 4
        %v1172 = vand.u32 %v452, 4
        %v1173 = vand.u32 %v453, 4
        %v1174 = vand.u32 %v454, 4
        %v1175 = vand.u32 %v455, 4
        %v1176 = vand.u32 %v456, 4
        %v1177 = vand.u32 %v457, 4
        %v1178 = vand.u32 %v458, 4
        %v1179 = vand.u32 %v459, 4
        %v1180 = vand.u32 %v460, 4
        %v1181 = vand.u32 %v461, 4
        %v1182 = vand.u32 %v462, 4
        %v1183 = vand.u32 %v463, 4
        %v1184 = vand.u32 %v464, 4
        %v1185 = vand.u32 %v465, 4
        %v1186 = vand.u32 %v466, 4
        %v1187 = vand.u32 %v467, 4
        %v1188 = vand.u32 %v484, 4
        %v1189 = vand.u32 %v485, 4
        %v1190 = vand.u32 %v486, 4
        %v1191 = vand.u32 %v487, 4
        %v1192 = vand.u32 %v488, 4
        %v1193 = vand.u32 %v489, 4
        %v1194 = vand.u32 %v490, 4
        %v1195 = vand.u32 %v491, 4
        %v1196 = vand.u32 %v492, 4
        %v1197 = vand.u32 %v493, 4
        %v1198 = vand.u32 %v494, 4
        %v1199 = vand.u32 %v495, 4
        %v1200 = vand.u32 %v496, 4
        %v1201 = vand.u32 %v497, 4
        %v1202 = vand.u32 %v498, 4
        %v1203 = vand.u32 %v499, 4
        %v1204 = vand.u32 %v516, 4
        %v1205 = vand.u32 %v517, 4
        %v1206 = vand.u32 %v518, 4
        %v1207 = vand.u32 %v519, 4
        %v1208 = vand.u32 %v520, 4
        %v1209 = vand.u32 %v521, 4
        %v1210 = vand.u32 %v522, 4
        %v1211 = vand.u32 %v523, 4
        %v1212 = vand.u32 %v524, 4
        %v1213 = vand.u32 %v525, 4
        %v1214 = vand.u32 %v526, 4
        %v1215 = vand.u32 %v527, 4
        %v1216 = vand.u32 %v528, 4
        %v1217 = vand.u32 %v529, 4
        %v1218 = vand.u32 %v530, 4
        %v1219 = vand.u32 %v531, 4
        %v1220 = vand.u32 %v548, 4
        %v1221 = vand.u32 %v549, 4
        %v1222 = vand.u32 %v550, 4
        %v1223 = vand.u32 %v551, 4
        %v1224 = vand.u32 %v552, 4
        %v1225 = vand.u32 %v553, 4
        %v1226 = vand.u32 %v554, 4
        %v1227 = vand.u32 %v555, 4
        %v1228 = vand.u32 %v556, 4
        %v1229 = vand.u32 %v557, 4
        %v1230 = vand.u32 %v558, 4
        %v1231 = vand.u32 %v559, 4
        %v1232 = vand.u32 %v560, 4
        %v1233 = vand.u32 %v561, 4
        %v1234 = vand.u32 %v562, 4
        %v1235 = vand.u32 %v563, 4
        %v1236 = vand.u32 %v580, 4
        %v1237 = vand.u32 %v581, 4
        %v1238 = vand.u32 %v582, 4
        %v1239 = vand.u32 %v583, 4
        %v1240 = vand.u32 %v584, 4
        %v1241 = vand.u32 %v585, 4
        %v1242 = vand.u32 %v586, 4
        %v1243 = vand.u32 %v587, 4
        %v1244 = vand.u32 %v588, 4
        %v1245 = vand.u32 %v589, 4
        %v1246 = vand.u32 %v590, 4
        %v1247 = vand.u32 %v591, 4
        %v1248 = vand.u32 %v592, 4
        %v1249 = vand.u32 %v593, 4
        %v1250 = vand.u32 %v594, 4
        %v1251 = vand.u32 %v595, 4
        %v1252 = vand.u32 %v612, 4
        %v1253 = vand.u32 %v613, 4
        %v1254 = vand.u32 %v614, 4
        %v1255 = vand.u32 %v615, 4
        %v1256 = vand.u32 %v616, 4
        %v1257 = vand.u32 %v617, 4
        %v1258 = vand.u32 %v618, 4
        %v1259 = vand.u32 %v619, 4
        %v1260 = vand.u32 %v620, 4
        %v1261 = vand.u32 %v621, 4
        %v1262 = vand.u32 %v622, 4
        %v1263 = vand.u32 %v623, 4
        %v1264 = vand.u32 %v624, 4
        %v1265 = vand.u32 %v625, 4
        %v1266 = vand.u32 %v626, 4
        %v1267 = vand.u32 %v627, 4
        %vm1268 = vcmp.ne.s32.totalorder %v1140, 0
        %vm1269 = vcmp.ne.s32.totalorder %v1141, 0
        %vm1270 = vcmp.ne.s32.totalorder %v1142, 0
        %vm1271 = vcmp.ne.s32.totalorder %v1143, 0
        %vm1272 = vcmp.ne.s32.totalorder %v1144, 0
        %vm1273 = vcmp.ne.s32.totalorder %v1145, 0
        %vm1274 = vcmp.ne.s32.totalorder %v1146, 0
        %vm1275 = vcmp.ne.s32.totalorder %v1147, 0
        %vm1276 = vcmp.ne.s32.totalorder %v1148, 0
        %vm1277 = vcmp.ne.s32.totalorder %v1149, 0
        %vm1278 = vcmp.ne.s32.totalorder %v1150, 0
        %vm1279 = vcmp.ne.s32.totalorder %v1151, 0
        %vm1280 = vcmp.ne.s32.totalorder %v1152, 0
        %vm1281 = vcmp.ne.s32.totalorder %v1153, 0
        %vm1282 = vcmp.ne.s32.totalorder %v1154, 0
        %vm1283 = vcmp.ne.s32.totalorder %v1155, 0
        %vm1284 = vcmp.ne.s32.totalorder %v1156, 0
        %vm1285 = vcmp.ne.s32.totalorder %v1157, 0
        %vm1286 = vcmp.ne.s32.totalorder %v1158, 0
        %vm1287 = vcmp.ne.s32.totalorder %v1159, 0
        %vm1288 = vcmp.ne.s32.totalorder %v1160, 0
        %vm1289 = vcmp.ne.s32.totalorder %v1161, 0
        %vm1290 = vcmp.ne.s32.totalorder %v1162, 0
        %vm1291 = vcmp.ne.s32.totalorder %v1163, 0
        %vm1292 = vcmp.ne.s32.totalorder %v1164, 0
        %vm1293 = vcmp.ne.s32.totalorder %v1165, 0
        %vm1294 = vcmp.ne.s32.totalorder %v1166, 0
        %vm1295 = vcmp.ne.s32.totalorder %v1167, 0
        %vm1296 = vcmp.ne.s32.totalorder %v1168, 0
        %vm1297 = vcmp.ne.s32.totalorder %v1169, 0
        %vm1298 = vcmp.ne.s32.totalorder %v1170, 0
        %vm1299 = vcmp.ne.s32.totalorder %v1171, 0
        %vm1300 = vcmp.ne.s32.totalorder %v1172, 0
        %vm1301 = vcmp.ne.s32.totalorder %v1173, 0
        %vm1302 = vcmp.ne.s32.totalorder %v1174, 0
        %vm1303 = vcmp.ne.s32.totalorder %v1175, 0
        %vm1304 = vcmp.ne.s32.totalorder %v1176, 0
        %vm1305 = vcmp.ne.s32.totalorder %v1177, 0
        %vm1306 = vcmp.ne.s32.totalorder %v1178, 0
        %vm1307 = vcmp.ne.s32.totalorder %v1179, 0
        %vm1308 = vcmp.ne.s32.totalorder %v1180, 0
        %vm1309 = vcmp.ne.s32.totalorder %v1181, 0
        %vm1310 = vcmp.ne.s32.totalorder %v1182, 0
        %vm1311 = vcmp.ne.s32.totalorder %v1183, 0
        %vm1312 = vcmp.ne.s32.totalorder %v1184, 0
        %vm1313 = vcmp.ne.s32.totalorder %v1185, 0
        %vm1314 = vcmp.ne.s32.totalorder %v1186, 0
        %vm1315 = vcmp.ne.s32.totalorder %v1187, 0
        %vm1316 = vcmp.ne.s32.totalorder %v1188, 0
        %vm1317 = vcmp.ne.s32.totalorder %v1189, 0
        %vm1318 = vcmp.ne.s32.totalorder %v1190, 0
        %vm1319 = vcmp.ne.s32.totalorder %v1191, 0
        %vm1320 = vcmp.ne.s32.totalorder %v1192, 0
        %vm1321 = vcmp.ne.s32.totalorder %v1193, 0
        %vm1322 = vcmp.ne.s32.totalorder %v1194, 0
        %vm1323 = vcmp.ne.s32.totalorder %v1195, 0
        %vm1324 = vcmp.ne.s32.totalorder %v1196, 0
        %vm1325 = vcmp.ne.s32.totalorder %v1197, 0
        %vm1326 = vcmp.ne.s32.totalorder %v1198, 0
        %vm1327 = vcmp.ne.s32.totalorder %v1199, 0
        %vm1328 = vcmp.ne.s32.totalorder %v1200, 0
        %vm1329 = vcmp.ne.s32.totalorder %v1201, 0
        %vm1330 = vcmp.ne.s32.totalorder %v1202, 0
        %vm1331 = vcmp.ne.s32.totalorder %v1203, 0
        %vm1332 = vcmp.ne.s32.totalorder %v1204, 0
        %vm1333 = vcmp.ne.s32.totalorder %v1205, 0
        %vm1334 = vcmp.ne.s32.totalorder %v1206, 0
        %vm1335 = vcmp.ne.s32.totalorder %v1207, 0
        %vm1336 = vcmp.ne.s32.totalorder %v1208, 0
        %vm1337 = vcmp.ne.s32.totalorder %v1209, 0
        %vm1338 = vcmp.ne.s32.totalorder %v1210, 0
        %vm1339 = vcmp.ne.s32.totalorder %v1211, 0
        %vm1340 = vcmp.ne.s32.totalorder %v1212, 0
        %vm1341 = vcmp.ne.s32.totalorder %v1213, 0
        %vm1342 = vcmp.ne.s32.totalorder %v1214, 0
        %vm1343 = vcmp.ne.s32.totalorder %v1215, 0
        %vm1344 = vcmp.ne.s32.totalorder %v1216, 0
        %vm1345 = vcmp.ne.s32.totalorder %v1217, 0
        %vm1346 = vcmp.ne.s32.totalorder %v1218, 0
        %vm1347 = vcmp.ne.s32.totalorder %v1219, 0
        %vm1348 = vcmp.ne.s32.totalorder %v1220, 0
        %vm1349 = vcmp.ne.s32.totalorder %v1221, 0
        %vm1350 = vcmp.ne.s32.totalorder %v1222, 0
        %vm1351 = vcmp.ne.s32.totalorder %v1223, 0
        %vm1352 = vcmp.ne.s32.totalorder %v1224, 0
        %vm1353 = vcmp.ne.s32.totalorder %v1225, 0
        %vm1354 = vcmp.ne.s32.totalorder %v1226, 0
        %vm1355 = vcmp.ne.s32.totalorder %v1227, 0
        %vm1356 = vcmp.ne.s32.totalorder %v1228, 0
        %vm1357 = vcmp.ne.s32.totalorder %v1229, 0
        %vm1358 = vcmp.ne.s32.totalorder %v1230, 0
        %vm1359 = vcmp.ne.s32.totalorder %v1231, 0
        %vm1360 = vcmp.ne.s32.totalorder %v1232, 0
        %vm1361 = vcmp.ne.s32.totalorder %v1233, 0
        %vm1362 = vcmp.ne.s32.totalorder %v1234, 0
        %vm1363 = vcmp.ne.s32.totalorder %v1235, 0
        %vm1364 = vcmp.ne.s32.totalorder %v1236, 0
        %vm1365 = vcmp.ne.s32.totalorder %v1237, 0
        %vm1366 = vcmp.ne.s32.totalorder %v1238, 0
        %vm1367 = vcmp.ne.s32.totalorder %v1239, 0
        %vm1368 = vcmp.ne.s32.totalorder %v1240, 0
        %vm1369 = vcmp.ne.s32.totalorder %v1241, 0
        %vm1370 = vcmp.ne.s32.totalorder %v1242, 0
        %vm1371 = vcmp.ne.s32.totalorder %v1243, 0
        %vm1372 = vcmp.ne.s32.totalorder %v1244, 0
        %vm1373 = vcmp.ne.s32.totalorder %v1245, 0
        %vm1374 = vcmp.ne.s32.totalorder %v1246, 0
        %vm1375 = vcmp.ne.s32.totalorder %v1247, 0
        %vm1376 = vcmp.ne.s32.totalorder %v1248, 0
        %vm1377 = vcmp.ne.s32.totalorder %v1249, 0
        %vm1378 = vcmp.ne.s32.totalorder %v1250, 0
        %vm1379 = vcmp.ne.s32.totalorder %v1251, 0
        %vm1380 = vcmp.ne.s32.totalorder %v1252, 0
        %vm1381 = vcmp.ne.s32.totalorder %v1253, 0
        %vm1382 = vcmp.ne.s32.totalorder %v1254, 0
        %vm1383 = vcmp.ne.s32.totalorder %v1255, 0
        %vm1384 = vcmp.ne.s32.totalorder %v1256, 0
        %vm1385 = vcmp.ne.s32.totalorder %v1257, 0
        %vm1386 = vcmp.ne.s32.totalorder %v1258, 0
        %vm1387 = vcmp.ne.s32.totalorder %v1259, 0
        %vm1388 = vcmp.ne.s32.totalorder %v1260, 0
        %vm1389 = vcmp.ne.s32.totalorder %v1261, 0
        %vm1390 = vcmp.ne.s32.totalorder %v1262, 0
        %vm1391 = vcmp.ne.s32.totalorder %v1263, 0
        %vm1392 = vcmp.ne.s32.totalorder %v1264, 0
        %vm1393 = vcmp.ne.s32.totalorder %v1265, 0
        %vm1394 = vcmp.ne.s32.totalorder %v1266, 0
        %vm1395 = vcmp.ne.s32.totalorder %v1267, 0
        %v1396 = vand.u32 %v388, 8
        %v1397 = vand.u32 %v389, 8
        %v1398 = vand.u32 %v390, 8
        %v1399 = vand.u32 %v391, 8
        %v1400 = vand.u32 %v392, 8
        %v1401 = vand.u32 %v393, 8
        %v1402 = vand.u32 %v394, 8
        %v1403 = vand.u32 %v395, 8
        %v1404 = vand.u32 %v396, 8
        %v1405 = vand.u32 %v397, 8
        %v1406 = vand.u32 %v398, 8
        %v1407 = vand.u32 %v399, 8
        %v1408 = vand.u32 %v400, 8
        %v1409 = vand.u32 %v401, 8
        %v1410 = vand.u32 %v402, 8
        %v1411 = vand.u32 %v403, 8
        %v1412 = vand.u32 %v420, 8
        %v1413 = vand.u32 %v421, 8
        %v1414 = vand.u32 %v422, 8
        %v1415 = vand.u32 %v423, 8
        %v1416 = vand.u32 %v424, 8
        %v1417 = vand.u32 %v425, 8
        %v1418 = vand.u32 %v426, 8
        %v1419 = vand.u32 %v427, 8
        %v1420 = vand.u32 %v428, 8
        %v1421 = vand.u32 %v429, 8
        %v1422 = vand.u32 %v430, 8
        %v1423 = vand.u32 %v431, 8
        %v1424 = vand.u32 %v432, 8
        %v1425 = vand.u32 %v433, 8
        %v1426 = vand.u32 %v434, 8
        %v1427 = vand.u32 %v435, 8
        %v1428 = vand.u32 %v452, 8
        %v1429 = vand.u32 %v453, 8
        %v1430 = vand.u32 %v454, 8
        %v1431 = vand.u32 %v455, 8
        %v1432 = vand.u32 %v456, 8
        %v1433 = vand.u32 %v457, 8
        %v1434 = vand.u32 %v458, 8
        %v1435 = vand.u32 %v459, 8
        %v1436 = vand.u32 %v460, 8
        %v1437 = vand.u32 %v461, 8
        %v1438 = vand.u32 %v462, 8
        %v1439 = vand.u32 %v463, 8
        %v1440 = vand.u32 %v464, 8
        %v1441 = vand.u32 %v465, 8
        %v1442 = vand.u32 %v466, 8
        %v1443 = vand.u32 %v467, 8
        %v1444 = vand.u32 %v484, 8
        %v1445 = vand.u32 %v485, 8
        %v1446 = vand.u32 %v486, 8
        %v1447 = vand.u32 %v487, 8
        %v1448 = vand.u32 %v488, 8
        %v1449 = vand.u32 %v489, 8
        %v1450 = vand.u32 %v490, 8
        %v1451 = vand.u32 %v491, 8
        %v1452 = vand.u32 %v492, 8
        %v1453 = vand.u32 %v493, 8
        %v1454 = vand.u32 %v494, 8
        %v1455 = vand.u32 %v495, 8
        %v1456 = vand.u32 %v496, 8
        %v1457 = vand.u32 %v497, 8
        %v1458 = vand.u32 %v498, 8
        %v1459 = vand.u32 %v499, 8
        %v1460 = vand.u32 %v516, 8
        %v1461 = vand.u32 %v517, 8
        %v1462 = vand.u32 %v518, 8
        %v1463 = vand.u32 %v519, 8
        %v1464 = vand.u32 %v520, 8
        %v1465 = vand.u32 %v521, 8
        %v1466 = vand.u32 %v522, 8
        %v1467 = vand.u32 %v523, 8
        %v1468 = vand.u32 %v524, 8
        %v1469 = vand.u32 %v525, 8
        %v1470 = vand.u32 %v526, 8
        %v1471 = vand.u32 %v527, 8
        %v1472 = vand.u32 %v528, 8
        %v1473 = vand.u32 %v529, 8
        %v1474 = vand.u32 %v530, 8
        %v1475 = vand.u32 %v531, 8
        %v1476 = vand.u32 %v548, 8
        %v1477 = vand.u32 %v549, 8
        %v1478 = vand.u32 %v550, 8
        %v1479 = vand.u32 %v551, 8
        %v1480 = vand.u32 %v552, 8
        %v1481 = vand.u32 %v553, 8
        %v1482 = vand.u32 %v554, 8
        %v1483 = vand.u32 %v555, 8
        %v1484 = vand.u32 %v556, 8
        %v1485 = vand.u32 %v557, 8
        %v1486 = vand.u32 %v558, 8
        %v1487 = vand.u32 %v559, 8
        %v1488 = vand.u32 %v560, 8
        %v1489 = vand.u32 %v561, 8
        %v1490 = vand.u32 %v562, 8
        %v1491 = vand.u32 %v563, 8
        %v1492 = vand.u32 %v580, 8
        %v1493 = vand.u32 %v581, 8
        %v1494 = vand.u32 %v582, 8
        %v1495 = vand.u32 %v583, 8
        %v1496 = vand.u32 %v584, 8
        %v1497 = vand.u32 %v585, 8
        %v1498 = vand.u32 %v586, 8
        %v1499 = vand.u32 %v587, 8
        %v1500 = vand.u32 %v588, 8
        %v1501 = vand.u32 %v589, 8
        %v1502 = vand.u32 %v590, 8
        %v1503 = vand.u32 %v591, 8
        %v1504 = vand.u32 %v592, 8
        %v1505 = vand.u32 %v593, 8
        %v1506 = vand.u32 %v594, 8
        %v1507 = vand.u32 %v595, 8
        %v1508 = vand.u32 %v612, 8
        %v1509 = vand.u32 %v613, 8
        %v1510 = vand.u32 %v614, 8
        %v1511 = vand.u32 %v615, 8
        %v1512 = vand.u32 %v616, 8
        %v1513 = vand.u32 %v617, 8
        %v1514 = vand.u32 %v618, 8
        %v1515 = vand.u32 %v619, 8
        %v1516 = vand.u32 %v620, 8
        %v1517 = vand.u32 %v621, 8
        %v1518 = vand.u32 %v622, 8
        %v1519 = vand.u32 %v623, 8
        %v1520 = vand.u32 %v624, 8
        %v1521 = vand.u32 %v625, 8
        %v1522 = vand.u32 %v626, 8
        %v1523 = vand.u32 %v627, 8
        %vm1524 = vcmp.ne.s32.totalorder %v1396, 0
        %vm1525 = vcmp.ne.s32.totalorder %v1397, 0
        %vm1526 = vcmp.ne.s32.totalorder %v1398, 0
        %vm1527 = vcmp.ne.s32.totalorder %v1399, 0
        %vm1528 = vcmp.ne.s32.totalorder %v1400, 0
        %vm1529 = vcmp.ne.s32.totalorder %v1401, 0
        %vm1530 = vcmp.ne.s32.totalorder %v1402, 0
        %vm1531 = vcmp.ne.s32.totalorder %v1403, 0
        %vm1532 = vcmp.ne.s32.totalorder %v1404, 0
        %vm1533 = vcmp.ne.s32.totalorder %v1405, 0
        %vm1534 = vcmp.ne.s32.totalorder %v1406, 0
        %vm1535 = vcmp.ne.s32.totalorder %v1407, 0
        %vm1536 = vcmp.ne.s32.totalorder %v1408, 0
        %vm1537 = vcmp.ne.s32.totalorder %v1409, 0
        %vm1538 = vcmp.ne.s32.totalorder %v1410, 0
        %vm1539 = vcmp.ne.s32.totalorder %v1411, 0
        %vm1540 = vcmp.ne.s32.totalorder %v1412, 0
        %vm1541 = vcmp.ne.s32.totalorder %v1413, 0
        %vm1542 = vcmp.ne.s32.totalorder %v1414, 0
        %vm1543 = vcmp.ne.s32.totalorder %v1415, 0
        %vm1544 = vcmp.ne.s32.totalorder %v1416, 0
        %vm1545 = vcmp.ne.s32.totalorder %v1417, 0
        %vm1546 = vcmp.ne.s32.totalorder %v1418, 0
        %vm1547 = vcmp.ne.s32.totalorder %v1419, 0
        %vm1548 = vcmp.ne.s32.totalorder %v1420, 0
        %vm1549 = vcmp.ne.s32.totalorder %v1421, 0
        %vm1550 = vcmp.ne.s32.totalorder %v1422, 0
        %vm1551 = vcmp.ne.s32.totalorder %v1423, 0
        %vm1552 = vcmp.ne.s32.totalorder %v1424, 0
        %vm1553 = vcmp.ne.s32.totalorder %v1425, 0
        %vm1554 = vcmp.ne.s32.totalorder %v1426, 0
        %vm1555 = vcmp.ne.s32.totalorder %v1427, 0
        %vm1556 = vcmp.ne.s32.totalorder %v1428, 0
        %vm1557 = vcmp.ne.s32.totalorder %v1429, 0
        %vm1558 = vcmp.ne.s32.totalorder %v1430, 0
        %vm1559 = vcmp.ne.s32.totalorder %v1431, 0
        %vm1560 = vcmp.ne.s32.totalorder %v1432, 0
        %vm1561 = vcmp.ne.s32.totalorder %v1433, 0
        %vm1562 = vcmp.ne.s32.totalorder %v1434, 0
        %vm1563 = vcmp.ne.s32.totalorder %v1435, 0
        %vm1564 = vcmp.ne.s32.totalorder %v1436, 0
        %vm1565 = vcmp.ne.s32.totalorder %v1437, 0
        %vm1566 = vcmp.ne.s32.totalorder %v1438, 0
        %vm1567 = vcmp.ne.s32.totalorder %v1439, 0
        %vm1568 = vcmp.ne.s32.totalorder %v1440, 0
        %vm1569 = vcmp.ne.s32.totalorder %v1441, 0
        %vm1570 = vcmp.ne.s32.totalorder %v1442, 0
        %vm1571 = vcmp.ne.s32.totalorder %v1443, 0
        %vm1572 = vcmp.ne.s32.totalorder %v1444, 0
        %vm1573 = vcmp.ne.s32.totalorder %v1445, 0
        %vm1574 = vcmp.ne.s32.totalorder %v1446, 0
        %vm1575 = vcmp.ne.s32.totalorder %v1447, 0
        %vm1576 = vcmp.ne.s32.totalorder %v1448, 0
        %vm1577 = vcmp.ne.s32.totalorder %v1449, 0
        %vm1578 = vcmp.ne.s32.totalorder %v1450, 0
        %vm1579 = vcmp.ne.s32.totalorder %v1451, 0
        %vm1580 = vcmp.ne.s32.totalorder %v1452, 0
        %vm1581 = vcmp.ne.s32.totalorder %v1453, 0
        %vm1582 = vcmp.ne.s32.totalorder %v1454, 0
        %vm1583 = vcmp.ne.s32.totalorder %v1455, 0
        %vm1584 = vcmp.ne.s32.totalorder %v1456, 0
        %vm1585 = vcmp.ne.s32.totalorder %v1457, 0
        %vm1586 = vcmp.ne.s32.totalorder %v1458, 0
        %vm1587 = vcmp.ne.s32.totalorder %v1459, 0
        %vm1588 = vcmp.ne.s32.totalorder %v1460, 0
        %vm1589 = vcmp.ne.s32.totalorder %v1461, 0
        %vm1590 = vcmp.ne.s32.totalorder %v1462, 0
        %vm1591 = vcmp.ne.s32.totalorder %v1463, 0
        %vm1592 = vcmp.ne.s32.totalorder %v1464, 0
        %vm1593 = vcmp.ne.s32.totalorder %v1465, 0
        %vm1594 = vcmp.ne.s32.totalorder %v1466, 0
        %vm1595 = vcmp.ne.s32.totalorder %v1467, 0
        %vm1596 = vcmp.ne.s32.totalorder %v1468, 0
        %vm1597 = vcmp.ne.s32.totalorder %v1469, 0
        %vm1598 = vcmp.ne.s32.totalorder %v1470, 0
        %vm1599 = vcmp.ne.s32.totalorder %v1471, 0
        %vm1600 = vcmp.ne.s32.totalorder %v1472, 0
        %vm1601 = vcmp.ne.s32.totalorder %v1473, 0
        %vm1602 = vcmp.ne.s32.totalorder %v1474, 0
        %vm1603 = vcmp.ne.s32.totalorder %v1475, 0
        %vm1604 = vcmp.ne.s32.totalorder %v1476, 0
        %vm1605 = vcmp.ne.s32.totalorder %v1477, 0
        %vm1606 = vcmp.ne.s32.totalorder %v1478, 0
        %vm1607 = vcmp.ne.s32.totalorder %v1479, 0
        %vm1608 = vcmp.ne.s32.totalorder %v1480, 0
        %vm1609 = vcmp.ne.s32.totalorder %v1481, 0
        %vm1610 = vcmp.ne.s32.totalorder %v1482, 0
        %vm1611 = vcmp.ne.s32.totalorder %v1483, 0
        %vm1612 = vcmp.ne.s32.totalorder %v1484, 0
        %vm1613 = vcmp.ne.s32.totalorder %v1485, 0
        %vm1614 = vcmp.ne.s32.totalorder %v1486, 0
        %vm1615 = vcmp.ne.s32.totalorder %v1487, 0
        %vm1616 = vcmp.ne.s32.totalorder %v1488, 0
        %vm1617 = vcmp.ne.s32.totalorder %v1489, 0
        %vm1618 = vcmp.ne.s32.totalorder %v1490, 0
        %vm1619 = vcmp.ne.s32.totalorder %v1491, 0
        %vm1620 = vcmp.ne.s32.totalorder %v1492, 0
        %vm1621 = vcmp.ne.s32.totalorder %v1493, 0
        %vm1622 = vcmp.ne.s32.totalorder %v1494, 0
        %vm1623 = vcmp.ne.s32.totalorder %v1495, 0
        %vm1624 = vcmp.ne.s32.totalorder %v1496, 0
        %vm1625 = vcmp.ne.s32.totalorder %v1497, 0
        %vm1626 = vcmp.ne.s32.totalorder %v1498, 0
        %vm1627 = vcmp.ne.s32.totalorder %v1499, 0
        %vm1628 = vcmp.ne.s32.totalorder %v1500, 0
        %vm1629 = vcmp.ne.s32.totalorder %v1501, 0
        %vm1630 = vcmp.ne.s32.totalorder %v1502, 0
        %vm1631 = vcmp.ne.s32.totalorder %v1503, 0
        %vm1632 = vcmp.ne.s32.totalorder %v1504, 0
        %vm1633 = vcmp.ne.s32.totalorder %v1505, 0
        %vm1634 = vcmp.ne.s32.totalorder %v1506, 0
        %vm1635 = vcmp.ne.s32.totalorder %v1507, 0
        %vm1636 = vcmp.ne.s32.totalorder %v1508, 0
        %vm1637 = vcmp.ne.s32.totalorder %v1509, 0
        %vm1638 = vcmp.ne.s32.totalorder %v1510, 0
        %vm1639 = vcmp.ne.s32.totalorder %v1511, 0
        %vm1640 = vcmp.ne.s32.totalorder %v1512, 0
        %vm1641 = vcmp.ne.s32.totalorder %v1513, 0
        %vm1642 = vcmp.ne.s32.totalorder %v1514, 0
        %vm1643 = vcmp.ne.s32.totalorder %v1515, 0
        %vm1644 = vcmp.ne.s32.totalorder %v1516, 0
        %vm1645 = vcmp.ne.s32.totalorder %v1517, 0
        %vm1646 = vcmp.ne.s32.totalorder %v1518, 0
        %vm1647 = vcmp.ne.s32.totalorder %v1519, 0
        %vm1648 = vcmp.ne.s32.totalorder %v1520, 0
        %vm1649 = vcmp.ne.s32.totalorder %v1521, 0
        %vm1650 = vcmp.ne.s32.totalorder %v1522, 0
        %vm1651 = vcmp.ne.s32.totalorder %v1523, 0
        %v1652 = vsel %vm756, -0.6961928, -1.0
        %v1653 = vsel %vm757, -0.6961928, -1.0
        %v1654 = vsel %vm758, -0.6961928, -1.0
        %v1655 = vsel %vm759, -0.6961928, -1.0
        %v1656 = vsel %vm760, -0.6961928, -1.0
        %v1657 = vsel %vm761, -0.6961928, -1.0
        %v1658 = vsel %vm762, -0.6961928, -1.0
        %v1659 = vsel %vm763, -0.6961928, -1.0
        %v1660 = vsel %vm764, -0.6961928, -1.0
        %v1661 = vsel %vm765, -0.6961928, -1.0
        %v1662 = vsel %vm766, -0.6961928, -1.0
        %v1663 = vsel %vm767, -0.6961928, -1.0
        %v1664 = vsel %vm768, -0.6961928, -1.0
        %v1665 = vsel %vm769, -0.6961928, -1.0
        %v1666 = vsel %vm770, -0.6961928, -1.0
        %v1667 = vsel %vm771, -0.6961928, -1.0
        %v1668 = vsel %vm772, -0.6961928, -1.0
        %v1669 = vsel %vm773, -0.6961928, -1.0
        %v1670 = vsel %vm774, -0.6961928, -1.0
        %v1671 = vsel %vm775, -0.6961928, -1.0
        %v1672 = vsel %vm776, -0.6961928, -1.0
        %v1673 = vsel %vm777, -0.6961928, -1.0
        %v1674 = vsel %vm778, -0.6961928, -1.0
        %v1675 = vsel %vm779, -0.6961928, -1.0
        %v1676 = vsel %vm780, -0.6961928, -1.0
        %v1677 = vsel %vm781, -0.6961928, -1.0
        %v1678 = vsel %vm782, -0.6961928, -1.0
        %v1679 = vsel %vm783, -0.6961928, -1.0
        %v1680 = vsel %vm784, -0.6961928, -1.0
        %v1681 = vsel %vm785, -0.6961928, -1.0
        %v1682 = vsel %vm786, -0.6961928, -1.0
        %v1683 = vsel %vm787, -0.6961928, -1.0
        %v1684 = vsel %vm788, -0.6961928, -1.0
        %v1685 = vsel %vm789, -0.6961928, -1.0
        %v1686 = vsel %vm790, -0.6961928, -1.0
        %v1687 = vsel %vm791, -0.6961928, -1.0
        %v1688 = vsel %vm792, -0.6961928, -1.0
        %v1689 = vsel %vm793, -0.6961928, -1.0
        %v1690 = vsel %vm794, -0.6961928, -1.0
        %v1691 = vsel %vm795, -0.6961928, -1.0
        %v1692 = vsel %vm796, -0.6961928, -1.0
        %v1693 = vsel %vm797, -0.6961928, -1.0
        %v1694 = vsel %vm798, -0.6961928, -1.0
        %v1695 = vsel %vm799, -0.6961928, -1.0
        %v1696 = vsel %vm800, -0.6961928, -1.0
        %v1697 = vsel %vm801, -0.6961928, -1.0
        %v1698 = vsel %vm802, -0.6961928, -1.0
        %v1699 = vsel %vm803, -0.6961928, -1.0
        %v1700 = vsel %vm804, -0.6961928, -1.0
        %v1701 = vsel %vm805, -0.6961928, -1.0
        %v1702 = vsel %vm806, -0.6961928, -1.0
        %v1703 = vsel %vm807, -0.6961928, -1.0
        %v1704 = vsel %vm808, -0.6961928, -1.0
        %v1705 = vsel %vm809, -0.6961928, -1.0
        %v1706 = vsel %vm810, -0.6961928, -1.0
        %v1707 = vsel %vm811, -0.6961928, -1.0
        %v1708 = vsel %vm812, -0.6961928, -1.0
        %v1709 = vsel %vm813, -0.6961928, -1.0
        %v1710 = vsel %vm814, -0.6961928, -1.0
        %v1711 = vsel %vm815, -0.6961928, -1.0
        %v1712 = vsel %vm816, -0.6961928, -1.0
        %v1713 = vsel %vm817, -0.6961928, -1.0
        %v1714 = vsel %vm818, -0.6961928, -1.0
        %v1715 = vsel %vm819, -0.6961928, -1.0
        %v1716 = vsel %vm820, -0.6961928, -1.0
        %v1717 = vsel %vm821, -0.6961928, -1.0
        %v1718 = vsel %vm822, -0.6961928, -1.0
        %v1719 = vsel %vm823, -0.6961928, -1.0
        %v1720 = vsel %vm824, -0.6961928, -1.0
        %v1721 = vsel %vm825, -0.6961928, -1.0
        %v1722 = vsel %vm826, -0.6961928, -1.0
        %v1723 = vsel %vm827, -0.6961928, -1.0
        %v1724 = vsel %vm828, -0.6961928, -1.0
        %v1725 = vsel %vm829, -0.6961928, -1.0
        %v1726 = vsel %vm830, -0.6961928, -1.0
        %v1727 = vsel %vm831, -0.6961928, -1.0
        %v1728 = vsel %vm832, -0.6961928, -1.0
        %v1729 = vsel %vm833, -0.6961928, -1.0
        %v1730 = vsel %vm834, -0.6961928, -1.0
        %v1731 = vsel %vm835, -0.6961928, -1.0
        %v1732 = vsel %vm836, -0.6961928, -1.0
        %v1733 = vsel %vm837, -0.6961928, -1.0
        %v1734 = vsel %vm838, -0.6961928, -1.0
        %v1735 = vsel %vm839, -0.6961928, -1.0
        %v1736 = vsel %vm840, -0.6961928, -1.0
        %v1737 = vsel %vm841, -0.6961928, -1.0
        %v1738 = vsel %vm842, -0.6961928, -1.0
        %v1739 = vsel %vm843, -0.6961928, -1.0
        %v1740 = vsel %vm844, -0.6961928, -1.0
        %v1741 = vsel %vm845, -0.6961928, -1.0
        %v1742 = vsel %vm846, -0.6961928, -1.0
        %v1743 = vsel %vm847, -0.6961928, -1.0
        %v1744 = vsel %vm848, -0.6961928, -1.0
        %v1745 = vsel %vm849, -0.6961928, -1.0
        %v1746 = vsel %vm850, -0.6961928, -1.0
        %v1747 = vsel %vm851, -0.6961928, -1.0
        %v1748 = vsel %vm852, -0.6961928, -1.0
        %v1749 = vsel %vm853, -0.6961928, -1.0
        %v1750 = vsel %vm854, -0.6961928, -1.0
        %v1751 = vsel %vm855, -0.6961928, -1.0
        %v1752 = vsel %vm856, -0.6961928, -1.0
        %v1753 = vsel %vm857, -0.6961928, -1.0
        %v1754 = vsel %vm858, -0.6961928, -1.0
        %v1755 = vsel %vm859, -0.6961928, -1.0
        %v1756 = vsel %vm860, -0.6961928, -1.0
        %v1757 = vsel %vm861, -0.6961928, -1.0
        %v1758 = vsel %vm862, -0.6961928, -1.0
        %v1759 = vsel %vm863, -0.6961928, -1.0
        %v1760 = vsel %vm864, -0.6961928, -1.0
        %v1761 = vsel %vm865, -0.6961928, -1.0
        %v1762 = vsel %vm866, -0.6961928, -1.0
        %v1763 = vsel %vm867, -0.6961928, -1.0
        %v1764 = vsel %vm868, -0.6961928, -1.0
        %v1765 = vsel %vm869, -0.6961928, -1.0
        %v1766 = vsel %vm870, -0.6961928, -1.0
        %v1767 = vsel %vm871, -0.6961928, -1.0
        %v1768 = vsel %vm872, -0.6961928, -1.0
        %v1769 = vsel %vm873, -0.6961928, -1.0
        %v1770 = vsel %vm874, -0.6961928, -1.0
        %v1771 = vsel %vm875, -0.6961928, -1.0
        %v1772 = vsel %vm876, -0.6961928, -1.0
        %v1773 = vsel %vm877, -0.6961928, -1.0
        %v1774 = vsel %vm878, -0.6961928, -1.0
        %v1775 = vsel %vm879, -0.6961928, -1.0
        %v1776 = vsel %vm880, -0.6961928, -1.0
        %v1777 = vsel %vm881, -0.6961928, -1.0
        %v1778 = vsel %vm882, -0.6961928, -1.0
        %v1779 = vsel %vm883, -0.6961928, -1.0
        %v1780 = vsel %vm756, -0.3949175, -0.52507305
        %v1781 = vsel %vm757, -0.3949175, -0.52507305
        %v1782 = vsel %vm758, -0.3949175, -0.52507305
        %v1783 = vsel %vm759, -0.3949175, -0.52507305
        %v1784 = vsel %vm760, -0.3949175, -0.52507305
        %v1785 = vsel %vm761, -0.3949175, -0.52507305
        %v1786 = vsel %vm762, -0.3949175, -0.52507305
        %v1787 = vsel %vm763, -0.3949175, -0.52507305
        %v1788 = vsel %vm764, -0.3949175, -0.52507305
        %v1789 = vsel %vm765, -0.3949175, -0.52507305
        %v1790 = vsel %vm766, -0.3949175, -0.52507305
        %v1791 = vsel %vm767, -0.3949175, -0.52507305
        %v1792 = vsel %vm768, -0.3949175, -0.52507305
        %v1793 = vsel %vm769, -0.3949175, -0.52507305
        %v1794 = vsel %vm770, -0.3949175, -0.52507305
        %v1795 = vsel %vm771, -0.3949175, -0.52507305
        %v1796 = vsel %vm772, -0.3949175, -0.52507305
        %v1797 = vsel %vm773, -0.3949175, -0.52507305
        %v1798 = vsel %vm774, -0.3949175, -0.52507305
        %v1799 = vsel %vm775, -0.3949175, -0.52507305
        %v1800 = vsel %vm776, -0.3949175, -0.52507305
        %v1801 = vsel %vm777, -0.3949175, -0.52507305
        %v1802 = vsel %vm778, -0.3949175, -0.52507305
        %v1803 = vsel %vm779, -0.3949175, -0.52507305
        %v1804 = vsel %vm780, -0.3949175, -0.52507305
        %v1805 = vsel %vm781, -0.3949175, -0.52507305
        %v1806 = vsel %vm782, -0.3949175, -0.52507305
        %v1807 = vsel %vm783, -0.3949175, -0.52507305
        %v1808 = vsel %vm784, -0.3949175, -0.52507305
        %v1809 = vsel %vm785, -0.3949175, -0.52507305
        %v1810 = vsel %vm786, -0.3949175, -0.52507305
        %v1811 = vsel %vm787, -0.3949175, -0.52507305
        %v1812 = vsel %vm788, -0.3949175, -0.52507305
        %v1813 = vsel %vm789, -0.3949175, -0.52507305
        %v1814 = vsel %vm790, -0.3949175, -0.52507305
        %v1815 = vsel %vm791, -0.3949175, -0.52507305
        %v1816 = vsel %vm792, -0.3949175, -0.52507305
        %v1817 = vsel %vm793, -0.3949175, -0.52507305
        %v1818 = vsel %vm794, -0.3949175, -0.52507305
        %v1819 = vsel %vm795, -0.3949175, -0.52507305
        %v1820 = vsel %vm796, -0.3949175, -0.52507305
        %v1821 = vsel %vm797, -0.3949175, -0.52507305
        %v1822 = vsel %vm798, -0.3949175, -0.52507305
        %v1823 = vsel %vm799, -0.3949175, -0.52507305
        %v1824 = vsel %vm800, -0.3949175, -0.52507305
        %v1825 = vsel %vm801, -0.3949175, -0.52507305
        %v1826 = vsel %vm802, -0.3949175, -0.52507305
        %v1827 = vsel %vm803, -0.3949175, -0.52507305
        %v1828 = vsel %vm804, -0.3949175, -0.52507305
        %v1829 = vsel %vm805, -0.3949175, -0.52507305
        %v1830 = vsel %vm806, -0.3949175, -0.52507305
        %v1831 = vsel %vm807, -0.3949175, -0.52507305
        %v1832 = vsel %vm808, -0.3949175, -0.52507305
        %v1833 = vsel %vm809, -0.3949175, -0.52507305
        %v1834 = vsel %vm810, -0.3949175, -0.52507305
        %v1835 = vsel %vm811, -0.3949175, -0.52507305
        %v1836 = vsel %vm812, -0.3949175, -0.52507305
        %v1837 = vsel %vm813, -0.3949175, -0.52507305
        %v1838 = vsel %vm814, -0.3949175, -0.52507305
        %v1839 = vsel %vm815, -0.3949175, -0.52507305
        %v1840 = vsel %vm816, -0.3949175, -0.52507305
        %v1841 = vsel %vm817, -0.3949175, -0.52507305
        %v1842 = vsel %vm818, -0.3949175, -0.52507305
        %v1843 = vsel %vm819, -0.3949175, -0.52507305
        %v1844 = vsel %vm820, -0.3949175, -0.52507305
        %v1845 = vsel %vm821, -0.3949175, -0.52507305
        %v1846 = vsel %vm822, -0.3949175, -0.52507305
        %v1847 = vsel %vm823, -0.3949175, -0.52507305
        %v1848 = vsel %vm824, -0.3949175, -0.52507305
        %v1849 = vsel %vm825, -0.3949175, -0.52507305
        %v1850 = vsel %vm826, -0.3949175, -0.52507305
        %v1851 = vsel %vm827, -0.3949175, -0.52507305
        %v1852 = vsel %vm828, -0.3949175, -0.52507305
        %v1853 = vsel %vm829, -0.3949175, -0.52507305
        %v1854 = vsel %vm830, -0.3949175, -0.52507305
        %v1855 = vsel %vm831, -0.3949175, -0.52507305
        %v1856 = vsel %vm832, -0.3949175, -0.52507305
        %v1857 = vsel %vm833, -0.3949175, -0.52507305
        %v1858 = vsel %vm834, -0.3949175, -0.52507305
        %v1859 = vsel %vm835, -0.3949175, -0.52507305
        %v1860 = vsel %vm836, -0.3949175, -0.52507305
        %v1861 = vsel %vm837, -0.3949175, -0.52507305
        %v1862 = vsel %vm838, -0.3949175, -0.52507305
        %v1863 = vsel %vm839, -0.3949175, -0.52507305
        %v1864 = vsel %vm840, -0.3949175, -0.52507305
        %v1865 = vsel %vm841, -0.3949175, -0.52507305
        %v1866 = vsel %vm842, -0.3949175, -0.52507305
        %v1867 = vsel %vm843, -0.3949175, -0.52507305
        %v1868 = vsel %vm844, -0.3949175, -0.52507305
        %v1869 = vsel %vm845, -0.3949175, -0.52507305
        %v1870 = vsel %vm846, -0.3949175, -0.52507305
        %v1871 = vsel %vm847, -0.3949175, -0.52507305
        %v1872 = vsel %vm848, -0.3949175, -0.52507305
        %v1873 = vsel %vm849, -0.3949175, -0.52507305
        %v1874 = vsel %vm850, -0.3949175, -0.52507305
        %v1875 = vsel %vm851, -0.3949175, -0.52507305
        %v1876 = vsel %vm852, -0.3949175, -0.52507305
        %v1877 = vsel %vm853, -0.3949175, -0.52507305
        %v1878 = vsel %vm854, -0.3949175, -0.52507305
        %v1879 = vsel %vm855, -0.3949175, -0.52507305
        %v1880 = vsel %vm856, -0.3949175, -0.52507305
        %v1881 = vsel %vm857, -0.3949175, -0.52507305
        %v1882 = vsel %vm858, -0.3949175, -0.52507305
        %v1883 = vsel %vm859, -0.3949175, -0.52507305
        %v1884 = vsel %vm860, -0.3949175, -0.52507305
        %v1885 = vsel %vm861, -0.3949175, -0.52507305
        %v1886 = vsel %vm862, -0.3949175, -0.52507305
        %v1887 = vsel %vm863, -0.3949175, -0.52507305
        %v1888 = vsel %vm864, -0.3949175, -0.52507305
        %v1889 = vsel %vm865, -0.3949175, -0.52507305
        %v1890 = vsel %vm866, -0.3949175, -0.52507305
        %v1891 = vsel %vm867, -0.3949175, -0.52507305
        %v1892 = vsel %vm868, -0.3949175, -0.52507305
        %v1893 = vsel %vm869, -0.3949175, -0.52507305
        %v1894 = vsel %vm870, -0.3949175, -0.52507305
        %v1895 = vsel %vm871, -0.3949175, -0.52507305
        %v1896 = vsel %vm872, -0.3949175, -0.52507305
        %v1897 = vsel %vm873, -0.3949175, -0.52507305
        %v1898 = vsel %vm874, -0.3949175, -0.52507305
        %v1899 = vsel %vm875, -0.3949175, -0.52507305
        %v1900 = vsel %vm876, -0.3949175, -0.52507305
        %v1901 = vsel %vm877, -0.3949175, -0.52507305
        %v1902 = vsel %vm878, -0.3949175, -0.52507305
        %v1903 = vsel %vm879, -0.3949175, -0.52507305
        %v1904 = vsel %vm880, -0.3949175, -0.52507305
        %v1905 = vsel %vm881, -0.3949175, -0.52507305
        %v1906 = vsel %vm882, -0.3949175, -0.52507305
        %v1907 = vsel %vm883, -0.3949175, -0.52507305
        %v1908 = vsel %vm756, -0.18477343, -0.28444138
        %v1909 = vsel %vm757, -0.18477343, -0.28444138
        %v1910 = vsel %vm758, -0.18477343, -0.28444138
        %v1911 = vsel %vm759, -0.18477343, -0.28444138
        %v1912 = vsel %vm760, -0.18477343, -0.28444138
        %v1913 = vsel %vm761, -0.18477343, -0.28444138
        %v1914 = vsel %vm762, -0.18477343, -0.28444138
        %v1915 = vsel %vm763, -0.18477343, -0.28444138
        %v1916 = vsel %vm764, -0.18477343, -0.28444138
        %v1917 = vsel %vm765, -0.18477343, -0.28444138
        %v1918 = vsel %vm766, -0.18477343, -0.28444138
        %v1919 = vsel %vm767, -0.18477343, -0.28444138
        %v1920 = vsel %vm768, -0.18477343, -0.28444138
        %v1921 = vsel %vm769, -0.18477343, -0.28444138
        %v1922 = vsel %vm770, -0.18477343, -0.28444138
        %v1923 = vsel %vm771, -0.18477343, -0.28444138
        %v1924 = vsel %vm772, -0.18477343, -0.28444138
        %v1925 = vsel %vm773, -0.18477343, -0.28444138
        %v1926 = vsel %vm774, -0.18477343, -0.28444138
        %v1927 = vsel %vm775, -0.18477343, -0.28444138
        %v1928 = vsel %vm776, -0.18477343, -0.28444138
        %v1929 = vsel %vm777, -0.18477343, -0.28444138
        %v1930 = vsel %vm778, -0.18477343, -0.28444138
        %v1931 = vsel %vm779, -0.18477343, -0.28444138
        %v1932 = vsel %vm780, -0.18477343, -0.28444138
        %v1933 = vsel %vm781, -0.18477343, -0.28444138
        %v1934 = vsel %vm782, -0.18477343, -0.28444138
        %v1935 = vsel %vm783, -0.18477343, -0.28444138
        %v1936 = vsel %vm784, -0.18477343, -0.28444138
        %v1937 = vsel %vm785, -0.18477343, -0.28444138
        %v1938 = vsel %vm786, -0.18477343, -0.28444138
        %v1939 = vsel %vm787, -0.18477343, -0.28444138
        %v1940 = vsel %vm788, -0.18477343, -0.28444138
        %v1941 = vsel %vm789, -0.18477343, -0.28444138
        %v1942 = vsel %vm790, -0.18477343, -0.28444138
        %v1943 = vsel %vm791, -0.18477343, -0.28444138
        %v1944 = vsel %vm792, -0.18477343, -0.28444138
        %v1945 = vsel %vm793, -0.18477343, -0.28444138
        %v1946 = vsel %vm794, -0.18477343, -0.28444138
        %v1947 = vsel %vm795, -0.18477343, -0.28444138
        %v1948 = vsel %vm796, -0.18477343, -0.28444138
        %v1949 = vsel %vm797, -0.18477343, -0.28444138
        %v1950 = vsel %vm798, -0.18477343, -0.28444138
        %v1951 = vsel %vm799, -0.18477343, -0.28444138
        %v1952 = vsel %vm800, -0.18477343, -0.28444138
        %v1953 = vsel %vm801, -0.18477343, -0.28444138
        %v1954 = vsel %vm802, -0.18477343, -0.28444138
        %v1955 = vsel %vm803, -0.18477343, -0.28444138
        %v1956 = vsel %vm804, -0.18477343, -0.28444138
        %v1957 = vsel %vm805, -0.18477343, -0.28444138
        %v1958 = vsel %vm806, -0.18477343, -0.28444138
        %v1959 = vsel %vm807, -0.18477343, -0.28444138
        %v1960 = vsel %vm808, -0.18477343, -0.28444138
        %v1961 = vsel %vm809, -0.18477343, -0.28444138
        %v1962 = vsel %vm810, -0.18477343, -0.28444138
        %v1963 = vsel %vm811, -0.18477343, -0.28444138
        %v1964 = vsel %vm812, -0.18477343, -0.28444138
        %v1965 = vsel %vm813, -0.18477343, -0.28444138
        %v1966 = vsel %vm814, -0.18477343, -0.28444138
        %v1967 = vsel %vm815, -0.18477343, -0.28444138
        %v1968 = vsel %vm816, -0.18477343, -0.28444138
        %v1969 = vsel %vm817, -0.18477343, -0.28444138
        %v1970 = vsel %vm818, -0.18477343, -0.28444138
        %v1971 = vsel %vm819, -0.18477343, -0.28444138
        %v1972 = vsel %vm820, -0.18477343, -0.28444138
        %v1973 = vsel %vm821, -0.18477343, -0.28444138
        %v1974 = vsel %vm822, -0.18477343, -0.28444138
        %v1975 = vsel %vm823, -0.18477343, -0.28444138
        %v1976 = vsel %vm824, -0.18477343, -0.28444138
        %v1977 = vsel %vm825, -0.18477343, -0.28444138
        %v1978 = vsel %vm826, -0.18477343, -0.28444138
        %v1979 = vsel %vm827, -0.18477343, -0.28444138
        %v1980 = vsel %vm828, -0.18477343, -0.28444138
        %v1981 = vsel %vm829, -0.18477343, -0.28444138
        %v1982 = vsel %vm830, -0.18477343, -0.28444138
        %v1983 = vsel %vm831, -0.18477343, -0.28444138
        %v1984 = vsel %vm832, -0.18477343, -0.28444138
        %v1985 = vsel %vm833, -0.18477343, -0.28444138
        %v1986 = vsel %vm834, -0.18477343, -0.28444138
        %v1987 = vsel %vm835, -0.18477343, -0.28444138
        %v1988 = vsel %vm836, -0.18477343, -0.28444138
        %v1989 = vsel %vm837, -0.18477343, -0.28444138
        %v1990 = vsel %vm838, -0.18477343, -0.28444138
        %v1991 = vsel %vm839, -0.18477343, -0.28444138
        %v1992 = vsel %vm840, -0.18477343, -0.28444138
        %v1993 = vsel %vm841, -0.18477343, -0.28444138
        %v1994 = vsel %vm842, -0.18477343, -0.28444138
        %v1995 = vsel %vm843, -0.18477343, -0.28444138
        %v1996 = vsel %vm844, -0.18477343, -0.28444138
        %v1997 = vsel %vm845, -0.18477343, -0.28444138
        %v1998 = vsel %vm846, -0.18477343, -0.28444138
        %v1999 = vsel %vm847, -0.18477343, -0.28444138
        %v2000 = vsel %vm848, -0.18477343, -0.28444138
        %v2001 = vsel %vm849, -0.18477343, -0.28444138
        %v2002 = vsel %vm850, -0.18477343, -0.28444138
        %v2003 = vsel %vm851, -0.18477343, -0.28444138
        %v2004 = vsel %vm852, -0.18477343, -0.28444138
        %v2005 = vsel %vm853, -0.18477343, -0.28444138
        %v2006 = vsel %vm854, -0.18477343, -0.28444138
        %v2007 = vsel %vm855, -0.18477343, -0.28444138
        %v2008 = vsel %vm856, -0.18477343, -0.28444138
        %v2009 = vsel %vm857, -0.18477343, -0.28444138
        %v2010 = vsel %vm858, -0.18477343, -0.28444138
        %v2011 = vsel %vm859, -0.18477343, -0.28444138
        %v2012 = vsel %vm860, -0.18477343, -0.28444138
        %v2013 = vsel %vm861, -0.18477343, -0.28444138
        %v2014 = vsel %vm862, -0.18477343, -0.28444138
        %v2015 = vsel %vm863, -0.18477343, -0.28444138
        %v2016 = vsel %vm864, -0.18477343, -0.28444138
        %v2017 = vsel %vm865, -0.18477343, -0.28444138
        %v2018 = vsel %vm866, -0.18477343, -0.28444138
        %v2019 = vsel %vm867, -0.18477343, -0.28444138
        %v2020 = vsel %vm868, -0.18477343, -0.28444138
        %v2021 = vsel %vm869, -0.18477343, -0.28444138
        %v2022 = vsel %vm870, -0.18477343, -0.28444138
        %v2023 = vsel %vm871, -0.18477343, -0.28444138
        %v2024 = vsel %vm872, -0.18477343, -0.28444138
        %v2025 = vsel %vm873, -0.18477343, -0.28444138
        %v2026 = vsel %vm874, -0.18477343, -0.28444138
        %v2027 = vsel %vm875, -0.18477343, -0.28444138
        %v2028 = vsel %vm876, -0.18477343, -0.28444138
        %v2029 = vsel %vm877, -0.18477343, -0.28444138
        %v2030 = vsel %vm878, -0.18477343, -0.28444138
        %v2031 = vsel %vm879, -0.18477343, -0.28444138
        %v2032 = vsel %vm880, -0.18477343, -0.28444138
        %v2033 = vsel %vm881, -0.18477343, -0.28444138
        %v2034 = vsel %vm882, -0.18477343, -0.28444138
        %v2035 = vsel %vm883, -0.18477343, -0.28444138
        %v2036 = vsel %vm756, 0.0, -0.091050036
        %v2037 = vsel %vm757, 0.0, -0.091050036
        %v2038 = vsel %vm758, 0.0, -0.091050036
        %v2039 = vsel %vm759, 0.0, -0.091050036
        %v2040 = vsel %vm760, 0.0, -0.091050036
        %v2041 = vsel %vm761, 0.0, -0.091050036
        %v2042 = vsel %vm762, 0.0, -0.091050036
        %v2043 = vsel %vm763, 0.0, -0.091050036
        %v2044 = vsel %vm764, 0.0, -0.091050036
        %v2045 = vsel %vm765, 0.0, -0.091050036
        %v2046 = vsel %vm766, 0.0, -0.091050036
        %v2047 = vsel %vm767, 0.0, -0.091050036
        %v2048 = vsel %vm768, 0.0, -0.091050036
        %v2049 = vsel %vm769, 0.0, -0.091050036
        %v2050 = vsel %vm770, 0.0, -0.091050036
        %v2051 = vsel %vm771, 0.0, -0.091050036
        %v2052 = vsel %vm772, 0.0, -0.091050036
        %v2053 = vsel %vm773, 0.0, -0.091050036
        %v2054 = vsel %vm774, 0.0, -0.091050036
        %v2055 = vsel %vm775, 0.0, -0.091050036
        %v2056 = vsel %vm776, 0.0, -0.091050036
        %v2057 = vsel %vm777, 0.0, -0.091050036
        %v2058 = vsel %vm778, 0.0, -0.091050036
        %v2059 = vsel %vm779, 0.0, -0.091050036
        %v2060 = vsel %vm780, 0.0, -0.091050036
        %v2061 = vsel %vm781, 0.0, -0.091050036
        %v2062 = vsel %vm782, 0.0, -0.091050036
        %v2063 = vsel %vm783, 0.0, -0.091050036
        %v2064 = vsel %vm784, 0.0, -0.091050036
        %v2065 = vsel %vm785, 0.0, -0.091050036
        %v2066 = vsel %vm786, 0.0, -0.091050036
        %v2067 = vsel %vm787, 0.0, -0.091050036
        %v2068 = vsel %vm788, 0.0, -0.091050036
        %v2069 = vsel %vm789, 0.0, -0.091050036
        %v2070 = vsel %vm790, 0.0, -0.091050036
        %v2071 = vsel %vm791, 0.0, -0.091050036
        %v2072 = vsel %vm792, 0.0, -0.091050036
        %v2073 = vsel %vm793, 0.0, -0.091050036
        %v2074 = vsel %vm794, 0.0, -0.091050036
        %v2075 = vsel %vm795, 0.0, -0.091050036
        %v2076 = vsel %vm796, 0.0, -0.091050036
        %v2077 = vsel %vm797, 0.0, -0.091050036
        %v2078 = vsel %vm798, 0.0, -0.091050036
        %v2079 = vsel %vm799, 0.0, -0.091050036
        %v2080 = vsel %vm800, 0.0, -0.091050036
        %v2081 = vsel %vm801, 0.0, -0.091050036
        %v2082 = vsel %vm802, 0.0, -0.091050036
        %v2083 = vsel %vm803, 0.0, -0.091050036
        %v2084 = vsel %vm804, 0.0, -0.091050036
        %v2085 = vsel %vm805, 0.0, -0.091050036
        %v2086 = vsel %vm806, 0.0, -0.091050036
        %v2087 = vsel %vm807, 0.0, -0.091050036
        %v2088 = vsel %vm808, 0.0, -0.091050036
        %v2089 = vsel %vm809, 0.0, -0.091050036
        %v2090 = vsel %vm810, 0.0, -0.091050036
        %v2091 = vsel %vm811, 0.0, -0.091050036
        %v2092 = vsel %vm812, 0.0, -0.091050036
        %v2093 = vsel %vm813, 0.0, -0.091050036
        %v2094 = vsel %vm814, 0.0, -0.091050036
        %v2095 = vsel %vm815, 0.0, -0.091050036
        %v2096 = vsel %vm816, 0.0, -0.091050036
        %v2097 = vsel %vm817, 0.0, -0.091050036
        %v2098 = vsel %vm818, 0.0, -0.091050036
        %v2099 = vsel %vm819, 0.0, -0.091050036
        %v2100 = vsel %vm820, 0.0, -0.091050036
        %v2101 = vsel %vm821, 0.0, -0.091050036
        %v2102 = vsel %vm822, 0.0, -0.091050036
        %v2103 = vsel %vm823, 0.0, -0.091050036
        %v2104 = vsel %vm824, 0.0, -0.091050036
        %v2105 = vsel %vm825, 0.0, -0.091050036
        %v2106 = vsel %vm826, 0.0, -0.091050036
        %v2107 = vsel %vm827, 0.0, -0.091050036
        %v2108 = vsel %vm828, 0.0, -0.091050036
        %v2109 = vsel %vm829, 0.0, -0.091050036
        %v2110 = vsel %vm830, 0.0, -0.091050036
        %v2111 = vsel %vm831, 0.0, -0.091050036
        %v2112 = vsel %vm832, 0.0, -0.091050036
        %v2113 = vsel %vm833, 0.0, -0.091050036
        %v2114 = vsel %vm834, 0.0, -0.091050036
        %v2115 = vsel %vm835, 0.0, -0.091050036
        %v2116 = vsel %vm836, 0.0, -0.091050036
        %v2117 = vsel %vm837, 0.0, -0.091050036
        %v2118 = vsel %vm838, 0.0, -0.091050036
        %v2119 = vsel %vm839, 0.0, -0.091050036
        %v2120 = vsel %vm840, 0.0, -0.091050036
        %v2121 = vsel %vm841, 0.0, -0.091050036
        %v2122 = vsel %vm842, 0.0, -0.091050036
        %v2123 = vsel %vm843, 0.0, -0.091050036
        %v2124 = vsel %vm844, 0.0, -0.091050036
        %v2125 = vsel %vm845, 0.0, -0.091050036
        %v2126 = vsel %vm846, 0.0, -0.091050036
        %v2127 = vsel %vm847, 0.0, -0.091050036
        %v2128 = vsel %vm848, 0.0, -0.091050036
        %v2129 = vsel %vm849, 0.0, -0.091050036
        %v2130 = vsel %vm850, 0.0, -0.091050036
        %v2131 = vsel %vm851, 0.0, -0.091050036
        %v2132 = vsel %vm852, 0.0, -0.091050036
        %v2133 = vsel %vm853, 0.0, -0.091050036
        %v2134 = vsel %vm854, 0.0, -0.091050036
        %v2135 = vsel %vm855, 0.0, -0.091050036
        %v2136 = vsel %vm856, 0.0, -0.091050036
        %v2137 = vsel %vm857, 0.0, -0.091050036
        %v2138 = vsel %vm858, 0.0, -0.091050036
        %v2139 = vsel %vm859, 0.0, -0.091050036
        %v2140 = vsel %vm860, 0.0, -0.091050036
        %v2141 = vsel %vm861, 0.0, -0.091050036
        %v2142 = vsel %vm862, 0.0, -0.091050036
        %v2143 = vsel %vm863, 0.0, -0.091050036
        %v2144 = vsel %vm864, 0.0, -0.091050036
        %v2145 = vsel %vm865, 0.0, -0.091050036
        %v2146 = vsel %vm866, 0.0, -0.091050036
        %v2147 = vsel %vm867, 0.0, -0.091050036
        %v2148 = vsel %vm868, 0.0, -0.091050036
        %v2149 = vsel %vm869, 0.0, -0.091050036
        %v2150 = vsel %vm870, 0.0, -0.091050036
        %v2151 = vsel %vm871, 0.0, -0.091050036
        %v2152 = vsel %vm872, 0.0, -0.091050036
        %v2153 = vsel %vm873, 0.0, -0.091050036
        %v2154 = vsel %vm874, 0.0, -0.091050036
        %v2155 = vsel %vm875, 0.0, -0.091050036
        %v2156 = vsel %vm876, 0.0, -0.091050036
        %v2157 = vsel %vm877, 0.0, -0.091050036
        %v2158 = vsel %vm878, 0.0, -0.091050036
        %v2159 = vsel %vm879, 0.0, -0.091050036
        %v2160 = vsel %vm880, 0.0, -0.091050036
        %v2161 = vsel %vm881, 0.0, -0.091050036
        %v2162 = vsel %vm882, 0.0, -0.091050036
        %v2163 = vsel %vm883, 0.0, -0.091050036
        %v2164 = vsel %vm756, 0.1609302, 0.0795803
        %v2165 = vsel %vm757, 0.1609302, 0.0795803
        %v2166 = vsel %vm758, 0.1609302, 0.0795803
        %v2167 = vsel %vm759, 0.1609302, 0.0795803
        %v2168 = vsel %vm760, 0.1609302, 0.0795803
        %v2169 = vsel %vm761, 0.1609302, 0.0795803
        %v2170 = vsel %vm762, 0.1609302, 0.0795803
        %v2171 = vsel %vm763, 0.1609302, 0.0795803
        %v2172 = vsel %vm764, 0.1609302, 0.0795803
        %v2173 = vsel %vm765, 0.1609302, 0.0795803
        %v2174 = vsel %vm766, 0.1609302, 0.0795803
        %v2175 = vsel %vm767, 0.1609302, 0.0795803
        %v2176 = vsel %vm768, 0.1609302, 0.0795803
        %v2177 = vsel %vm769, 0.1609302, 0.0795803
        %v2178 = vsel %vm770, 0.1609302, 0.0795803
        %v2179 = vsel %vm771, 0.1609302, 0.0795803
        %v2180 = vsel %vm772, 0.1609302, 0.0795803
        %v2181 = vsel %vm773, 0.1609302, 0.0795803
        %v2182 = vsel %vm774, 0.1609302, 0.0795803
        %v2183 = vsel %vm775, 0.1609302, 0.0795803
        %v2184 = vsel %vm776, 0.1609302, 0.0795803
        %v2185 = vsel %vm777, 0.1609302, 0.0795803
        %v2186 = vsel %vm778, 0.1609302, 0.0795803
        %v2187 = vsel %vm779, 0.1609302, 0.0795803
        %v2188 = vsel %vm780, 0.1609302, 0.0795803
        %v2189 = vsel %vm781, 0.1609302, 0.0795803
        %v2190 = vsel %vm782, 0.1609302, 0.0795803
        %v2191 = vsel %vm783, 0.1609302, 0.0795803
        %v2192 = vsel %vm784, 0.1609302, 0.0795803
        %v2193 = vsel %vm785, 0.1609302, 0.0795803
        %v2194 = vsel %vm786, 0.1609302, 0.0795803
        %v2195 = vsel %vm787, 0.1609302, 0.0795803
        %v2196 = vsel %vm788, 0.1609302, 0.0795803
        %v2197 = vsel %vm789, 0.1609302, 0.0795803
        %v2198 = vsel %vm790, 0.1609302, 0.0795803
        %v2199 = vsel %vm791, 0.1609302, 0.0795803
        %v2200 = vsel %vm792, 0.1609302, 0.0795803
        %v2201 = vsel %vm793, 0.1609302, 0.0795803
        %v2202 = vsel %vm794, 0.1609302, 0.0795803
        %v2203 = vsel %vm795, 0.1609302, 0.0795803
        %v2204 = vsel %vm796, 0.1609302, 0.0795803
        %v2205 = vsel %vm797, 0.1609302, 0.0795803
        %v2206 = vsel %vm798, 0.1609302, 0.0795803
        %v2207 = vsel %vm799, 0.1609302, 0.0795803
        %v2208 = vsel %vm800, 0.1609302, 0.0795803
        %v2209 = vsel %vm801, 0.1609302, 0.0795803
        %v2210 = vsel %vm802, 0.1609302, 0.0795803
        %v2211 = vsel %vm803, 0.1609302, 0.0795803
        %v2212 = vsel %vm804, 0.1609302, 0.0795803
        %v2213 = vsel %vm805, 0.1609302, 0.0795803
        %v2214 = vsel %vm806, 0.1609302, 0.0795803
        %v2215 = vsel %vm807, 0.1609302, 0.0795803
        %v2216 = vsel %vm808, 0.1609302, 0.0795803
        %v2217 = vsel %vm809, 0.1609302, 0.0795803
        %v2218 = vsel %vm810, 0.1609302, 0.0795803
        %v2219 = vsel %vm811, 0.1609302, 0.0795803
        %v2220 = vsel %vm812, 0.1609302, 0.0795803
        %v2221 = vsel %vm813, 0.1609302, 0.0795803
        %v2222 = vsel %vm814, 0.1609302, 0.0795803
        %v2223 = vsel %vm815, 0.1609302, 0.0795803
        %v2224 = vsel %vm816, 0.1609302, 0.0795803
        %v2225 = vsel %vm817, 0.1609302, 0.0795803
        %v2226 = vsel %vm818, 0.1609302, 0.0795803
        %v2227 = vsel %vm819, 0.1609302, 0.0795803
        %v2228 = vsel %vm820, 0.1609302, 0.0795803
        %v2229 = vsel %vm821, 0.1609302, 0.0795803
        %v2230 = vsel %vm822, 0.1609302, 0.0795803
        %v2231 = vsel %vm823, 0.1609302, 0.0795803
        %v2232 = vsel %vm824, 0.1609302, 0.0795803
        %v2233 = vsel %vm825, 0.1609302, 0.0795803
        %v2234 = vsel %vm826, 0.1609302, 0.0795803
        %v2235 = vsel %vm827, 0.1609302, 0.0795803
        %v2236 = vsel %vm828, 0.1609302, 0.0795803
        %v2237 = vsel %vm829, 0.1609302, 0.0795803
        %v2238 = vsel %vm830, 0.1609302, 0.0795803
        %v2239 = vsel %vm831, 0.1609302, 0.0795803
        %v2240 = vsel %vm832, 0.1609302, 0.0795803
        %v2241 = vsel %vm833, 0.1609302, 0.0795803
        %v2242 = vsel %vm834, 0.1609302, 0.0795803
        %v2243 = vsel %vm835, 0.1609302, 0.0795803
        %v2244 = vsel %vm836, 0.1609302, 0.0795803
        %v2245 = vsel %vm837, 0.1609302, 0.0795803
        %v2246 = vsel %vm838, 0.1609302, 0.0795803
        %v2247 = vsel %vm839, 0.1609302, 0.0795803
        %v2248 = vsel %vm840, 0.1609302, 0.0795803
        %v2249 = vsel %vm841, 0.1609302, 0.0795803
        %v2250 = vsel %vm842, 0.1609302, 0.0795803
        %v2251 = vsel %vm843, 0.1609302, 0.0795803
        %v2252 = vsel %vm844, 0.1609302, 0.0795803
        %v2253 = vsel %vm845, 0.1609302, 0.0795803
        %v2254 = vsel %vm846, 0.1609302, 0.0795803
        %v2255 = vsel %vm847, 0.1609302, 0.0795803
        %v2256 = vsel %vm848, 0.1609302, 0.0795803
        %v2257 = vsel %vm849, 0.1609302, 0.0795803
        %v2258 = vsel %vm850, 0.1609302, 0.0795803
        %v2259 = vsel %vm851, 0.1609302, 0.0795803
        %v2260 = vsel %vm852, 0.1609302, 0.0795803
        %v2261 = vsel %vm853, 0.1609302, 0.0795803
        %v2262 = vsel %vm854, 0.1609302, 0.0795803
        %v2263 = vsel %vm855, 0.1609302, 0.0795803
        %v2264 = vsel %vm856, 0.1609302, 0.0795803
        %v2265 = vsel %vm857, 0.1609302, 0.0795803
        %v2266 = vsel %vm858, 0.1609302, 0.0795803
        %v2267 = vsel %vm859, 0.1609302, 0.0795803
        %v2268 = vsel %vm860, 0.1609302, 0.0795803
        %v2269 = vsel %vm861, 0.1609302, 0.0795803
        %v2270 = vsel %vm862, 0.1609302, 0.0795803
        %v2271 = vsel %vm863, 0.1609302, 0.0795803
        %v2272 = vsel %vm864, 0.1609302, 0.0795803
        %v2273 = vsel %vm865, 0.1609302, 0.0795803
        %v2274 = vsel %vm866, 0.1609302, 0.0795803
        %v2275 = vsel %vm867, 0.1609302, 0.0795803
        %v2276 = vsel %vm868, 0.1609302, 0.0795803
        %v2277 = vsel %vm869, 0.1609302, 0.0795803
        %v2278 = vsel %vm870, 0.1609302, 0.0795803
        %v2279 = vsel %vm871, 0.1609302, 0.0795803
        %v2280 = vsel %vm872, 0.1609302, 0.0795803
        %v2281 = vsel %vm873, 0.1609302, 0.0795803
        %v2282 = vsel %vm874, 0.1609302, 0.0795803
        %v2283 = vsel %vm875, 0.1609302, 0.0795803
        %v2284 = vsel %vm876, 0.1609302, 0.0795803
        %v2285 = vsel %vm877, 0.1609302, 0.0795803
        %v2286 = vsel %vm878, 0.1609302, 0.0795803
        %v2287 = vsel %vm879, 0.1609302, 0.0795803
        %v2288 = vsel %vm880, 0.1609302, 0.0795803
        %v2289 = vsel %vm881, 0.1609302, 0.0795803
        %v2290 = vsel %vm882, 0.1609302, 0.0795803
        %v2291 = vsel %vm883, 0.1609302, 0.0795803
        %v2292 = vsel %vm756, 0.33791524, 0.2461123
        %v2293 = vsel %vm757, 0.33791524, 0.2461123
        %v2294 = vsel %vm758, 0.33791524, 0.2461123
        %v2295 = vsel %vm759, 0.33791524, 0.2461123
        %v2296 = vsel %vm760, 0.33791524, 0.2461123
        %v2297 = vsel %vm761, 0.33791524, 0.2461123
        %v2298 = vsel %vm762, 0.33791524, 0.2461123
        %v2299 = vsel %vm763, 0.33791524, 0.2461123
        %v2300 = vsel %vm764, 0.33791524, 0.2461123
        %v2301 = vsel %vm765, 0.33791524, 0.2461123
        %v2302 = vsel %vm766, 0.33791524, 0.2461123
        %v2303 = vsel %vm767, 0.33791524, 0.2461123
        %v2304 = vsel %vm768, 0.33791524, 0.2461123
        %v2305 = vsel %vm769, 0.33791524, 0.2461123
        %v2306 = vsel %vm770, 0.33791524, 0.2461123
        %v2307 = vsel %vm771, 0.33791524, 0.2461123
        %v2308 = vsel %vm772, 0.33791524, 0.2461123
        %v2309 = vsel %vm773, 0.33791524, 0.2461123
        %v2310 = vsel %vm774, 0.33791524, 0.2461123
        %v2311 = vsel %vm775, 0.33791524, 0.2461123
        %v2312 = vsel %vm776, 0.33791524, 0.2461123
        %v2313 = vsel %vm777, 0.33791524, 0.2461123
        %v2314 = vsel %vm778, 0.33791524, 0.2461123
        %v2315 = vsel %vm779, 0.33791524, 0.2461123
        %v2316 = vsel %vm780, 0.33791524, 0.2461123
        %v2317 = vsel %vm781, 0.33791524, 0.2461123
        %v2318 = vsel %vm782, 0.33791524, 0.2461123
        %v2319 = vsel %vm783, 0.33791524, 0.2461123
        %v2320 = vsel %vm784, 0.33791524, 0.2461123
        %v2321 = vsel %vm785, 0.33791524, 0.2461123
        %v2322 = vsel %vm786, 0.33791524, 0.2461123
        %v2323 = vsel %vm787, 0.33791524, 0.2461123
        %v2324 = vsel %vm788, 0.33791524, 0.2461123
        %v2325 = vsel %vm789, 0.33791524, 0.2461123
        %v2326 = vsel %vm790, 0.33791524, 0.2461123
        %v2327 = vsel %vm791, 0.33791524, 0.2461123
        %v2328 = vsel %vm792, 0.33791524, 0.2461123
        %v2329 = vsel %vm793, 0.33791524, 0.2461123
        %v2330 = vsel %vm794, 0.33791524, 0.2461123
        %v2331 = vsel %vm795, 0.33791524, 0.2461123
        %v2332 = vsel %vm796, 0.33791524, 0.2461123
        %v2333 = vsel %vm797, 0.33791524, 0.2461123
        %v2334 = vsel %vm798, 0.33791524, 0.2461123
        %v2335 = vsel %vm799, 0.33791524, 0.2461123
        %v2336 = vsel %vm800, 0.33791524, 0.2461123
        %v2337 = vsel %vm801, 0.33791524, 0.2461123
        %v2338 = vsel %vm802, 0.33791524, 0.2461123
        %v2339 = vsel %vm803, 0.33791524, 0.2461123
        %v2340 = vsel %vm804, 0.33791524, 0.2461123
        %v2341 = vsel %vm805, 0.33791524, 0.2461123
        %v2342 = vsel %vm806, 0.33791524, 0.2461123
        %v2343 = vsel %vm807, 0.33791524, 0.2461123
        %v2344 = vsel %vm808, 0.33791524, 0.2461123
        %v2345 = vsel %vm809, 0.33791524, 0.2461123
        %v2346 = vsel %vm810, 0.33791524, 0.2461123
        %v2347 = vsel %vm811, 0.33791524, 0.2461123
        %v2348 = vsel %vm812, 0.33791524, 0.2461123
        %v2349 = vsel %vm813, 0.33791524, 0.2461123
        %v2350 = vsel %vm814, 0.33791524, 0.2461123
        %v2351 = vsel %vm815, 0.33791524, 0.2461123
        %v2352 = vsel %vm816, 0.33791524, 0.2461123
        %v2353 = vsel %vm817, 0.33791524, 0.2461123
        %v2354 = vsel %vm818, 0.33791524, 0.2461123
        %v2355 = vsel %vm819, 0.33791524, 0.2461123
        %v2356 = vsel %vm820, 0.33791524, 0.2461123
        %v2357 = vsel %vm821, 0.33791524, 0.2461123
        %v2358 = vsel %vm822, 0.33791524, 0.2461123
        %v2359 = vsel %vm823, 0.33791524, 0.2461123
        %v2360 = vsel %vm824, 0.33791524, 0.2461123
        %v2361 = vsel %vm825, 0.33791524, 0.2461123
        %v2362 = vsel %vm826, 0.33791524, 0.2461123
        %v2363 = vsel %vm827, 0.33791524, 0.2461123
        %v2364 = vsel %vm828, 0.33791524, 0.2461123
        %v2365 = vsel %vm829, 0.33791524, 0.2461123
        %v2366 = vsel %vm830, 0.33791524, 0.2461123
        %v2367 = vsel %vm831, 0.33791524, 0.2461123
        %v2368 = vsel %vm832, 0.33791524, 0.2461123
        %v2369 = vsel %vm833, 0.33791524, 0.2461123
        %v2370 = vsel %vm834, 0.33791524, 0.2461123
        %v2371 = vsel %vm835, 0.33791524, 0.2461123
        %v2372 = vsel %vm836, 0.33791524, 0.2461123
        %v2373 = vsel %vm837, 0.33791524, 0.2461123
        %v2374 = vsel %vm838, 0.33791524, 0.2461123
        %v2375 = vsel %vm839, 0.33791524, 0.2461123
        %v2376 = vsel %vm840, 0.33791524, 0.2461123
        %v2377 = vsel %vm841, 0.33791524, 0.2461123
        %v2378 = vsel %vm842, 0.33791524, 0.2461123
        %v2379 = vsel %vm843, 0.33791524, 0.2461123
        %v2380 = vsel %vm844, 0.33791524, 0.2461123
        %v2381 = vsel %vm845, 0.33791524, 0.2461123
        %v2382 = vsel %vm846, 0.33791524, 0.2461123
        %v2383 = vsel %vm847, 0.33791524, 0.2461123
        %v2384 = vsel %vm848, 0.33791524, 0.2461123
        %v2385 = vsel %vm849, 0.33791524, 0.2461123
        %v2386 = vsel %vm850, 0.33791524, 0.2461123
        %v2387 = vsel %vm851, 0.33791524, 0.2461123
        %v2388 = vsel %vm852, 0.33791524, 0.2461123
        %v2389 = vsel %vm853, 0.33791524, 0.2461123
        %v2390 = vsel %vm854, 0.33791524, 0.2461123
        %v2391 = vsel %vm855, 0.33791524, 0.2461123
        %v2392 = vsel %vm856, 0.33791524, 0.2461123
        %v2393 = vsel %vm857, 0.33791524, 0.2461123
        %v2394 = vsel %vm858, 0.33791524, 0.2461123
        %v2395 = vsel %vm859, 0.33791524, 0.2461123
        %v2396 = vsel %vm860, 0.33791524, 0.2461123
        %v2397 = vsel %vm861, 0.33791524, 0.2461123
        %v2398 = vsel %vm862, 0.33791524, 0.2461123
        %v2399 = vsel %vm863, 0.33791524, 0.2461123
        %v2400 = vsel %vm864, 0.33791524, 0.2461123
        %v2401 = vsel %vm865, 0.33791524, 0.2461123
        %v2402 = vsel %vm866, 0.33791524, 0.2461123
        %v2403 = vsel %vm867, 0.33791524, 0.2461123
        %v2404 = vsel %vm868, 0.33791524, 0.2461123
        %v2405 = vsel %vm869, 0.33791524, 0.2461123
        %v2406 = vsel %vm870, 0.33791524, 0.2461123
        %v2407 = vsel %vm871, 0.33791524, 0.2461123
        %v2408 = vsel %vm872, 0.33791524, 0.2461123
        %v2409 = vsel %vm873, 0.33791524, 0.2461123
        %v2410 = vsel %vm874, 0.33791524, 0.2461123
        %v2411 = vsel %vm875, 0.33791524, 0.2461123
        %v2412 = vsel %vm876, 0.33791524, 0.2461123
        %v2413 = vsel %vm877, 0.33791524, 0.2461123
        %v2414 = vsel %vm878, 0.33791524, 0.2461123
        %v2415 = vsel %vm879, 0.33791524, 0.2461123
        %v2416 = vsel %vm880, 0.33791524, 0.2461123
        %v2417 = vsel %vm881, 0.33791524, 0.2461123
        %v2418 = vsel %vm882, 0.33791524, 0.2461123
        %v2419 = vsel %vm883, 0.33791524, 0.2461123
        %v2420 = vsel %vm756, 0.562617, 0.44070983
        %v2421 = vsel %vm757, 0.562617, 0.44070983
        %v2422 = vsel %vm758, 0.562617, 0.44070983
        %v2423 = vsel %vm759, 0.562617, 0.44070983
        %v2424 = vsel %vm760, 0.562617, 0.44070983
        %v2425 = vsel %vm761, 0.562617, 0.44070983
        %v2426 = vsel %vm762, 0.562617, 0.44070983
        %v2427 = vsel %vm763, 0.562617, 0.44070983
        %v2428 = vsel %vm764, 0.562617, 0.44070983
        %v2429 = vsel %vm765, 0.562617, 0.44070983
        %v2430 = vsel %vm766, 0.562617, 0.44070983
        %v2431 = vsel %vm767, 0.562617, 0.44070983
        %v2432 = vsel %vm768, 0.562617, 0.44070983
        %v2433 = vsel %vm769, 0.562617, 0.44070983
        %v2434 = vsel %vm770, 0.562617, 0.44070983
        %v2435 = vsel %vm771, 0.562617, 0.44070983
        %v2436 = vsel %vm772, 0.562617, 0.44070983
        %v2437 = vsel %vm773, 0.562617, 0.44070983
        %v2438 = vsel %vm774, 0.562617, 0.44070983
        %v2439 = vsel %vm775, 0.562617, 0.44070983
        %v2440 = vsel %vm776, 0.562617, 0.44070983
        %v2441 = vsel %vm777, 0.562617, 0.44070983
        %v2442 = vsel %vm778, 0.562617, 0.44070983
        %v2443 = vsel %vm779, 0.562617, 0.44070983
        %v2444 = vsel %vm780, 0.562617, 0.44070983
        %v2445 = vsel %vm781, 0.562617, 0.44070983
        %v2446 = vsel %vm782, 0.562617, 0.44070983
        %v2447 = vsel %vm783, 0.562617, 0.44070983
        %v2448 = vsel %vm784, 0.562617, 0.44070983
        %v2449 = vsel %vm785, 0.562617, 0.44070983
        %v2450 = vsel %vm786, 0.562617, 0.44070983
        %v2451 = vsel %vm787, 0.562617, 0.44070983
        %v2452 = vsel %vm788, 0.562617, 0.44070983
        %v2453 = vsel %vm789, 0.562617, 0.44070983
        %v2454 = vsel %vm790, 0.562617, 0.44070983
        %v2455 = vsel %vm791, 0.562617, 0.44070983
        %v2456 = vsel %vm792, 0.562617, 0.44070983
        %v2457 = vsel %vm793, 0.562617, 0.44070983
        %v2458 = vsel %vm794, 0.562617, 0.44070983
        %v2459 = vsel %vm795, 0.562617, 0.44070983
        %v2460 = vsel %vm796, 0.562617, 0.44070983
        %v2461 = vsel %vm797, 0.562617, 0.44070983
        %v2462 = vsel %vm798, 0.562617, 0.44070983
        %v2463 = vsel %vm799, 0.562617, 0.44070983
        %v2464 = vsel %vm800, 0.562617, 0.44070983
        %v2465 = vsel %vm801, 0.562617, 0.44070983
        %v2466 = vsel %vm802, 0.562617, 0.44070983
        %v2467 = vsel %vm803, 0.562617, 0.44070983
        %v2468 = vsel %vm804, 0.562617, 0.44070983
        %v2469 = vsel %vm805, 0.562617, 0.44070983
        %v2470 = vsel %vm806, 0.562617, 0.44070983
        %v2471 = vsel %vm807, 0.562617, 0.44070983
        %v2472 = vsel %vm808, 0.562617, 0.44070983
        %v2473 = vsel %vm809, 0.562617, 0.44070983
        %v2474 = vsel %vm810, 0.562617, 0.44070983
        %v2475 = vsel %vm811, 0.562617, 0.44070983
        %v2476 = vsel %vm812, 0.562617, 0.44070983
        %v2477 = vsel %vm813, 0.562617, 0.44070983
        %v2478 = vsel %vm814, 0.562617, 0.44070983
        %v2479 = vsel %vm815, 0.562617, 0.44070983
        %v2480 = vsel %vm816, 0.562617, 0.44070983
        %v2481 = vsel %vm817, 0.562617, 0.44070983
        %v2482 = vsel %vm818, 0.562617, 0.44070983
        %v2483 = vsel %vm819, 0.562617, 0.44070983
        %v2484 = vsel %vm820, 0.562617, 0.44070983
        %v2485 = vsel %vm821, 0.562617, 0.44070983
        %v2486 = vsel %vm822, 0.562617, 0.44070983
        %v2487 = vsel %vm823, 0.562617, 0.44070983
        %v2488 = vsel %vm824, 0.562617, 0.44070983
        %v2489 = vsel %vm825, 0.562617, 0.44070983
        %v2490 = vsel %vm826, 0.562617, 0.44070983
        %v2491 = vsel %vm827, 0.562617, 0.44070983
        %v2492 = vsel %vm828, 0.562617, 0.44070983
        %v2493 = vsel %vm829, 0.562617, 0.44070983
        %v2494 = vsel %vm830, 0.562617, 0.44070983
        %v2495 = vsel %vm831, 0.562617, 0.44070983
        %v2496 = vsel %vm832, 0.562617, 0.44070983
        %v2497 = vsel %vm833, 0.562617, 0.44070983
        %v2498 = vsel %vm834, 0.562617, 0.44070983
        %v2499 = vsel %vm835, 0.562617, 0.44070983
        %v2500 = vsel %vm836, 0.562617, 0.44070983
        %v2501 = vsel %vm837, 0.562617, 0.44070983
        %v2502 = vsel %vm838, 0.562617, 0.44070983
        %v2503 = vsel %vm839, 0.562617, 0.44070983
        %v2504 = vsel %vm840, 0.562617, 0.44070983
        %v2505 = vsel %vm841, 0.562617, 0.44070983
        %v2506 = vsel %vm842, 0.562617, 0.44070983
        %v2507 = vsel %vm843, 0.562617, 0.44070983
        %v2508 = vsel %vm844, 0.562617, 0.44070983
        %v2509 = vsel %vm845, 0.562617, 0.44070983
        %v2510 = vsel %vm846, 0.562617, 0.44070983
        %v2511 = vsel %vm847, 0.562617, 0.44070983
        %v2512 = vsel %vm848, 0.562617, 0.44070983
        %v2513 = vsel %vm849, 0.562617, 0.44070983
        %v2514 = vsel %vm850, 0.562617, 0.44070983
        %v2515 = vsel %vm851, 0.562617, 0.44070983
        %v2516 = vsel %vm852, 0.562617, 0.44070983
        %v2517 = vsel %vm853, 0.562617, 0.44070983
        %v2518 = vsel %vm854, 0.562617, 0.44070983
        %v2519 = vsel %vm855, 0.562617, 0.44070983
        %v2520 = vsel %vm856, 0.562617, 0.44070983
        %v2521 = vsel %vm857, 0.562617, 0.44070983
        %v2522 = vsel %vm858, 0.562617, 0.44070983
        %v2523 = vsel %vm859, 0.562617, 0.44070983
        %v2524 = vsel %vm860, 0.562617, 0.44070983
        %v2525 = vsel %vm861, 0.562617, 0.44070983
        %v2526 = vsel %vm862, 0.562617, 0.44070983
        %v2527 = vsel %vm863, 0.562617, 0.44070983
        %v2528 = vsel %vm864, 0.562617, 0.44070983
        %v2529 = vsel %vm865, 0.562617, 0.44070983
        %v2530 = vsel %vm866, 0.562617, 0.44070983
        %v2531 = vsel %vm867, 0.562617, 0.44070983
        %v2532 = vsel %vm868, 0.562617, 0.44070983
        %v2533 = vsel %vm869, 0.562617, 0.44070983
        %v2534 = vsel %vm870, 0.562617, 0.44070983
        %v2535 = vsel %vm871, 0.562617, 0.44070983
        %v2536 = vsel %vm872, 0.562617, 0.44070983
        %v2537 = vsel %vm873, 0.562617, 0.44070983
        %v2538 = vsel %vm874, 0.562617, 0.44070983
        %v2539 = vsel %vm875, 0.562617, 0.44070983
        %v2540 = vsel %vm876, 0.562617, 0.44070983
        %v2541 = vsel %vm877, 0.562617, 0.44070983
        %v2542 = vsel %vm878, 0.562617, 0.44070983
        %v2543 = vsel %vm879, 0.562617, 0.44070983
        %v2544 = vsel %vm880, 0.562617, 0.44070983
        %v2545 = vsel %vm881, 0.562617, 0.44070983
        %v2546 = vsel %vm882, 0.562617, 0.44070983
        %v2547 = vsel %vm883, 0.562617, 0.44070983
        %v2548 = vsel %vm756, 1.0, 0.72295684
        %v2549 = vsel %vm757, 1.0, 0.72295684
        %v2550 = vsel %vm758, 1.0, 0.72295684
        %v2551 = vsel %vm759, 1.0, 0.72295684
        %v2552 = vsel %vm760, 1.0, 0.72295684
        %v2553 = vsel %vm761, 1.0, 0.72295684
        %v2554 = vsel %vm762, 1.0, 0.72295684
        %v2555 = vsel %vm763, 1.0, 0.72295684
        %v2556 = vsel %vm764, 1.0, 0.72295684
        %v2557 = vsel %vm765, 1.0, 0.72295684
        %v2558 = vsel %vm766, 1.0, 0.72295684
        %v2559 = vsel %vm767, 1.0, 0.72295684
        %v2560 = vsel %vm768, 1.0, 0.72295684
        %v2561 = vsel %vm769, 1.0, 0.72295684
        %v2562 = vsel %vm770, 1.0, 0.72295684
        %v2563 = vsel %vm771, 1.0, 0.72295684
        %v2564 = vsel %vm772, 1.0, 0.72295684
        %v2565 = vsel %vm773, 1.0, 0.72295684
        %v2566 = vsel %vm774, 1.0, 0.72295684
        %v2567 = vsel %vm775, 1.0, 0.72295684
        %v2568 = vsel %vm776, 1.0, 0.72295684
        %v2569 = vsel %vm777, 1.0, 0.72295684
        %v2570 = vsel %vm778, 1.0, 0.72295684
        %v2571 = vsel %vm779, 1.0, 0.72295684
        %v2572 = vsel %vm780, 1.0, 0.72295684
        %v2573 = vsel %vm781, 1.0, 0.72295684
        %v2574 = vsel %vm782, 1.0, 0.72295684
        %v2575 = vsel %vm783, 1.0, 0.72295684
        %v2576 = vsel %vm784, 1.0, 0.72295684
        %v2577 = vsel %vm785, 1.0, 0.72295684
        %v2578 = vsel %vm786, 1.0, 0.72295684
        %v2579 = vsel %vm787, 1.0, 0.72295684
        %v2580 = vsel %vm788, 1.0, 0.72295684
        %v2581 = vsel %vm789, 1.0, 0.72295684
        %v2582 = vsel %vm790, 1.0, 0.72295684
        %v2583 = vsel %vm791, 1.0, 0.72295684
        %v2584 = vsel %vm792, 1.0, 0.72295684
        %v2585 = vsel %vm793, 1.0, 0.72295684
        %v2586 = vsel %vm794, 1.0, 0.72295684
        %v2587 = vsel %vm795, 1.0, 0.72295684
        %v2588 = vsel %vm796, 1.0, 0.72295684
        %v2589 = vsel %vm797, 1.0, 0.72295684
        %v2590 = vsel %vm798, 1.0, 0.72295684
        %v2591 = vsel %vm799, 1.0, 0.72295684
        %v2592 = vsel %vm800, 1.0, 0.72295684
        %v2593 = vsel %vm801, 1.0, 0.72295684
        %v2594 = vsel %vm802, 1.0, 0.72295684
        %v2595 = vsel %vm803, 1.0, 0.72295684
        %v2596 = vsel %vm804, 1.0, 0.72295684
        %v2597 = vsel %vm805, 1.0, 0.72295684
        %v2598 = vsel %vm806, 1.0, 0.72295684
        %v2599 = vsel %vm807, 1.0, 0.72295684
        %v2600 = vsel %vm808, 1.0, 0.72295684
        %v2601 = vsel %vm809, 1.0, 0.72295684
        %v2602 = vsel %vm810, 1.0, 0.72295684
        %v2603 = vsel %vm811, 1.0, 0.72295684
        %v2604 = vsel %vm812, 1.0, 0.72295684
        %v2605 = vsel %vm813, 1.0, 0.72295684
        %v2606 = vsel %vm814, 1.0, 0.72295684
        %v2607 = vsel %vm815, 1.0, 0.72295684
        %v2608 = vsel %vm816, 1.0, 0.72295684
        %v2609 = vsel %vm817, 1.0, 0.72295684
        %v2610 = vsel %vm818, 1.0, 0.72295684
        %v2611 = vsel %vm819, 1.0, 0.72295684
        %v2612 = vsel %vm820, 1.0, 0.72295684
        %v2613 = vsel %vm821, 1.0, 0.72295684
        %v2614 = vsel %vm822, 1.0, 0.72295684
        %v2615 = vsel %vm823, 1.0, 0.72295684
        %v2616 = vsel %vm824, 1.0, 0.72295684
        %v2617 = vsel %vm825, 1.0, 0.72295684
        %v2618 = vsel %vm826, 1.0, 0.72295684
        %v2619 = vsel %vm827, 1.0, 0.72295684
        %v2620 = vsel %vm828, 1.0, 0.72295684
        %v2621 = vsel %vm829, 1.0, 0.72295684
        %v2622 = vsel %vm830, 1.0, 0.72295684
        %v2623 = vsel %vm831, 1.0, 0.72295684
        %v2624 = vsel %vm832, 1.0, 0.72295684
        %v2625 = vsel %vm833, 1.0, 0.72295684
        %v2626 = vsel %vm834, 1.0, 0.72295684
        %v2627 = vsel %vm835, 1.0, 0.72295684
        %v2628 = vsel %vm836, 1.0, 0.72295684
        %v2629 = vsel %vm837, 1.0, 0.72295684
        %v2630 = vsel %vm838, 1.0, 0.72295684
        %v2631 = vsel %vm839, 1.0, 0.72295684
        %v2632 = vsel %vm840, 1.0, 0.72295684
        %v2633 = vsel %vm841, 1.0, 0.72295684
        %v2634 = vsel %vm842, 1.0, 0.72295684
        %v2635 = vsel %vm843, 1.0, 0.72295684
        %v2636 = vsel %vm844, 1.0, 0.72295684
        %v2637 = vsel %vm845, 1.0, 0.72295684
        %v2638 = vsel %vm846, 1.0, 0.72295684
        %v2639 = vsel %vm847, 1.0, 0.72295684
        %v2640 = vsel %vm848, 1.0, 0.72295684
        %v2641 = vsel %vm849, 1.0, 0.72295684
        %v2642 = vsel %vm850, 1.0, 0.72295684
        %v2643 = vsel %vm851, 1.0, 0.72295684
        %v2644 = vsel %vm852, 1.0, 0.72295684
        %v2645 = vsel %vm853, 1.0, 0.72295684
        %v2646 = vsel %vm854, 1.0, 0.72295684
        %v2647 = vsel %vm855, 1.0, 0.72295684
        %v2648 = vsel %vm856, 1.0, 0.72295684
        %v2649 = vsel %vm857, 1.0, 0.72295684
        %v2650 = vsel %vm858, 1.0, 0.72295684
        %v2651 = vsel %vm859, 1.0, 0.72295684
        %v2652 = vsel %vm860, 1.0, 0.72295684
        %v2653 = vsel %vm861, 1.0, 0.72295684
        %v2654 = vsel %vm862, 1.0, 0.72295684
        %v2655 = vsel %vm863, 1.0, 0.72295684
        %v2656 = vsel %vm864, 1.0, 0.72295684
        %v2657 = vsel %vm865, 1.0, 0.72295684
        %v2658 = vsel %vm866, 1.0, 0.72295684
        %v2659 = vsel %vm867, 1.0, 0.72295684
        %v2660 = vsel %vm868, 1.0, 0.72295684
        %v2661 = vsel %vm869, 1.0, 0.72295684
        %v2662 = vsel %vm870, 1.0, 0.72295684
        %v2663 = vsel %vm871, 1.0, 0.72295684
        %v2664 = vsel %vm872, 1.0, 0.72295684
        %v2665 = vsel %vm873, 1.0, 0.72295684
        %v2666 = vsel %vm874, 1.0, 0.72295684
        %v2667 = vsel %vm875, 1.0, 0.72295684
        %v2668 = vsel %vm876, 1.0, 0.72295684
        %v2669 = vsel %vm877, 1.0, 0.72295684
        %v2670 = vsel %vm878, 1.0, 0.72295684
        %v2671 = vsel %vm879, 1.0, 0.72295684
        %v2672 = vsel %vm880, 1.0, 0.72295684
        %v2673 = vsel %vm881, 1.0, 0.72295684
        %v2674 = vsel %vm882, 1.0, 0.72295684
        %v2675 = vsel %vm883, 1.0, 0.72295684
        %v2676 = vsel %vm1012, %v1780, %v1652
        %v2677 = vsel %vm1013, %v1781, %v1653
        %v2678 = vsel %vm1014, %v1782, %v1654
        %v2679 = vsel %vm1015, %v1783, %v1655
        %v2680 = vsel %vm1016, %v1784, %v1656
        %v2681 = vsel %vm1017, %v1785, %v1657
        %v2682 = vsel %vm1018, %v1786, %v1658
        %v2683 = vsel %vm1019, %v1787, %v1659
        %v2684 = vsel %vm1020, %v1788, %v1660
        %v2685 = vsel %vm1021, %v1789, %v1661
        %v2686 = vsel %vm1022, %v1790, %v1662
        %v2687 = vsel %vm1023, %v1791, %v1663
        %v2688 = vsel %vm1024, %v1792, %v1664
        %v2689 = vsel %vm1025, %v1793, %v1665
        %v2690 = vsel %vm1026, %v1794, %v1666
        %v2691 = vsel %vm1027, %v1795, %v1667
        %v2692 = vsel %vm1028, %v1796, %v1668
        %v2693 = vsel %vm1029, %v1797, %v1669
        %v2694 = vsel %vm1030, %v1798, %v1670
        %v2695 = vsel %vm1031, %v1799, %v1671
        %v2696 = vsel %vm1032, %v1800, %v1672
        %v2697 = vsel %vm1033, %v1801, %v1673
        %v2698 = vsel %vm1034, %v1802, %v1674
        %v2699 = vsel %vm1035, %v1803, %v1675
        %v2700 = vsel %vm1036, %v1804, %v1676
        %v2701 = vsel %vm1037, %v1805, %v1677
        %v2702 = vsel %vm1038, %v1806, %v1678
        %v2703 = vsel %vm1039, %v1807, %v1679
        %v2704 = vsel %vm1040, %v1808, %v1680
        %v2705 = vsel %vm1041, %v1809, %v1681
        %v2706 = vsel %vm1042, %v1810, %v1682
        %v2707 = vsel %vm1043, %v1811, %v1683
        %v2708 = vsel %vm1044, %v1812, %v1684
        %v2709 = vsel %vm1045, %v1813, %v1685
        %v2710 = vsel %vm1046, %v1814, %v1686
        %v2711 = vsel %vm1047, %v1815, %v1687
        %v2712 = vsel %vm1048, %v1816, %v1688
        %v2713 = vsel %vm1049, %v1817, %v1689
        %v2714 = vsel %vm1050, %v1818, %v1690
        %v2715 = vsel %vm1051, %v1819, %v1691
        %v2716 = vsel %vm1052, %v1820, %v1692
        %v2717 = vsel %vm1053, %v1821, %v1693
        %v2718 = vsel %vm1054, %v1822, %v1694
        %v2719 = vsel %vm1055, %v1823, %v1695
        %v2720 = vsel %vm1056, %v1824, %v1696
        %v2721 = vsel %vm1057, %v1825, %v1697
        %v2722 = vsel %vm1058, %v1826, %v1698
        %v2723 = vsel %vm1059, %v1827, %v1699
        %v2724 = vsel %vm1060, %v1828, %v1700
        %v2725 = vsel %vm1061, %v1829, %v1701
        %v2726 = vsel %vm1062, %v1830, %v1702
        %v2727 = vsel %vm1063, %v1831, %v1703
        %v2728 = vsel %vm1064, %v1832, %v1704
        %v2729 = vsel %vm1065, %v1833, %v1705
        %v2730 = vsel %vm1066, %v1834, %v1706
        %v2731 = vsel %vm1067, %v1835, %v1707
        %v2732 = vsel %vm1068, %v1836, %v1708
        %v2733 = vsel %vm1069, %v1837, %v1709
        %v2734 = vsel %vm1070, %v1838, %v1710
        %v2735 = vsel %vm1071, %v1839, %v1711
        %v2736 = vsel %vm1072, %v1840, %v1712
        %v2737 = vsel %vm1073, %v1841, %v1713
        %v2738 = vsel %vm1074, %v1842, %v1714
        %v2739 = vsel %vm1075, %v1843, %v1715
        %v2740 = vsel %vm1076, %v1844, %v1716
        %v2741 = vsel %vm1077, %v1845, %v1717
        %v2742 = vsel %vm1078, %v1846, %v1718
        %v2743 = vsel %vm1079, %v1847, %v1719
        %v2744 = vsel %vm1080, %v1848, %v1720
        %v2745 = vsel %vm1081, %v1849, %v1721
        %v2746 = vsel %vm1082, %v1850, %v1722
        %v2747 = vsel %vm1083, %v1851, %v1723
        %v2748 = vsel %vm1084, %v1852, %v1724
        %v2749 = vsel %vm1085, %v1853, %v1725
        %v2750 = vsel %vm1086, %v1854, %v1726
        %v2751 = vsel %vm1087, %v1855, %v1727
        %v2752 = vsel %vm1088, %v1856, %v1728
        %v2753 = vsel %vm1089, %v1857, %v1729
        %v2754 = vsel %vm1090, %v1858, %v1730
        %v2755 = vsel %vm1091, %v1859, %v1731
        %v2756 = vsel %vm1092, %v1860, %v1732
        %v2757 = vsel %vm1093, %v1861, %v1733
        %v2758 = vsel %vm1094, %v1862, %v1734
        %v2759 = vsel %vm1095, %v1863, %v1735
        %v2760 = vsel %vm1096, %v1864, %v1736
        %v2761 = vsel %vm1097, %v1865, %v1737
        %v2762 = vsel %vm1098, %v1866, %v1738
        %v2763 = vsel %vm1099, %v1867, %v1739
        %v2764 = vsel %vm1100, %v1868, %v1740
        %v2765 = vsel %vm1101, %v1869, %v1741
        %v2766 = vsel %vm1102, %v1870, %v1742
        %v2767 = vsel %vm1103, %v1871, %v1743
        %v2768 = vsel %vm1104, %v1872, %v1744
        %v2769 = vsel %vm1105, %v1873, %v1745
        %v2770 = vsel %vm1106, %v1874, %v1746
        %v2771 = vsel %vm1107, %v1875, %v1747
        %v2772 = vsel %vm1108, %v1876, %v1748
        %v2773 = vsel %vm1109, %v1877, %v1749
        %v2774 = vsel %vm1110, %v1878, %v1750
        %v2775 = vsel %vm1111, %v1879, %v1751
        %v2776 = vsel %vm1112, %v1880, %v1752
        %v2777 = vsel %vm1113, %v1881, %v1753
        %v2778 = vsel %vm1114, %v1882, %v1754
        %v2779 = vsel %vm1115, %v1883, %v1755
        %v2780 = vsel %vm1116, %v1884, %v1756
        %v2781 = vsel %vm1117, %v1885, %v1757
        %v2782 = vsel %vm1118, %v1886, %v1758
        %v2783 = vsel %vm1119, %v1887, %v1759
        %v2784 = vsel %vm1120, %v1888, %v1760
        %v2785 = vsel %vm1121, %v1889, %v1761
        %v2786 = vsel %vm1122, %v1890, %v1762
        %v2787 = vsel %vm1123, %v1891, %v1763
        %v2788 = vsel %vm1124, %v1892, %v1764
        %v2789 = vsel %vm1125, %v1893, %v1765
        %v2790 = vsel %vm1126, %v1894, %v1766
        %v2791 = vsel %vm1127, %v1895, %v1767
        %v2792 = vsel %vm1128, %v1896, %v1768
        %v2793 = vsel %vm1129, %v1897, %v1769
        %v2794 = vsel %vm1130, %v1898, %v1770
        %v2795 = vsel %vm1131, %v1899, %v1771
        %v2796 = vsel %vm1132, %v1900, %v1772
        %v2797 = vsel %vm1133, %v1901, %v1773
        %v2798 = vsel %vm1134, %v1902, %v1774
        %v2799 = vsel %vm1135, %v1903, %v1775
        %v2800 = vsel %vm1136, %v1904, %v1776
        %v2801 = vsel %vm1137, %v1905, %v1777
        %v2802 = vsel %vm1138, %v1906, %v1778
        %v2803 = vsel %vm1139, %v1907, %v1779
        %v2804 = vsel %vm1012, %v2036, %v1908
        %v2805 = vsel %vm1013, %v2037, %v1909
        %v2806 = vsel %vm1014, %v2038, %v1910
        %v2807 = vsel %vm1015, %v2039, %v1911
        %v2808 = vsel %vm1016, %v2040, %v1912
        %v2809 = vsel %vm1017, %v2041, %v1913
        %v2810 = vsel %vm1018, %v2042, %v1914
        %v2811 = vsel %vm1019, %v2043, %v1915
        %v2812 = vsel %vm1020, %v2044, %v1916
        %v2813 = vsel %vm1021, %v2045, %v1917
        %v2814 = vsel %vm1022, %v2046, %v1918
        %v2815 = vsel %vm1023, %v2047, %v1919
        %v2816 = vsel %vm1024, %v2048, %v1920
        %v2817 = vsel %vm1025, %v2049, %v1921
        %v2818 = vsel %vm1026, %v2050, %v1922
        %v2819 = vsel %vm1027, %v2051, %v1923
        %v2820 = vsel %vm1028, %v2052, %v1924
        %v2821 = vsel %vm1029, %v2053, %v1925
        %v2822 = vsel %vm1030, %v2054, %v1926
        %v2823 = vsel %vm1031, %v2055, %v1927
        %v2824 = vsel %vm1032, %v2056, %v1928
        %v2825 = vsel %vm1033, %v2057, %v1929
        %v2826 = vsel %vm1034, %v2058, %v1930
        %v2827 = vsel %vm1035, %v2059, %v1931
        %v2828 = vsel %vm1036, %v2060, %v1932
        %v2829 = vsel %vm1037, %v2061, %v1933
        %v2830 = vsel %vm1038, %v2062, %v1934
        %v2831 = vsel %vm1039, %v2063, %v1935
        %v2832 = vsel %vm1040, %v2064, %v1936
        %v2833 = vsel %vm1041, %v2065, %v1937
        %v2834 = vsel %vm1042, %v2066, %v1938
        %v2835 = vsel %vm1043, %v2067, %v1939
        %v2836 = vsel %vm1044, %v2068, %v1940
        %v2837 = vsel %vm1045, %v2069, %v1941
        %v2838 = vsel %vm1046, %v2070, %v1942
        %v2839 = vsel %vm1047, %v2071, %v1943
        %v2840 = vsel %vm1048, %v2072, %v1944
        %v2841 = vsel %vm1049, %v2073, %v1945
        %v2842 = vsel %vm1050, %v2074, %v1946
        %v2843 = vsel %vm1051, %v2075, %v1947
        %v2844 = vsel %vm1052, %v2076, %v1948
        %v2845 = vsel %vm1053, %v2077, %v1949
        %v2846 = vsel %vm1054, %v2078, %v1950
        %v2847 = vsel %vm1055, %v2079, %v1951
        %v2848 = vsel %vm1056, %v2080, %v1952
        %v2849 = vsel %vm1057, %v2081, %v1953
        %v2850 = vsel %vm1058, %v2082, %v1954
        %v2851 = vsel %vm1059, %v2083, %v1955
        %v2852 = vsel %vm1060, %v2084, %v1956
        %v2853 = vsel %vm1061, %v2085, %v1957
        %v2854 = vsel %vm1062, %v2086, %v1958
        %v2855 = vsel %vm1063, %v2087, %v1959
        %v2856 = vsel %vm1064, %v2088, %v1960
        %v2857 = vsel %vm1065, %v2089, %v1961
        %v2858 = vsel %vm1066, %v2090, %v1962
        %v2859 = vsel %vm1067, %v2091, %v1963
        %v2860 = vsel %vm1068, %v2092, %v1964
        %v2861 = vsel %vm1069, %v2093, %v1965
        %v2862 = vsel %vm1070, %v2094, %v1966
        %v2863 = vsel %vm1071, %v2095, %v1967
        %v2864 = vsel %vm1072, %v2096, %v1968
        %v2865 = vsel %vm1073, %v2097, %v1969
        %v2866 = vsel %vm1074, %v2098, %v1970
        %v2867 = vsel %vm1075, %v2099, %v1971
        %v2868 = vsel %vm1076, %v2100, %v1972
        %v2869 = vsel %vm1077, %v2101, %v1973
        %v2870 = vsel %vm1078, %v2102, %v1974
        %v2871 = vsel %vm1079, %v2103, %v1975
        %v2872 = vsel %vm1080, %v2104, %v1976
        %v2873 = vsel %vm1081, %v2105, %v1977
        %v2874 = vsel %vm1082, %v2106, %v1978
        %v2875 = vsel %vm1083, %v2107, %v1979
        %v2876 = vsel %vm1084, %v2108, %v1980
        %v2877 = vsel %vm1085, %v2109, %v1981
        %v2878 = vsel %vm1086, %v2110, %v1982
        %v2879 = vsel %vm1087, %v2111, %v1983
        %v2880 = vsel %vm1088, %v2112, %v1984
        %v2881 = vsel %vm1089, %v2113, %v1985
        %v2882 = vsel %vm1090, %v2114, %v1986
        %v2883 = vsel %vm1091, %v2115, %v1987
        %v2884 = vsel %vm1092, %v2116, %v1988
        %v2885 = vsel %vm1093, %v2117, %v1989
        %v2886 = vsel %vm1094, %v2118, %v1990
        %v2887 = vsel %vm1095, %v2119, %v1991
        %v2888 = vsel %vm1096, %v2120, %v1992
        %v2889 = vsel %vm1097, %v2121, %v1993
        %v2890 = vsel %vm1098, %v2122, %v1994
        %v2891 = vsel %vm1099, %v2123, %v1995
        %v2892 = vsel %vm1100, %v2124, %v1996
        %v2893 = vsel %vm1101, %v2125, %v1997
        %v2894 = vsel %vm1102, %v2126, %v1998
        %v2895 = vsel %vm1103, %v2127, %v1999
        %v2896 = vsel %vm1104, %v2128, %v2000
        %v2897 = vsel %vm1105, %v2129, %v2001
        %v2898 = vsel %vm1106, %v2130, %v2002
        %v2899 = vsel %vm1107, %v2131, %v2003
        %v2900 = vsel %vm1108, %v2132, %v2004
        %v2901 = vsel %vm1109, %v2133, %v2005
        %v2902 = vsel %vm1110, %v2134, %v2006
        %v2903 = vsel %vm1111, %v2135, %v2007
        %v2904 = vsel %vm1112, %v2136, %v2008
        %v2905 = vsel %vm1113, %v2137, %v2009
        %v2906 = vsel %vm1114, %v2138, %v2010
        %v2907 = vsel %vm1115, %v2139, %v2011
        %v2908 = vsel %vm1116, %v2140, %v2012
        %v2909 = vsel %vm1117, %v2141, %v2013
        %v2910 = vsel %vm1118, %v2142, %v2014
        %v2911 = vsel %vm1119, %v2143, %v2015
        %v2912 = vsel %vm1120, %v2144, %v2016
        %v2913 = vsel %vm1121, %v2145, %v2017
        %v2914 = vsel %vm1122, %v2146, %v2018
        %v2915 = vsel %vm1123, %v2147, %v2019
        %v2916 = vsel %vm1124, %v2148, %v2020
        %v2917 = vsel %vm1125, %v2149, %v2021
        %v2918 = vsel %vm1126, %v2150, %v2022
        %v2919 = vsel %vm1127, %v2151, %v2023
        %v2920 = vsel %vm1128, %v2152, %v2024
        %v2921 = vsel %vm1129, %v2153, %v2025
        %v2922 = vsel %vm1130, %v2154, %v2026
        %v2923 = vsel %vm1131, %v2155, %v2027
        %v2924 = vsel %vm1132, %v2156, %v2028
        %v2925 = vsel %vm1133, %v2157, %v2029
        %v2926 = vsel %vm1134, %v2158, %v2030
        %v2927 = vsel %vm1135, %v2159, %v2031
        %v2928 = vsel %vm1136, %v2160, %v2032
        %v2929 = vsel %vm1137, %v2161, %v2033
        %v2930 = vsel %vm1138, %v2162, %v2034
        %v2931 = vsel %vm1139, %v2163, %v2035
        %v2932 = vsel %vm1012, %v2292, %v2164
        %v2933 = vsel %vm1013, %v2293, %v2165
        %v2934 = vsel %vm1014, %v2294, %v2166
        %v2935 = vsel %vm1015, %v2295, %v2167
        %v2936 = vsel %vm1016, %v2296, %v2168
        %v2937 = vsel %vm1017, %v2297, %v2169
        %v2938 = vsel %vm1018, %v2298, %v2170
        %v2939 = vsel %vm1019, %v2299, %v2171
        %v2940 = vsel %vm1020, %v2300, %v2172
        %v2941 = vsel %vm1021, %v2301, %v2173
        %v2942 = vsel %vm1022, %v2302, %v2174
        %v2943 = vsel %vm1023, %v2303, %v2175
        %v2944 = vsel %vm1024, %v2304, %v2176
        %v2945 = vsel %vm1025, %v2305, %v2177
        %v2946 = vsel %vm1026, %v2306, %v2178
        %v2947 = vsel %vm1027, %v2307, %v2179
        %v2948 = vsel %vm1028, %v2308, %v2180
        %v2949 = vsel %vm1029, %v2309, %v2181
        %v2950 = vsel %vm1030, %v2310, %v2182
        %v2951 = vsel %vm1031, %v2311, %v2183
        %v2952 = vsel %vm1032, %v2312, %v2184
        %v2953 = vsel %vm1033, %v2313, %v2185
        %v2954 = vsel %vm1034, %v2314, %v2186
        %v2955 = vsel %vm1035, %v2315, %v2187
        %v2956 = vsel %vm1036, %v2316, %v2188
        %v2957 = vsel %vm1037, %v2317, %v2189
        %v2958 = vsel %vm1038, %v2318, %v2190
        %v2959 = vsel %vm1039, %v2319, %v2191
        %v2960 = vsel %vm1040, %v2320, %v2192
        %v2961 = vsel %vm1041, %v2321, %v2193
        %v2962 = vsel %vm1042, %v2322, %v2194
        %v2963 = vsel %vm1043, %v2323, %v2195
        %v2964 = vsel %vm1044, %v2324, %v2196
        %v2965 = vsel %vm1045, %v2325, %v2197
        %v2966 = vsel %vm1046, %v2326, %v2198
        %v2967 = vsel %vm1047, %v2327, %v2199
        %v2968 = vsel %vm1048, %v2328, %v2200
        %v2969 = vsel %vm1049, %v2329, %v2201
        %v2970 = vsel %vm1050, %v2330, %v2202
        %v2971 = vsel %vm1051, %v2331, %v2203
        %v2972 = vsel %vm1052, %v2332, %v2204
        %v2973 = vsel %vm1053, %v2333, %v2205
        %v2974 = vsel %vm1054, %v2334, %v2206
        %v2975 = vsel %vm1055, %v2335, %v2207
        %v2976 = vsel %vm1056, %v2336, %v2208
        %v2977 = vsel %vm1057, %v2337, %v2209
        %v2978 = vsel %vm1058, %v2338, %v2210
        %v2979 = vsel %vm1059, %v2339, %v2211
        %v2980 = vsel %vm1060, %v2340, %v2212
        %v2981 = vsel %vm1061, %v2341, %v2213
        %v2982 = vsel %vm1062, %v2342, %v2214
        %v2983 = vsel %vm1063, %v2343, %v2215
        %v2984 = vsel %vm1064, %v2344, %v2216
        %v2985 = vsel %vm1065, %v2345, %v2217
        %v2986 = vsel %vm1066, %v2346, %v2218
        %v2987 = vsel %vm1067, %v2347, %v2219
        %v2988 = vsel %vm1068, %v2348, %v2220
        %v2989 = vsel %vm1069, %v2349, %v2221
        %v2990 = vsel %vm1070, %v2350, %v2222
        %v2991 = vsel %vm1071, %v2351, %v2223
        %v2992 = vsel %vm1072, %v2352, %v2224
        %v2993 = vsel %vm1073, %v2353, %v2225
        %v2994 = vsel %vm1074, %v2354, %v2226
        %v2995 = vsel %vm1075, %v2355, %v2227
        %v2996 = vsel %vm1076, %v2356, %v2228
        %v2997 = vsel %vm1077, %v2357, %v2229
        %v2998 = vsel %vm1078, %v2358, %v2230
        %v2999 = vsel %vm1079, %v2359, %v2231
        %v3000 = vsel %vm1080, %v2360, %v2232
        %v3001 = vsel %vm1081, %v2361, %v2233
        %v3002 = vsel %vm1082, %v2362, %v2234
        %v3003 = vsel %vm1083, %v2363, %v2235
        %v3004 = vsel %vm1084, %v2364, %v2236
        %v3005 = vsel %vm1085, %v2365, %v2237
        %v3006 = vsel %vm1086, %v2366, %v2238
        %v3007 = vsel %vm1087, %v2367, %v2239
        %v3008 = vsel %vm1088, %v2368, %v2240
        %v3009 = vsel %vm1089, %v2369, %v2241
        %v3010 = vsel %vm1090, %v2370, %v2242
        %v3011 = vsel %vm1091, %v2371, %v2243
        %v3012 = vsel %vm1092, %v2372, %v2244
        %v3013 = vsel %vm1093, %v2373, %v2245
        %v3014 = vsel %vm1094, %v2374, %v2246
        %v3015 = vsel %vm1095, %v2375, %v2247
        %v3016 = vsel %vm1096, %v2376, %v2248
        %v3017 = vsel %vm1097, %v2377, %v2249
        %v3018 = vsel %vm1098, %v2378, %v2250
        %v3019 = vsel %vm1099, %v2379, %v2251
        %v3020 = vsel %vm1100, %v2380, %v2252
        %v3021 = vsel %vm1101, %v2381, %v2253
        %v3022 = vsel %vm1102, %v2382, %v2254
        %v3023 = vsel %vm1103, %v2383, %v2255
        %v3024 = vsel %vm1104, %v2384, %v2256
        %v3025 = vsel %vm1105, %v2385, %v2257
        %v3026 = vsel %vm1106, %v2386, %v2258
        %v3027 = vsel %vm1107, %v2387, %v2259
        %v3028 = vsel %vm1108, %v2388, %v2260
        %v3029 = vsel %vm1109, %v2389, %v2261
        %v3030 = vsel %vm1110, %v2390, %v2262
        %v3031 = vsel %vm1111, %v2391, %v2263
        %v3032 = vsel %vm1112, %v2392, %v2264
        %v3033 = vsel %vm1113, %v2393, %v2265
        %v3034 = vsel %vm1114, %v2394, %v2266
        %v3035 = vsel %vm1115, %v2395, %v2267
        %v3036 = vsel %vm1116, %v2396, %v2268
        %v3037 = vsel %vm1117, %v2397, %v2269
        %v3038 = vsel %vm1118, %v2398, %v2270
        %v3039 = vsel %vm1119, %v2399, %v2271
        %v3040 = vsel %vm1120, %v2400, %v2272
        %v3041 = vsel %vm1121, %v2401, %v2273
        %v3042 = vsel %vm1122, %v2402, %v2274
        %v3043 = vsel %vm1123, %v2403, %v2275
        %v3044 = vsel %vm1124, %v2404, %v2276
        %v3045 = vsel %vm1125, %v2405, %v2277
        %v3046 = vsel %vm1126, %v2406, %v2278
        %v3047 = vsel %vm1127, %v2407, %v2279
        %v3048 = vsel %vm1128, %v2408, %v2280
        %v3049 = vsel %vm1129, %v2409, %v2281
        %v3050 = vsel %vm1130, %v2410, %v2282
        %v3051 = vsel %vm1131, %v2411, %v2283
        %v3052 = vsel %vm1132, %v2412, %v2284
        %v3053 = vsel %vm1133, %v2413, %v2285
        %v3054 = vsel %vm1134, %v2414, %v2286
        %v3055 = vsel %vm1135, %v2415, %v2287
        %v3056 = vsel %vm1136, %v2416, %v2288
        %v3057 = vsel %vm1137, %v2417, %v2289
        %v3058 = vsel %vm1138, %v2418, %v2290
        %v3059 = vsel %vm1139, %v2419, %v2291
        %v3060 = vsel %vm1012, %v2548, %v2420
        %v3061 = vsel %vm1013, %v2549, %v2421
        %v3062 = vsel %vm1014, %v2550, %v2422
        %v3063 = vsel %vm1015, %v2551, %v2423
        %v3064 = vsel %vm1016, %v2552, %v2424
        %v3065 = vsel %vm1017, %v2553, %v2425
        %v3066 = vsel %vm1018, %v2554, %v2426
        %v3067 = vsel %vm1019, %v2555, %v2427
        %v3068 = vsel %vm1020, %v2556, %v2428
        %v3069 = vsel %vm1021, %v2557, %v2429
        %v3070 = vsel %vm1022, %v2558, %v2430
        %v3071 = vsel %vm1023, %v2559, %v2431
        %v3072 = vsel %vm1024, %v2560, %v2432
        %v3073 = vsel %vm1025, %v2561, %v2433
        %v3074 = vsel %vm1026, %v2562, %v2434
        %v3075 = vsel %vm1027, %v2563, %v2435
        %v3076 = vsel %vm1028, %v2564, %v2436
        %v3077 = vsel %vm1029, %v2565, %v2437
        %v3078 = vsel %vm1030, %v2566, %v2438
        %v3079 = vsel %vm1031, %v2567, %v2439
        %v3080 = vsel %vm1032, %v2568, %v2440
        %v3081 = vsel %vm1033, %v2569, %v2441
        %v3082 = vsel %vm1034, %v2570, %v2442
        %v3083 = vsel %vm1035, %v2571, %v2443
        %v3084 = vsel %vm1036, %v2572, %v2444
        %v3085 = vsel %vm1037, %v2573, %v2445
        %v3086 = vsel %vm1038, %v2574, %v2446
        %v3087 = vsel %vm1039, %v2575, %v2447
        %v3088 = vsel %vm1040, %v2576, %v2448
        %v3089 = vsel %vm1041, %v2577, %v2449
        %v3090 = vsel %vm1042, %v2578, %v2450
        %v3091 = vsel %vm1043, %v2579, %v2451
        %v3092 = vsel %vm1044, %v2580, %v2452
        %v3093 = vsel %vm1045, %v2581, %v2453
        %v3094 = vsel %vm1046, %v2582, %v2454
        %v3095 = vsel %vm1047, %v2583, %v2455
        %v3096 = vsel %vm1048, %v2584, %v2456
        %v3097 = vsel %vm1049, %v2585, %v2457
        %v3098 = vsel %vm1050, %v2586, %v2458
        %v3099 = vsel %vm1051, %v2587, %v2459
        %v3100 = vsel %vm1052, %v2588, %v2460
        %v3101 = vsel %vm1053, %v2589, %v2461
        %v3102 = vsel %vm1054, %v2590, %v2462
        %v3103 = vsel %vm1055, %v2591, %v2463
        %v3104 = vsel %vm1056, %v2592, %v2464
        %v3105 = vsel %vm1057, %v2593, %v2465
        %v3106 = vsel %vm1058, %v2594, %v2466
        %v3107 = vsel %vm1059, %v2595, %v2467
        %v3108 = vsel %vm1060, %v2596, %v2468
        %v3109 = vsel %vm1061, %v2597, %v2469
        %v3110 = vsel %vm1062, %v2598, %v2470
        %v3111 = vsel %vm1063, %v2599, %v2471
        %v3112 = vsel %vm1064, %v2600, %v2472
        %v3113 = vsel %vm1065, %v2601, %v2473
        %v3114 = vsel %vm1066, %v2602, %v2474
        %v3115 = vsel %vm1067, %v2603, %v2475
        %v3116 = vsel %vm1068, %v2604, %v2476
        %v3117 = vsel %vm1069, %v2605, %v2477
        %v3118 = vsel %vm1070, %v2606, %v2478
        %v3119 = vsel %vm1071, %v2607, %v2479
        %v3120 = vsel %vm1072, %v2608, %v2480
        %v3121 = vsel %vm1073, %v2609, %v2481
        %v3122 = vsel %vm1074, %v2610, %v2482
        %v3123 = vsel %vm1075, %v2611, %v2483
        %v3124 = vsel %vm1076, %v2612, %v2484
        %v3125 = vsel %vm1077, %v2613, %v2485
        %v3126 = vsel %vm1078, %v2614, %v2486
        %v3127 = vsel %vm1079, %v2615, %v2487
        %v3128 = vsel %vm1080, %v2616, %v2488
        %v3129 = vsel %vm1081, %v2617, %v2489
        %v3130 = vsel %vm1082, %v2618, %v2490
        %v3131 = vsel %vm1083, %v2619, %v2491
        %v3132 = vsel %vm1084, %v2620, %v2492
        %v3133 = vsel %vm1085, %v2621, %v2493
        %v3134 = vsel %vm1086, %v2622, %v2494
        %v3135 = vsel %vm1087, %v2623, %v2495
        %v3136 = vsel %vm1088, %v2624, %v2496
        %v3137 = vsel %vm1089, %v2625, %v2497
        %v3138 = vsel %vm1090, %v2626, %v2498
        %v3139 = vsel %vm1091, %v2627, %v2499
        %v3140 = vsel %vm1092, %v2628, %v2500
        %v3141 = vsel %vm1093, %v2629, %v2501
        %v3142 = vsel %vm1094, %v2630, %v2502
        %v3143 = vsel %vm1095, %v2631, %v2503
        %v3144 = vsel %vm1096, %v2632, %v2504
        %v3145 = vsel %vm1097, %v2633, %v2505
        %v3146 = vsel %vm1098, %v2634, %v2506
        %v3147 = vsel %vm1099, %v2635, %v2507
        %v3148 = vsel %vm1100, %v2636, %v2508
        %v3149 = vsel %vm1101, %v2637, %v2509
        %v3150 = vsel %vm1102, %v2638, %v2510
        %v3151 = vsel %vm1103, %v2639, %v2511
        %v3152 = vsel %vm1104, %v2640, %v2512
        %v3153 = vsel %vm1105, %v2641, %v2513
        %v3154 = vsel %vm1106, %v2642, %v2514
        %v3155 = vsel %vm1107, %v2643, %v2515
        %v3156 = vsel %vm1108, %v2644, %v2516
        %v3157 = vsel %vm1109, %v2645, %v2517
        %v3158 = vsel %vm1110, %v2646, %v2518
        %v3159 = vsel %vm1111, %v2647, %v2519
        %v3160 = vsel %vm1112, %v2648, %v2520
        %v3161 = vsel %vm1113, %v2649, %v2521
        %v3162 = vsel %vm1114, %v2650, %v2522
        %v3163 = vsel %vm1115, %v2651, %v2523
        %v3164 = vsel %vm1116, %v2652, %v2524
        %v3165 = vsel %vm1117, %v2653, %v2525
        %v3166 = vsel %vm1118, %v2654, %v2526
        %v3167 = vsel %vm1119, %v2655, %v2527
        %v3168 = vsel %vm1120, %v2656, %v2528
        %v3169 = vsel %vm1121, %v2657, %v2529
        %v3170 = vsel %vm1122, %v2658, %v2530
        %v3171 = vsel %vm1123, %v2659, %v2531
        %v3172 = vsel %vm1124, %v2660, %v2532
        %v3173 = vsel %vm1125, %v2661, %v2533
        %v3174 = vsel %vm1126, %v2662, %v2534
        %v3175 = vsel %vm1127, %v2663, %v2535
        %v3176 = vsel %vm1128, %v2664, %v2536
        %v3177 = vsel %vm1129, %v2665, %v2537
        %v3178 = vsel %vm1130, %v2666, %v2538
        %v3179 = vsel %vm1131, %v2667, %v2539
        %v3180 = vsel %vm1132, %v2668, %v2540
        %v3181 = vsel %vm1133, %v2669, %v2541
        %v3182 = vsel %vm1134, %v2670, %v2542
        %v3183 = vsel %vm1135, %v2671, %v2543
        %v3184 = vsel %vm1136, %v2672, %v2544
        %v3185 = vsel %vm1137, %v2673, %v2545
        %v3186 = vsel %vm1138, %v2674, %v2546
        %v3187 = vsel %vm1139, %v2675, %v2547
        %v3188 = vsel %vm1268, %v2804, %v2676
        %v3189 = vsel %vm1269, %v2805, %v2677
        %v3190 = vsel %vm1270, %v2806, %v2678
        %v3191 = vsel %vm1271, %v2807, %v2679
        %v3192 = vsel %vm1272, %v2808, %v2680
        %v3193 = vsel %vm1273, %v2809, %v2681
        %v3194 = vsel %vm1274, %v2810, %v2682
        %v3195 = vsel %vm1275, %v2811, %v2683
        %v3196 = vsel %vm1276, %v2812, %v2684
        %v3197 = vsel %vm1277, %v2813, %v2685
        %v3198 = vsel %vm1278, %v2814, %v2686
        %v3199 = vsel %vm1279, %v2815, %v2687
        %v3200 = vsel %vm1280, %v2816, %v2688
        %v3201 = vsel %vm1281, %v2817, %v2689
        %v3202 = vsel %vm1282, %v2818, %v2690
        %v3203 = vsel %vm1283, %v2819, %v2691
        %v3204 = vsel %vm1284, %v2820, %v2692
        %v3205 = vsel %vm1285, %v2821, %v2693
        %v3206 = vsel %vm1286, %v2822, %v2694
        %v3207 = vsel %vm1287, %v2823, %v2695
        %v3208 = vsel %vm1288, %v2824, %v2696
        %v3209 = vsel %vm1289, %v2825, %v2697
        %v3210 = vsel %vm1290, %v2826, %v2698
        %v3211 = vsel %vm1291, %v2827, %v2699
        %v3212 = vsel %vm1292, %v2828, %v2700
        %v3213 = vsel %vm1293, %v2829, %v2701
        %v3214 = vsel %vm1294, %v2830, %v2702
        %v3215 = vsel %vm1295, %v2831, %v2703
        %v3216 = vsel %vm1296, %v2832, %v2704
        %v3217 = vsel %vm1297, %v2833, %v2705
        %v3218 = vsel %vm1298, %v2834, %v2706
        %v3219 = vsel %vm1299, %v2835, %v2707
        %v3220 = vsel %vm1300, %v2836, %v2708
        %v3221 = vsel %vm1301, %v2837, %v2709
        %v3222 = vsel %vm1302, %v2838, %v2710
        %v3223 = vsel %vm1303, %v2839, %v2711
        %v3224 = vsel %vm1304, %v2840, %v2712
        %v3225 = vsel %vm1305, %v2841, %v2713
        %v3226 = vsel %vm1306, %v2842, %v2714
        %v3227 = vsel %vm1307, %v2843, %v2715
        %v3228 = vsel %vm1308, %v2844, %v2716
        %v3229 = vsel %vm1309, %v2845, %v2717
        %v3230 = vsel %vm1310, %v2846, %v2718
        %v3231 = vsel %vm1311, %v2847, %v2719
        %v3232 = vsel %vm1312, %v2848, %v2720
        %v3233 = vsel %vm1313, %v2849, %v2721
        %v3234 = vsel %vm1314, %v2850, %v2722
        %v3235 = vsel %vm1315, %v2851, %v2723
        %v3236 = vsel %vm1316, %v2852, %v2724
        %v3237 = vsel %vm1317, %v2853, %v2725
        %v3238 = vsel %vm1318, %v2854, %v2726
        %v3239 = vsel %vm1319, %v2855, %v2727
        %v3240 = vsel %vm1320, %v2856, %v2728
        %v3241 = vsel %vm1321, %v2857, %v2729
        %v3242 = vsel %vm1322, %v2858, %v2730
        %v3243 = vsel %vm1323, %v2859, %v2731
        %v3244 = vsel %vm1324, %v2860, %v2732
        %v3245 = vsel %vm1325, %v2861, %v2733
        %v3246 = vsel %vm1326, %v2862, %v2734
        %v3247 = vsel %vm1327, %v2863, %v2735
        %v3248 = vsel %vm1328, %v2864, %v2736
        %v3249 = vsel %vm1329, %v2865, %v2737
        %v3250 = vsel %vm1330, %v2866, %v2738
        %v3251 = vsel %vm1331, %v2867, %v2739
        %v3252 = vsel %vm1332, %v2868, %v2740
        %v3253 = vsel %vm1333, %v2869, %v2741
        %v3254 = vsel %vm1334, %v2870, %v2742
        %v3255 = vsel %vm1335, %v2871, %v2743
        %v3256 = vsel %vm1336, %v2872, %v2744
        %v3257 = vsel %vm1337, %v2873, %v2745
        %v3258 = vsel %vm1338, %v2874, %v2746
        %v3259 = vsel %vm1339, %v2875, %v2747
        %v3260 = vsel %vm1340, %v2876, %v2748
        %v3261 = vsel %vm1341, %v2877, %v2749
        %v3262 = vsel %vm1342, %v2878, %v2750
        %v3263 = vsel %vm1343, %v2879, %v2751
        %v3264 = vsel %vm1344, %v2880, %v2752
        %v3265 = vsel %vm1345, %v2881, %v2753
        %v3266 = vsel %vm1346, %v2882, %v2754
        %v3267 = vsel %vm1347, %v2883, %v2755
        %v3268 = vsel %vm1348, %v2884, %v2756
        %v3269 = vsel %vm1349, %v2885, %v2757
        %v3270 = vsel %vm1350, %v2886, %v2758
        %v3271 = vsel %vm1351, %v2887, %v2759
        %v3272 = vsel %vm1352, %v2888, %v2760
        %v3273 = vsel %vm1353, %v2889, %v2761
        %v3274 = vsel %vm1354, %v2890, %v2762
        %v3275 = vsel %vm1355, %v2891, %v2763
        %v3276 = vsel %vm1356, %v2892, %v2764
        %v3277 = vsel %vm1357, %v2893, %v2765
        %v3278 = vsel %vm1358, %v2894, %v2766
        %v3279 = vsel %vm1359, %v2895, %v2767
        %v3280 = vsel %vm1360, %v2896, %v2768
        %v3281 = vsel %vm1361, %v2897, %v2769
        %v3282 = vsel %vm1362, %v2898, %v2770
        %v3283 = vsel %vm1363, %v2899, %v2771
        %v3284 = vsel %vm1364, %v2900, %v2772
        %v3285 = vsel %vm1365, %v2901, %v2773
        %v3286 = vsel %vm1366, %v2902, %v2774
        %v3287 = vsel %vm1367, %v2903, %v2775
        %v3288 = vsel %vm1368, %v2904, %v2776
        %v3289 = vsel %vm1369, %v2905, %v2777
        %v3290 = vsel %vm1370, %v2906, %v2778
        %v3291 = vsel %vm1371, %v2907, %v2779
        %v3292 = vsel %vm1372, %v2908, %v2780
        %v3293 = vsel %vm1373, %v2909, %v2781
        %v3294 = vsel %vm1374, %v2910, %v2782
        %v3295 = vsel %vm1375, %v2911, %v2783
        %v3296 = vsel %vm1376, %v2912, %v2784
        %v3297 = vsel %vm1377, %v2913, %v2785
        %v3298 = vsel %vm1378, %v2914, %v2786
        %v3299 = vsel %vm1379, %v2915, %v2787
        %v3300 = vsel %vm1380, %v2916, %v2788
        %v3301 = vsel %vm1381, %v2917, %v2789
        %v3302 = vsel %vm1382, %v2918, %v2790
        %v3303 = vsel %vm1383, %v2919, %v2791
        %v3304 = vsel %vm1384, %v2920, %v2792
        %v3305 = vsel %vm1385, %v2921, %v2793
        %v3306 = vsel %vm1386, %v2922, %v2794
        %v3307 = vsel %vm1387, %v2923, %v2795
        %v3308 = vsel %vm1388, %v2924, %v2796
        %v3309 = vsel %vm1389, %v2925, %v2797
        %v3310 = vsel %vm1390, %v2926, %v2798
        %v3311 = vsel %vm1391, %v2927, %v2799
        %v3312 = vsel %vm1392, %v2928, %v2800
        %v3313 = vsel %vm1393, %v2929, %v2801
        %v3314 = vsel %vm1394, %v2930, %v2802
        %v3315 = vsel %vm1395, %v2931, %v2803
        %v3316 = vsel %vm1268, %v3060, %v2932
        %v3317 = vsel %vm1269, %v3061, %v2933
        %v3318 = vsel %vm1270, %v3062, %v2934
        %v3319 = vsel %vm1271, %v3063, %v2935
        %v3320 = vsel %vm1272, %v3064, %v2936
        %v3321 = vsel %vm1273, %v3065, %v2937
        %v3322 = vsel %vm1274, %v3066, %v2938
        %v3323 = vsel %vm1275, %v3067, %v2939
        %v3324 = vsel %vm1276, %v3068, %v2940
        %v3325 = vsel %vm1277, %v3069, %v2941
        %v3326 = vsel %vm1278, %v3070, %v2942
        %v3327 = vsel %vm1279, %v3071, %v2943
        %v3328 = vsel %vm1280, %v3072, %v2944
        %v3329 = vsel %vm1281, %v3073, %v2945
        %v3330 = vsel %vm1282, %v3074, %v2946
        %v3331 = vsel %vm1283, %v3075, %v2947
        %v3332 = vsel %vm1284, %v3076, %v2948
        %v3333 = vsel %vm1285, %v3077, %v2949
        %v3334 = vsel %vm1286, %v3078, %v2950
        %v3335 = vsel %vm1287, %v3079, %v2951
        %v3336 = vsel %vm1288, %v3080, %v2952
        %v3337 = vsel %vm1289, %v3081, %v2953
        %v3338 = vsel %vm1290, %v3082, %v2954
        %v3339 = vsel %vm1291, %v3083, %v2955
        %v3340 = vsel %vm1292, %v3084, %v2956
        %v3341 = vsel %vm1293, %v3085, %v2957
        %v3342 = vsel %vm1294, %v3086, %v2958
        %v3343 = vsel %vm1295, %v3087, %v2959
        %v3344 = vsel %vm1296, %v3088, %v2960
        %v3345 = vsel %vm1297, %v3089, %v2961
        %v3346 = vsel %vm1298, %v3090, %v2962
        %v3347 = vsel %vm1299, %v3091, %v2963
        %v3348 = vsel %vm1300, %v3092, %v2964
        %v3349 = vsel %vm1301, %v3093, %v2965
        %v3350 = vsel %vm1302, %v3094, %v2966
        %v3351 = vsel %vm1303, %v3095, %v2967
        %v3352 = vsel %vm1304, %v3096, %v2968
        %v3353 = vsel %vm1305, %v3097, %v2969
        %v3354 = vsel %vm1306, %v3098, %v2970
        %v3355 = vsel %vm1307, %v3099, %v2971
        %v3356 = vsel %vm1308, %v3100, %v2972
        %v3357 = vsel %vm1309, %v3101, %v2973
        %v3358 = vsel %vm1310, %v3102, %v2974
        %v3359 = vsel %vm1311, %v3103, %v2975
        %v3360 = vsel %vm1312, %v3104, %v2976
        %v3361 = vsel %vm1313, %v3105, %v2977
        %v3362 = vsel %vm1314, %v3106, %v2978
        %v3363 = vsel %vm1315, %v3107, %v2979
        %v3364 = vsel %vm1316, %v3108, %v2980
        %v3365 = vsel %vm1317, %v3109, %v2981
        %v3366 = vsel %vm1318, %v3110, %v2982
        %v3367 = vsel %vm1319, %v3111, %v2983
        %v3368 = vsel %vm1320, %v3112, %v2984
        %v3369 = vsel %vm1321, %v3113, %v2985
        %v3370 = vsel %vm1322, %v3114, %v2986
        %v3371 = vsel %vm1323, %v3115, %v2987
        %v3372 = vsel %vm1324, %v3116, %v2988
        %v3373 = vsel %vm1325, %v3117, %v2989
        %v3374 = vsel %vm1326, %v3118, %v2990
        %v3375 = vsel %vm1327, %v3119, %v2991
        %v3376 = vsel %vm1328, %v3120, %v2992
        %v3377 = vsel %vm1329, %v3121, %v2993
        %v3378 = vsel %vm1330, %v3122, %v2994
        %v3379 = vsel %vm1331, %v3123, %v2995
        %v3380 = vsel %vm1332, %v3124, %v2996
        %v3381 = vsel %vm1333, %v3125, %v2997
        %v3382 = vsel %vm1334, %v3126, %v2998
        %v3383 = vsel %vm1335, %v3127, %v2999
        %v3384 = vsel %vm1336, %v3128, %v3000
        %v3385 = vsel %vm1337, %v3129, %v3001
        %v3386 = vsel %vm1338, %v3130, %v3002
        %v3387 = vsel %vm1339, %v3131, %v3003
        %v3388 = vsel %vm1340, %v3132, %v3004
        %v3389 = vsel %vm1341, %v3133, %v3005
        %v3390 = vsel %vm1342, %v3134, %v3006
        %v3391 = vsel %vm1343, %v3135, %v3007
        %v3392 = vsel %vm1344, %v3136, %v3008
        %v3393 = vsel %vm1345, %v3137, %v3009
        %v3394 = vsel %vm1346, %v3138, %v3010
        %v3395 = vsel %vm1347, %v3139, %v3011
        %v3396 = vsel %vm1348, %v3140, %v3012
        %v3397 = vsel %vm1349, %v3141, %v3013
        %v3398 = vsel %vm1350, %v3142, %v3014
        %v3399 = vsel %vm1351, %v3143, %v3015
        %v3400 = vsel %vm1352, %v3144, %v3016
        %v3401 = vsel %vm1353, %v3145, %v3017
        %v3402 = vsel %vm1354, %v3146, %v3018
        %v3403 = vsel %vm1355, %v3147, %v3019
        %v3404 = vsel %vm1356, %v3148, %v3020
        %v3405 = vsel %vm1357, %v3149, %v3021
        %v3406 = vsel %vm1358, %v3150, %v3022
        %v3407 = vsel %vm1359, %v3151, %v3023
        %v3408 = vsel %vm1360, %v3152, %v3024
        %v3409 = vsel %vm1361, %v3153, %v3025
        %v3410 = vsel %vm1362, %v3154, %v3026
        %v3411 = vsel %vm1363, %v3155, %v3027
        %v3412 = vsel %vm1364, %v3156, %v3028
        %v3413 = vsel %vm1365, %v3157, %v3029
        %v3414 = vsel %vm1366, %v3158, %v3030
        %v3415 = vsel %vm1367, %v3159, %v3031
        %v3416 = vsel %vm1368, %v3160, %v3032
        %v3417 = vsel %vm1369, %v3161, %v3033
        %v3418 = vsel %vm1370, %v3162, %v3034
        %v3419 = vsel %vm1371, %v3163, %v3035
        %v3420 = vsel %vm1372, %v3164, %v3036
        %v3421 = vsel %vm1373, %v3165, %v3037
        %v3422 = vsel %vm1374, %v3166, %v3038
        %v3423 = vsel %vm1375, %v3167, %v3039
        %v3424 = vsel %vm1376, %v3168, %v3040
        %v3425 = vsel %vm1377, %v3169, %v3041
        %v3426 = vsel %vm1378, %v3170, %v3042
        %v3427 = vsel %vm1379, %v3171, %v3043
        %v3428 = vsel %vm1380, %v3172, %v3044
        %v3429 = vsel %vm1381, %v3173, %v3045
        %v3430 = vsel %vm1382, %v3174, %v3046
        %v3431 = vsel %vm1383, %v3175, %v3047
        %v3432 = vsel %vm1384, %v3176, %v3048
        %v3433 = vsel %vm1385, %v3177, %v3049
        %v3434 = vsel %vm1386, %v3178, %v3050
        %v3435 = vsel %vm1387, %v3179, %v3051
        %v3436 = vsel %vm1388, %v3180, %v3052
        %v3437 = vsel %vm1389, %v3181, %v3053
        %v3438 = vsel %vm1390, %v3182, %v3054
        %v3439 = vsel %vm1391, %v3183, %v3055
        %v3440 = vsel %vm1392, %v3184, %v3056
        %v3441 = vsel %vm1393, %v3185, %v3057
        %v3442 = vsel %vm1394, %v3186, %v3058
        %v3443 = vsel %vm1395, %v3187, %v3059
        %v3444 = vsel %vm1524, %v3316, %v3188
        %v3445 = vsel %vm1525, %v3317, %v3189
        %v3446 = vsel %vm1526, %v3318, %v3190
        %v3447 = vsel %vm1527, %v3319, %v3191
        %v3448 = vsel %vm1528, %v3320, %v3192
        %v3449 = vsel %vm1529, %v3321, %v3193
        %v3450 = vsel %vm1530, %v3322, %v3194
        %v3451 = vsel %vm1531, %v3323, %v3195
        %v3452 = vsel %vm1532, %v3324, %v3196
        %v3453 = vsel %vm1533, %v3325, %v3197
        %v3454 = vsel %vm1534, %v3326, %v3198
        %v3455 = vsel %vm1535, %v3327, %v3199
        %v3456 = vsel %vm1536, %v3328, %v3200
        %v3457 = vsel %vm1537, %v3329, %v3201
        %v3458 = vsel %vm1538, %v3330, %v3202
        %v3459 = vsel %vm1539, %v3331, %v3203
        %v3460 = vsel %vm1540, %v3332, %v3204
        %v3461 = vsel %vm1541, %v3333, %v3205
        %v3462 = vsel %vm1542, %v3334, %v3206
        %v3463 = vsel %vm1543, %v3335, %v3207
        %v3464 = vsel %vm1544, %v3336, %v3208
        %v3465 = vsel %vm1545, %v3337, %v3209
        %v3466 = vsel %vm1546, %v3338, %v3210
        %v3467 = vsel %vm1547, %v3339, %v3211
        %v3468 = vsel %vm1548, %v3340, %v3212
        %v3469 = vsel %vm1549, %v3341, %v3213
        %v3470 = vsel %vm1550, %v3342, %v3214
        %v3471 = vsel %vm1551, %v3343, %v3215
        %v3472 = vsel %vm1552, %v3344, %v3216
        %v3473 = vsel %vm1553, %v3345, %v3217
        %v3474 = vsel %vm1554, %v3346, %v3218
        %v3475 = vsel %vm1555, %v3347, %v3219
        %v3476 = vsel %vm1556, %v3348, %v3220
        %v3477 = vsel %vm1557, %v3349, %v3221
        %v3478 = vsel %vm1558, %v3350, %v3222
        %v3479 = vsel %vm1559, %v3351, %v3223
        %v3480 = vsel %vm1560, %v3352, %v3224
        %v3481 = vsel %vm1561, %v3353, %v3225
        %v3482 = vsel %vm1562, %v3354, %v3226
        %v3483 = vsel %vm1563, %v3355, %v3227
        %v3484 = vsel %vm1564, %v3356, %v3228
        %v3485 = vsel %vm1565, %v3357, %v3229
        %v3486 = vsel %vm1566, %v3358, %v3230
        %v3487 = vsel %vm1567, %v3359, %v3231
        %v3488 = vsel %vm1568, %v3360, %v3232
        %v3489 = vsel %vm1569, %v3361, %v3233
        %v3490 = vsel %vm1570, %v3362, %v3234
        %v3491 = vsel %vm1571, %v3363, %v3235
        %v3492 = vsel %vm1572, %v3364, %v3236
        %v3493 = vsel %vm1573, %v3365, %v3237
        %v3494 = vsel %vm1574, %v3366, %v3238
        %v3495 = vsel %vm1575, %v3367, %v3239
        %v3496 = vsel %vm1576, %v3368, %v3240
        %v3497 = vsel %vm1577, %v3369, %v3241
        %v3498 = vsel %vm1578, %v3370, %v3242
        %v3499 = vsel %vm1579, %v3371, %v3243
        %v3500 = vsel %vm1580, %v3372, %v3244
        %v3501 = vsel %vm1581, %v3373, %v3245
        %v3502 = vsel %vm1582, %v3374, %v3246
        %v3503 = vsel %vm1583, %v3375, %v3247
        %v3504 = vsel %vm1584, %v3376, %v3248
        %v3505 = vsel %vm1585, %v3377, %v3249
        %v3506 = vsel %vm1586, %v3378, %v3250
        %v3507 = vsel %vm1587, %v3379, %v3251
        %v3508 = vsel %vm1588, %v3380, %v3252
        %v3509 = vsel %vm1589, %v3381, %v3253
        %v3510 = vsel %vm1590, %v3382, %v3254
        %v3511 = vsel %vm1591, %v3383, %v3255
        %v3512 = vsel %vm1592, %v3384, %v3256
        %v3513 = vsel %vm1593, %v3385, %v3257
        %v3514 = vsel %vm1594, %v3386, %v3258
        %v3515 = vsel %vm1595, %v3387, %v3259
        %v3516 = vsel %vm1596, %v3388, %v3260
        %v3517 = vsel %vm1597, %v3389, %v3261
        %v3518 = vsel %vm1598, %v3390, %v3262
        %v3519 = vsel %vm1599, %v3391, %v3263
        %v3520 = vsel %vm1600, %v3392, %v3264
        %v3521 = vsel %vm1601, %v3393, %v3265
        %v3522 = vsel %vm1602, %v3394, %v3266
        %v3523 = vsel %vm1603, %v3395, %v3267
        %v3524 = vsel %vm1604, %v3396, %v3268
        %v3525 = vsel %vm1605, %v3397, %v3269
        %v3526 = vsel %vm1606, %v3398, %v3270
        %v3527 = vsel %vm1607, %v3399, %v3271
        %v3528 = vsel %vm1608, %v3400, %v3272
        %v3529 = vsel %vm1609, %v3401, %v3273
        %v3530 = vsel %vm1610, %v3402, %v3274
        %v3531 = vsel %vm1611, %v3403, %v3275
        %v3532 = vsel %vm1612, %v3404, %v3276
        %v3533 = vsel %vm1613, %v3405, %v3277
        %v3534 = vsel %vm1614, %v3406, %v3278
        %v3535 = vsel %vm1615, %v3407, %v3279
        %v3536 = vsel %vm1616, %v3408, %v3280
        %v3537 = vsel %vm1617, %v3409, %v3281
        %v3538 = vsel %vm1618, %v3410, %v3282
        %v3539 = vsel %vm1619, %v3411, %v3283
        %v3540 = vsel %vm1620, %v3412, %v3284
        %v3541 = vsel %vm1621, %v3413, %v3285
        %v3542 = vsel %vm1622, %v3414, %v3286
        %v3543 = vsel %vm1623, %v3415, %v3287
        %v3544 = vsel %vm1624, %v3416, %v3288
        %v3545 = vsel %vm1625, %v3417, %v3289
        %v3546 = vsel %vm1626, %v3418, %v3290
        %v3547 = vsel %vm1627, %v3419, %v3291
        %v3548 = vsel %vm1628, %v3420, %v3292
        %v3549 = vsel %vm1629, %v3421, %v3293
        %v3550 = vsel %vm1630, %v3422, %v3294
        %v3551 = vsel %vm1631, %v3423, %v3295
        %v3552 = vsel %vm1632, %v3424, %v3296
        %v3553 = vsel %vm1633, %v3425, %v3297
        %v3554 = vsel %vm1634, %v3426, %v3298
        %v3555 = vsel %vm1635, %v3427, %v3299
        %v3556 = vsel %vm1636, %v3428, %v3300
        %v3557 = vsel %vm1637, %v3429, %v3301
        %v3558 = vsel %vm1638, %v3430, %v3302
        %v3559 = vsel %vm1639, %v3431, %v3303
        %v3560 = vsel %vm1640, %v3432, %v3304
        %v3561 = vsel %vm1641, %v3433, %v3305
        %v3562 = vsel %vm1642, %v3434, %v3306
        %v3563 = vsel %vm1643, %v3435, %v3307
        %v3564 = vsel %vm1644, %v3436, %v3308
        %v3565 = vsel %vm1645, %v3437, %v3309
        %v3566 = vsel %vm1646, %v3438, %v3310
        %v3567 = vsel %vm1647, %v3439, %v3311
        %v3568 = vsel %vm1648, %v3440, %v3312
        %v3569 = vsel %vm1649, %v3441, %v3313
        %v3570 = vsel %vm1650, %v3442, %v3314
        %v3571 = vsel %vm1651, %v3443, %v3315
        %v3572 = vld [vmem:[%s314] sm:$0xff]
        %v3573 = vld [vmem:[%s314 + $0x8] sm:$0xff]
        %v3576 = vcombine.high %v3572, %v3572
        %v3578 = vunpack.c.l.s4 1966171168
        %v3579 = vunpack.c.0.s8 %v3578
        %v3580 = vlaneseq
        %v3581 = vshrl.u32 %v3580, 7
        %v3582 = vsub.s32 %v3579, %v3581
        %v3583 = vrot.slane %v3572, %v3582
        %v3585 = vunpack.c.l.s4 1966171168
        %v3586 = vunpack.c.0.s8 %v3585
        %v3587 = vlaneseq
        %v3588 = vshrl.u32 %v3587, 7
        %v3589 = vsub.s32 %v3586, %v3588
        %v3590 = vrot.slane %v3576, %v3589
        %v3591 = vcombine.high %v3583, %v3583
        %v3592 = vcombine.high %v3590, %v3590
        %v3594 = vunpack.c.l.s4 1966171168
        %v3595 = vunpack.c.0.s8 %v3594
        %v3596 = vlaneseq
        %v3597 = vshrl.u32 %v3596, 7
        %v3598 = vsub.s32 %v3595, %v3597
        %v3599 = vrot.slane %v3583, %v3598
        %v3601 = vunpack.c.l.s4 1966171168
        %v3602 = vunpack.c.0.s8 %v3601
        %v3603 = vlaneseq
        %v3604 = vshrl.u32 %v3603, 7
        %v3605 = vsub.s32 %v3602, %v3604
        %v3606 = vrot.slane %v3590, %v3605
        %v3608 = vunpack.c.l.s4 1966171168
        %v3609 = vunpack.c.0.s8 %v3608
        %v3610 = vlaneseq
        %v3611 = vshrl.u32 %v3610, 7
        %v3612 = vsub.s32 %v3609, %v3611
        %v3613 = vrot.slane %v3591, %v3612
        %v3615 = vunpack.c.l.s4 1966171168
        %v3616 = vunpack.c.0.s8 %v3615
        %v3617 = vlaneseq
        %v3618 = vshrl.u32 %v3617, 7
        %v3619 = vsub.s32 %v3616, %v3618
        %v3620 = vrot.slane %v3592, %v3619
        %v3621 = vcombine.high %v3599, %v3599
        %v3622 = vcombine.high %v3606, %v3606
        %v3623 = vcombine.high %v3613, %v3613
        %v3624 = vcombine.high %v3620, %v3620
        %v3625 = vcombine.high %v3573, %v3573
        %v3627 = vunpack.c.l.s4 1966171168
        %v3628 = vunpack.c.0.s8 %v3627
        %v3629 = vlaneseq
        %v3630 = vshrl.u32 %v3629, 7
        %v3631 = vsub.s32 %v3628, %v3630
        %v3632 = vrot.slane %v3573, %v3631
        %v3634 = vunpack.c.l.s4 1966171168
        %v3635 = vunpack.c.0.s8 %v3634
        %v3636 = vlaneseq
        %v3637 = vshrl.u32 %v3636, 7
        %v3638 = vsub.s32 %v3635, %v3637
        %v3639 = vrot.slane %v3625, %v3638
        %v3640 = vcombine.high %v3632, %v3632
        %v3641 = vcombine.high %v3639, %v3639
        %v3643 = vunpack.c.l.s4 1966171168
        %v3644 = vunpack.c.0.s8 %v3643
        %v3645 = vlaneseq
        %v3646 = vshrl.u32 %v3645, 7
        %v3647 = vsub.s32 %v3644, %v3646
        %v3648 = vrot.slane %v3632, %v3647
        %v3650 = vunpack.c.l.s4 1966171168
        %v3651 = vunpack.c.0.s8 %v3650
        %v3652 = vlaneseq
        %v3653 = vshrl.u32 %v3652, 7
        %v3654 = vsub.s32 %v3651, %v3653
        %v3655 = vrot.slane %v3639, %v3654
        %v3657 = vunpack.c.l.s4 1966171168
        %v3658 = vunpack.c.0.s8 %v3657
        %v3659 = vlaneseq
        %v3660 = vshrl.u32 %v3659, 7
        %v3661 = vsub.s32 %v3658, %v3660
        %v3662 = vrot.slane %v3640, %v3661
        %v3664 = vunpack.c.l.s4 1966171168
        %v3665 = vunpack.c.0.s8 %v3664
        %v3666 = vlaneseq
        %v3667 = vshrl.u32 %v3666, 7
        %v3668 = vsub.s32 %v3665, %v3667
        %v3669 = vrot.slane %v3641, %v3668
        %v3670 = vcombine.high %v3648, %v3648
        %v3671 = vcombine.high %v3655, %v3655
        %v3672 = vcombine.high %v3662, %v3662
        %v3673 = vcombine.high %v3669, %v3669
        %v3674 = vlaneseq
        %v3675 = vshrl.u32 %v3674, 7
        %v3676 = vsub.s32 0, %v3675
        %v3677 = vrot.slane %v3599, %v3676
        %v3678 = vlaneseq
        %v3679 = vshrl.u32 %v3678, 7
        %v3680 = vsub.s32 0, %v3679
        %v3681 = vrot.slane %v3613, %v3680
        %v3682 = vlaneseq
        %v3683 = vshrl.u32 %v3682, 7
        %v3684 = vsub.s32 0, %v3683
        %v3685 = vrot.slane %v3621, %v3684
        %v3686 = vlaneseq
        %v3687 = vshrl.u32 %v3686, 7
        %v3688 = vsub.s32 0, %v3687
        %v3689 = vrot.slane %v3623, %v3688
        %v3690 = vlaneseq
        %v3691 = vshrl.u32 %v3690, 7
        %v3692 = vsub.s32 0, %v3691
        %v3693 = vrot.slane %v3606, %v3692
        %v3694 = vlaneseq
        %v3695 = vshrl.u32 %v3694, 7
        %v3696 = vsub.s32 0, %v3695
        %v3697 = vrot.slane %v3620, %v3696
        %v3698 = vlaneseq
        %v3699 = vshrl.u32 %v3698, 7
        %v3700 = vsub.s32 0, %v3699
        %v3701 = vrot.slane %v3622, %v3700
        %v3702 = vlaneseq
        %v3703 = vshrl.u32 %v3702, 7
        %v3704 = vsub.s32 0, %v3703
        %v3705 = vrot.slane %v3624, %v3704
        %v3706 = vlaneseq
        %v3707 = vshrl.u32 %v3706, 7
        %v3708 = vsub.s32 0, %v3707
        %v3709 = vrot.slane %v3648, %v3708
        %v3710 = vlaneseq
        %v3711 = vshrl.u32 %v3710, 7
        %v3712 = vsub.s32 0, %v3711
        %v3713 = vrot.slane %v3662, %v3712
        %v3714 = vlaneseq
        %v3715 = vshrl.u32 %v3714, 7
        %v3716 = vsub.s32 0, %v3715
        %v3717 = vrot.slane %v3670, %v3716
        %v3718 = vlaneseq
        %v3719 = vshrl.u32 %v3718, 7
        %v3720 = vsub.s32 0, %v3719
        %v3721 = vrot.slane %v3672, %v3720
        %v3722 = vlaneseq
        %v3723 = vshrl.u32 %v3722, 7
        %v3724 = vsub.s32 0, %v3723
        %v3725 = vrot.slane %v3655, %v3724
        %v3726 = vlaneseq
        %v3727 = vshrl.u32 %v3726, 7
        %v3728 = vsub.s32 0, %v3727
        %v3729 = vrot.slane %v3669, %v3728
        %v3730 = vlaneseq
        %v3731 = vshrl.u32 %v3730, 7
        %v3732 = vsub.s32 0, %v3731
        %v3733 = vrot.slane %v3671, %v3732
        %v3734 = vlaneseq
        %v3735 = vshrl.u32 %v3734, 7
        %v3736 = vsub.s32 0, %v3735
        %v3737 = vrot.slane %v3673, %v3736
        %v3754 = vmul.f32 %v3444, %v3677
        %v3755 = vmul.f32 %v3445, %v3677
        %v3756 = vmul.f32 %v3446, %v3677
        %v3757 = vmul.f32 %v3447, %v3677
        %v3758 = vmul.f32 %v3448, %v3677
        %v3759 = vmul.f32 %v3449, %v3677
        %v3760 = vmul.f32 %v3450, %v3677
        %v3761 = vmul.f32 %v3451, %v3677
        %v3762 = vmul.f32 %v3452, %v3681
        %v3763 = vmul.f32 %v3453, %v3681
        %v3764 = vmul.f32 %v3454, %v3681
        %v3765 = vmul.f32 %v3455, %v3681
        %v3766 = vmul.f32 %v3456, %v3681
        %v3767 = vmul.f32 %v3457, %v3681
        %v3768 = vmul.f32 %v3458, %v3681
        %v3769 = vmul.f32 %v3459, %v3681
        %v3770 = vmul.f32 %v3460, %v3685
        %v3771 = vmul.f32 %v3461, %v3685
        %v3772 = vmul.f32 %v3462, %v3685
        %v3773 = vmul.f32 %v3463, %v3685
        %v3774 = vmul.f32 %v3464, %v3685
        %v3775 = vmul.f32 %v3465, %v3685
        %v3776 = vmul.f32 %v3466, %v3685
        %v3777 = vmul.f32 %v3467, %v3685
        %v3778 = vmul.f32 %v3468, %v3689
        %v3779 = vmul.f32 %v3469, %v3689
        %v3780 = vmul.f32 %v3470, %v3689
        %v3781 = vmul.f32 %v3471, %v3689
        %v3782 = vmul.f32 %v3472, %v3689
        %v3783 = vmul.f32 %v3473, %v3689
        %v3784 = vmul.f32 %v3474, %v3689
        %v3785 = vmul.f32 %v3475, %v3689
        %v3786 = vmul.f32 %v3476, %v3693
        %v3787 = vmul.f32 %v3477, %v3693
        %v3788 = vmul.f32 %v3478, %v3693
        %v3789 = vmul.f32 %v3479, %v3693
        %v3790 = vmul.f32 %v3480, %v3693
        %v3791 = vmul.f32 %v3481, %v3693
        %v3792 = vmul.f32 %v3482, %v3693
        %v3793 = vmul.f32 %v3483, %v3693
        %v3794 = vmul.f32 %v3484, %v3697
        %v3795 = vmul.f32 %v3485, %v3697
        %v3796 = vmul.f32 %v3486, %v3697
        %v3797 = vmul.f32 %v3487, %v3697
        %v3798 = vmul.f32 %v3488, %v3697
        %v3799 = vmul.f32 %v3489, %v3697
        %v3800 = vmul.f32 %v3490, %v3697
        %v3801 = vmul.f32 %v3491, %v3697
        %v3802 = vmul.f32 %v3492, %v3701
        %v3803 = vmul.f32 %v3493, %v3701
        %v3804 = vmul.f32 %v3494, %v3701
        %v3805 = vmul.f32 %v3495, %v3701
        %v3806 = vmul.f32 %v3496, %v3701
        %v3807 = vmul.f32 %v3497, %v3701
        %v3808 = vmul.f32 %v3498, %v3701
        %v3809 = vmul.f32 %v3499, %v3701
        %v3810 = vmul.f32 %v3500, %v3705
        %v3811 = vmul.f32 %v3501, %v3705
        %v3812 = vmul.f32 %v3502, %v3705
        %v3813 = vmul.f32 %v3503, %v3705
        %v3814 = vmul.f32 %v3504, %v3705
        %v3815 = vmul.f32 %v3505, %v3705
        %v3816 = vmul.f32 %v3506, %v3705
        %v3817 = vmul.f32 %v3507, %v3705
        %v3818 = vmul.f32 %v3508, %v3709
        %v3819 = vmul.f32 %v3509, %v3709
        %v3820 = vmul.f32 %v3510, %v3709
        %v3821 = vmul.f32 %v3511, %v3709
        %v3822 = vmul.f32 %v3512, %v3709
        %v3823 = vmul.f32 %v3513, %v3709
        %v3824 = vmul.f32 %v3514, %v3709
        %v3825 = vmul.f32 %v3515, %v3709
        %v3826 = vmul.f32 %v3516, %v3713
        %v3827 = vmul.f32 %v3517, %v3713
        %v3828 = vmul.f32 %v3518, %v3713
        %v3829 = vmul.f32 %v3519, %v3713
        %v3830 = vmul.f32 %v3520, %v3713
        %v3831 = vmul.f32 %v3521, %v3713
        %v3832 = vmul.f32 %v3522, %v3713
        %v3833 = vmul.f32 %v3523, %v3713
        %v3834 = vmul.f32 %v3524, %v3717
        %v3835 = vmul.f32 %v3525, %v3717
        %v3836 = vmul.f32 %v3526, %v3717
        %v3837 = vmul.f32 %v3527, %v3717
        %v3838 = vmul.f32 %v3528, %v3717
        %v3839 = vmul.f32 %v3529, %v3717
        %v3840 = vmul.f32 %v3530, %v3717
        %v3841 = vmul.f32 %v3531, %v3717
        %v3842 = vmul.f32 %v3532, %v3721
        %v3843 = vmul.f32 %v3533, %v3721
        %v3844 = vmul.f32 %v3534, %v3721
        %v3845 = vmul.f32 %v3535, %v3721
        %v3846 = vmul.f32 %v3536, %v3721
        %v3847 = vmul.f32 %v3537, %v3721
        %v3848 = vmul.f32 %v3538, %v3721
        %v3849 = vmul.f32 %v3539, %v3721
        %v3850 = vmul.f32 %v3540, %v3725
        %v3851 = vmul.f32 %v3541, %v3725
        %v3852 = vmul.f32 %v3542, %v3725
        %v3853 = vmul.f32 %v3543, %v3725
        %v3854 = vmul.f32 %v3544, %v3725
        %v3855 = vmul.f32 %v3545, %v3725
        %v3856 = vmul.f32 %v3546, %v3725
        %v3857 = vmul.f32 %v3547, %v3725
        %v3858 = vmul.f32 %v3548, %v3729
        %v3859 = vmul.f32 %v3549, %v3729
        %v3860 = vmul.f32 %v3550, %v3729
        %v3861 = vmul.f32 %v3551, %v3729
        %v3862 = vmul.f32 %v3552, %v3729
        %v3863 = vmul.f32 %v3553, %v3729
        %v3864 = vmul.f32 %v3554, %v3729
        %v3865 = vmul.f32 %v3555, %v3729
        %v3866 = vmul.f32 %v3556, %v3733
        %v3867 = vmul.f32 %v3557, %v3733
        %v3868 = vmul.f32 %v3558, %v3733
        %v3869 = vmul.f32 %v3559, %v3733
        %v3870 = vmul.f32 %v3560, %v3733
        %v3871 = vmul.f32 %v3561, %v3733
        %v3872 = vmul.f32 %v3562, %v3733
        %v3873 = vmul.f32 %v3563, %v3733
        %v3874 = vmul.f32 %v3564, %v3737
        %v3875 = vmul.f32 %v3565, %v3737
        %v3876 = vmul.f32 %v3566, %v3737
        %v3877 = vmul.f32 %v3567, %v3737
        %v3878 = vmul.f32 %v3568, %v3737
        %v3879 = vmul.f32 %v3569, %v3737
        %v3880 = vmul.f32 %v3570, %v3737
        %v3881 = vmul.f32 %v3571, %v3737
        %v3882 = vld [vmem:[#allocation2] sm:$0xff]
        %v3883 = vld [vmem:[#allocation2 + $0x8] sm:$0xff]
        %v3884 = vld [vmem:[%s296] sm:$0xff]
        %v3885 = vld [vmem:[%s296 + $0x8] sm:$0xff]
        %v3886 = vld [vmem:[%s296 + $0x10] sm:$0xff]
        %v3887 = vld [vmem:[%s296 + $0x18] sm:$0xff]
        %v3888 = vld [vmem:[%s296 + $0x20] sm:$0xff]
        %v3889 = vld [vmem:[%s296 + $0x28] sm:$0xff]
        %v3890 = vld [vmem:[%s296 + $0x30] sm:$0xff]
        %v3891 = vld [vmem:[%s296 + $0x38] sm:$0xff]
        %v3892 = vld [vmem:[%s296 + $0x40] sm:$0xff]
        %v3893 = vld [vmem:[%s296 + $0x48] sm:$0xff]
        %v3894 = vld [vmem:[%s296 + $0x50] sm:$0xff]
        %v3895 = vld [vmem:[%s296 + $0x58] sm:$0xff]
        %v3896 = vld [vmem:[%s296 + $0x60] sm:$0xff]
        %v3897 = vld [vmem:[%s296 + $0x68] sm:$0xff]
        %v3898 = vld [vmem:[%s296 + $0x70] sm:$0xff]
        %v3899 = vld [vmem:[%s296 + $0x78] sm:$0xff]
        %3900 = vmatprep.subr.mxu0 0.0
        %3901 = vmatpush1.msra.mxu0 %v3754
        %3902 = vmatprep.subr.mxu0 0.0
        %3903 = vmatpush1.msra.mxu0 %v3755
        %3904 = vmatprep.subr.mxu0 0.0
        %3905 = vmatpush1.msra.mxu0 %v3756
        %3906 = vmatprep.subr.mxu0 0.0
        %3907 = vmatpush1.msra.mxu0 %v3757
        %3908 = vmatprep.subr.mxu0 0.0
        %3909 = vmatpush1.msra.mxu0 %v3758
        %3910 = vmatprep.subr.mxu0 0.0
        %3911 = vmatpush1.msra.mxu0 %v3759
        %3912 = vmatprep.subr.mxu0 0.0
        %3913 = vmatpush1.msra.mxu0 %v3760
        %3914 = vmatprep.subr.mxu0 0.0
        %3915 = vmatpush1.msra.mxu0 %v3761
        %3916 = vmatprep.subr.mxu0 0.0
        %3917 = vmatpush1.msra.mxu0 %v3762
        %3918 = vmatprep.subr.mxu0 0.0
        %3919 = vmatpush1.msra.mxu0 %v3763
        %3920 = vmatprep.subr.mxu0 0.0
        %3921 = vmatpush1.msra.mxu0 %v3764
        %3922 = vmatprep.subr.mxu0 0.0
        %3923 = vmatpush1.msra.mxu0 %v3765
        %3924 = vmatprep.subr.mxu0 0.0
        %3925 = vmatpush1.msra.mxu0 %v3766
        %3926 = vmatprep.subr.mxu0 0.0
        %3927 = vmatpush1.msra.mxu0 %v3767
        %3928 = vmatprep.subr.mxu0 0.0
        %3929 = vmatpush1.msra.mxu0 %v3768
        %3930 = vmatprep.subr.mxu0 0.0
        %3931 = vmatpush1.msra.mxu0 %v3769
        %3932 = vmatprep.subr.mxu0 0.0
        %3933 = vmatpush1.msra.mxu0 %v3770
        %3934 = vmatprep.subr.mxu0 0.0
        %3935 = vmatpush1.msra.mxu0 %v3771
        %3936 = vmatprep.subr.mxu0 0.0
        %3937 = vmatpush1.msra.mxu0 %v3772
        %3938 = vmatprep.subr.mxu0 0.0
        %3939 = vmatpush1.msra.mxu0 %v3773
        %3940 = vmatprep.subr.mxu0 0.0
        %3941 = vmatpush1.msra.mxu0 %v3774
        %3942 = vmatprep.subr.mxu0 0.0
        %3943 = vmatpush1.msra.mxu0 %v3775
        %3944 = vmatprep.subr.mxu0 0.0
        %3945 = vmatpush1.msra.mxu0 %v3776
        %3946 = vmatprep.subr.mxu0 0.0
        %3947 = vmatpush1.msra.mxu0 %v3777
        %3948 = vmatprep.subr.mxu0 0.0
        %3949 = vmatpush1.msra.mxu0 %v3778
        %3950 = vmatprep.subr.mxu0 0.0
        %3951 = vmatpush1.msra.mxu0 %v3779
        %3952 = vmatprep.subr.mxu0 0.0
        %3953 = vmatpush1.msra.mxu0 %v3780
        %3954 = vmatprep.subr.mxu0 0.0
        %3955 = vmatpush1.msra.mxu0 %v3781
        %3956 = vmatprep.subr.mxu0 0.0
        %3957 = vmatpush1.msra.mxu0 %v3782
        %3958 = vmatprep.subr.mxu0 0.0
        %3959 = vmatpush1.msra.mxu0 %v3783
        %3960 = vmatprep.subr.mxu0 0.0
        %3961 = vmatpush1.msra.mxu0 %v3784
        %3962 = vmatprep.subr.mxu0 0.0
        %3963 = vmatpush1.msra.mxu0 %v3785
        %3964 = vmatprep.mubr.f32.mxu0 %v3885
        %3965 = vmatmul.mubr.f32.gmra.mrb[0].mxu0 %v3884
        %v3966 = vpop.f32.mrb[0].mxu0
        %v3967 = vadd.f32 0.0, %v3966
        %v3968 = vpop.f32.mrb[0].mxu0
        %3969 = vmatprep.mubr.f32.mxu0 %v3893
        %3970 = vmatmul.mubr.f32.gmra.mrb[0].mxu0 %v3892
        %v3971 = vpop.f32.mrb[0].mxu0
        %v3972 = vadd.f32 0.0, %v3971
        %v3973 = vpop.f32.mrb[0].mxu0
        %3974 = vdwg.mxu0
        %3975 = vmatprep.subr.mxu0 0.0
        %3976 = vmatpush1.msra.mxu0 %v3786
        %3977 = vmatprep.subr.mxu0 0.0
        %3978 = vmatpush1.msra.mxu0 %v3787
        %3979 = vmatprep.subr.mxu0 0.0
        %3980 = vmatpush1.msra.mxu0 %v3788
        %3981 = vmatprep.subr.mxu0 0.0
        %3982 = vmatpush1.msra.mxu0 %v3789
        %3983 = vmatprep.subr.mxu0 0.0
        %3984 = vmatpush1.msra.mxu0 %v3790
        %3985 = vmatprep.subr.mxu0 0.0
        %3986 = vmatpush1.msra.mxu0 %v3791
        %3987 = vmatprep.subr.mxu0 0.0
        %3988 = vmatpush1.msra.mxu0 %v3792
        %3989 = vmatprep.subr.mxu0 0.0
        %3990 = vmatpush1.msra.mxu0 %v3793
        %3991 = vmatprep.subr.mxu0 0.0
        %3992 = vmatpush1.msra.mxu0 %v3794
        %3993 = vmatprep.subr.mxu0 0.0
        %3994 = vmatpush1.msra.mxu0 %v3795
        %3995 = vmatprep.subr.mxu0 0.0
        %3996 = vmatpush1.msra.mxu0 %v3796
        %3997 = vmatprep.subr.mxu0 0.0
        %3998 = vmatpush1.msra.mxu0 %v3797
        %3999 = vmatprep.subr.mxu0 0.0
        %4000 = vmatpush1.msra.mxu0 %v3798
        %4001 = vmatprep.subr.mxu0 0.0
        %4002 = vmatpush1.msra.mxu0 %v3799
        %4003 = vmatprep.subr.mxu0 0.0
        %4004 = vmatpush1.msra.mxu0 %v3800
        %4005 = vmatprep.subr.mxu0 0.0
        %4006 = vmatpush1.msra.mxu0 %v3801
        %4007 = vmatprep.subr.mxu0 0.0
        %4008 = vmatpush1.msra.mxu0 %v3802
        %4009 = vmatprep.subr.mxu0 0.0
        %4010 = vmatpush1.msra.mxu0 %v3803
        %4011 = vmatprep.subr.mxu0 0.0
        %4012 = vmatpush1.msra.mxu0 %v3804
        %4013 = vmatprep.subr.mxu0 0.0
        %4014 = vmatpush1.msra.mxu0 %v3805
        %4015 = vmatprep.subr.mxu0 0.0
        %4016 = vmatpush1.msra.mxu0 %v3806
        %4017 = vmatprep.subr.mxu0 0.0
        %4018 = vmatpush1.msra.mxu0 %v3807
        %4019 = vmatprep.subr.mxu0 0.0
        %4020 = vmatpush1.msra.mxu0 %v3808
        %4021 = vmatprep.subr.mxu0 0.0
        %4022 = vmatpush1.msra.mxu0 %v3809
        %4023 = vmatprep.subr.mxu0 0.0
        %4024 = vmatpush1.msra.mxu0 %v3810
        %4025 = vmatprep.subr.mxu0 0.0
        %4026 = vmatpush1.msra.mxu0 %v3811
        %4027 = vmatprep.subr.mxu0 0.0
        %4028 = vmatpush1.msra.mxu0 %v3812
        %4029 = vmatprep.subr.mxu0 0.0
        %4030 = vmatpush1.msra.mxu0 %v3813
        %4031 = vmatprep.subr.mxu0 0.0
        %4032 = vmatpush1.msra.mxu0 %v3814
        %4033 = vmatprep.subr.mxu0 0.0
        %4034 = vmatpush1.msra.mxu0 %v3815
        %4035 = vmatprep.subr.mxu0 0.0
        %4036 = vmatpush1.msra.mxu0 %v3816
        %4037 = vmatprep.subr.mxu0 0.0
        %4038 = vmatpush1.msra.mxu0 %v3817
        %4039 = vmatprep.mubr.f32.mxu0 %v3887
        %4040 = vmatmul.mubr.f32.gmra.mrb[0].mxu0 %v3886
        %v4041 = vpop.f32.mrb[0].mxu0
        %v4042 = vadd.f32 %v3967, %v4041
        %v4043 = vpop.f32.mrb[0].mxu0
        %4044 = vmatprep.mubr.f32.mxu0 %v3895
        %4045 = vmatmul.mubr.f32.gmra.mrb[0].mxu0 %v3894
        %v4046 = vpop.f32.mrb[0].mxu0
        %v4047 = vadd.f32 %v3972, %v4046
        %v4048 = vpop.f32.mrb[0].mxu0
        %4049 = vdwg.mxu0
        %4050 = vmatprep.subr.mxu0 0.0
        %4051 = vmatpush1.msra.mxu0 %v3818
        %4052 = vmatprep.subr.mxu0 0.0
        %4053 = vmatpush1.msra.mxu0 %v3819
        %4054 = vmatprep.subr.mxu0 0.0
        %4055 = vmatpush1.msra.mxu0 %v3820
        %4056 = vmatprep.subr.mxu0 0.0
        %4057 = vmatpush1.msra.mxu0 %v3821
        %4058 = vmatprep.subr.mxu0 0.0
        %4059 = vmatpush1.msra.mxu0 %v3822
        %4060 = vmatprep.subr.mxu0 0.0
        %4061 = vmatpush1.msra.mxu0 %v3823
        %4062 = vmatprep.subr.mxu0 0.0
        %4063 = vmatpush1.msra.mxu0 %v3824
        %4064 = vmatprep.subr.mxu0 0.0
        %4065 = vmatpush1.msra.mxu0 %v3825
        %4066 = vmatprep.subr.mxu0 0.0
        %4067 = vmatpush1.msra.mxu0 %v3826
        %4068 = vmatprep.subr.mxu0 0.0
        %4069 = vmatpush1.msra.mxu0 %v3827
        %4070 = vmatprep.subr.mxu0 0.0
        %4071 = vmatpush1.msra.mxu0 %v3828
        %4072 = vmatprep.subr.mxu0 0.0
        %4073 = vmatpush1.msra.mxu0 %v3829
        %4074 = vmatprep.subr.mxu0 0.0
        %4075 = vmatpush1.msra.mxu0 %v3830
        %4076 = vmatprep.subr.mxu0 0.0
        %4077 = vmatpush1.msra.mxu0 %v3831
        %4078 = vmatprep.subr.mxu0 0.0
        %4079 = vmatpush1.msra.mxu0 %v3832
        %4080 = vmatprep.subr.mxu0 0.0
        %4081 = vmatpush1.msra.mxu0 %v3833
        %4082 = vmatprep.subr.mxu0 0.0
        %4083 = vmatpush1.msra.mxu0 %v3834
        %4084 = vmatprep.subr.mxu0 0.0
        %4085 = vmatpush1.msra.mxu0 %v3835
        %4086 = vmatprep.subr.mxu0 0.0
        %4087 = vmatpush1.msra.mxu0 %v3836
        %4088 = vmatprep.subr.mxu0 0.0
        %4089 = vmatpush1.msra.mxu0 %v3837
        %4090 = vmatprep.subr.mxu0 0.0
        %4091 = vmatpush1.msra.mxu0 %v3838
        %4092 = vmatprep.subr.mxu0 0.0
        %4093 = vmatpush1.msra.mxu0 %v3839
        %4094 = vmatprep.subr.mxu0 0.0
        %4095 = vmatpush1.msra.mxu0 %v3840
        %4096 = vmatprep.subr.mxu0 0.0
        %4097 = vmatpush1.msra.mxu0 %v3841
        %4098 = vmatprep.subr.mxu0 0.0
        %4099 = vmatpush1.msra.mxu0 %v3842
        %4100 = vmatprep.subr.mxu0 0.0
        %4101 = vmatpush1.msra.mxu0 %v3843
        %4102 = vmatprep.subr.mxu0 0.0
        %4103 = vmatpush1.msra.mxu0 %v3844
        %4104 = vmatprep.subr.mxu0 0.0
        %4105 = vmatpush1.msra.mxu0 %v3845
        %4106 = vmatprep.subr.mxu0 0.0
        %4107 = vmatpush1.msra.mxu0 %v3846
        %4108 = vmatprep.subr.mxu0 0.0
        %4109 = vmatpush1.msra.mxu0 %v3847
        %4110 = vmatprep.subr.mxu0 0.0
        %4111 = vmatpush1.msra.mxu0 %v3848
        %4112 = vmatprep.subr.mxu0 0.0
        %4113 = vmatpush1.msra.mxu0 %v3849
        %4114 = vmatprep.mubr.f32.mxu0 %v3889
        %4115 = vmatmul.mubr.f32.gmra.mrb[0].mxu0 %v3888
        %v4116 = vpop.f32.mrb[0].mxu0
        %v4117 = vadd.f32 %v4042, %v4116
        %v4118 = vpop.f32.mrb[0].mxu0
        %4119 = vmatprep.mubr.f32.mxu0 %v3897
        %4120 = vmatmul.mubr.f32.gmra.mrb[0].mxu0 %v3896
        %v4121 = vpop.f32.mrb[0].mxu0
        %v4122 = vadd.f32 %v4047, %v4121
        %v4123 = vpop.f32.mrb[0].mxu0
        %4124 = vdwg.mxu0
        %4125 = vmatprep.subr.mxu0 0.0
        %4126 = vmatpush1.msra.mxu0 %v3850
        %4127 = vmatprep.subr.mxu0 0.0
        %4128 = vmatpush1.msra.mxu0 %v3851
        %4129 = vmatprep.subr.mxu0 0.0
        %4130 = vmatpush1.msra.mxu0 %v3852
        %4131 = vmatprep.subr.mxu0 0.0
        %4132 = vmatpush1.msra.mxu0 %v3853
        %4133 = vmatprep.subr.mxu0 0.0
        %4134 = vmatpush1.msra.mxu0 %v3854
        %4135 = vmatprep.subr.mxu0 0.0
        %4136 = vmatpush1.msra.mxu0 %v3855
        %4137 = vmatprep.subr.mxu0 0.0
        %4138 = vmatpush1.msra.mxu0 %v3856
        %4139 = vmatprep.subr.mxu0 0.0
        %4140 = vmatpush1.msra.mxu0 %v3857
        %4141 = vmatprep.subr.mxu0 0.0
        %4142 = vmatpush1.msra.mxu0 %v3858
        %4143 = vmatprep.subr.mxu0 0.0
        %4144 = vmatpush1.msra.mxu0 %v3859
        %4145 = vmatprep.subr.mxu0 0.0
        %4146 = vmatpush1.msra.mxu0 %v3860
        %4147 = vmatprep.subr.mxu0 0.0
        %4148 = vmatpush1.msra.mxu0 %v3861
        %4149 = vmatprep.subr.mxu0 0.0
        %4150 = vmatpush1.msra.mxu0 %v3862
        %4151 = vmatprep.subr.mxu0 0.0
        %4152 = vmatpush1.msra.mxu0 %v3863
        %4153 = vmatprep.subr.mxu0 0.0
        %4154 = vmatpush1.msra.mxu0 %v3864
        %4155 = vmatprep.subr.mxu0 0.0
        %4156 = vmatpush1.msra.mxu0 %v3865
        %4157 = vmatprep.subr.mxu0 0.0
        %4158 = vmatpush1.msra.mxu0 %v3866
        %4159 = vmatprep.subr.mxu0 0.0
        %4160 = vmatpush1.msra.mxu0 %v3867
        %4161 = vmatprep.subr.mxu0 0.0
        %4162 = vmatpush1.msra.mxu0 %v3868
        %4163 = vmatprep.subr.mxu0 0.0
        %4164 = vmatpush1.msra.mxu0 %v3869
        %4165 = vmatprep.subr.mxu0 0.0
        %4166 = vmatpush1.msra.mxu0 %v3870
        %4167 = vmatprep.subr.mxu0 0.0
        %4168 = vmatpush1.msra.mxu0 %v3871
        %4169 = vmatprep.subr.mxu0 0.0
        %4170 = vmatpush1.msra.mxu0 %v3872
        %4171 = vmatprep.subr.mxu0 0.0
        %4172 = vmatpush1.msra.mxu0 %v3873
        %4173 = vmatprep.subr.mxu0 0.0
        %4174 = vmatpush1.msra.mxu0 %v3874
        %4175 = vmatprep.subr.mxu0 0.0
        %4176 = vmatpush1.msra.mxu0 %v3875
        %4177 = vmatprep.subr.mxu0 0.0
        %4178 = vmatpush1.msra.mxu0 %v3876
        %4179 = vmatprep.subr.mxu0 0.0
        %4180 = vmatpush1.msra.mxu0 %v3877
        %4181 = vmatprep.subr.mxu0 0.0
        %4182 = vmatpush1.msra.mxu0 %v3878
        %4183 = vmatprep.subr.mxu0 0.0
        %4184 = vmatpush1.msra.mxu0 %v3879
        %4185 = vmatprep.subr.mxu0 0.0
        %4186 = vmatpush1.msra.mxu0 %v3880
        %4187 = vmatprep.subr.mxu0 0.0
        %4188 = vmatpush1.msra.mxu0 %v3881
        %4189 = vmatprep.mubr.f32.mxu0 %v3891
        %4190 = vmatmul.mubr.f32.gmra.mrb[0].mxu0 %v3890
        %v4191 = vpop.f32.mrb[0].mxu0
        %v4192 = vadd.f32 %v4117, %v4191
        %v4193 = vpop.f32.mrb[0].mxu0
        %4194 = vmatprep.mubr.f32.mxu0 %v3899
        %4195 = vmatmul.mubr.f32.gmra.mrb[0].mxu0 %v3898
        %v4196 = vpop.f32.mrb[0].mxu0
        %v4197 = vadd.f32 %v4122, %v4196
        %v4198 = vpop.f32.mrb[0].mxu0
        %4199 = vdwg.mxu0
        %v4200 = vadd.f32 %v3882, %v4192
        %v4201 = vadd.f32 %v3883, %v4197
        %4202 = vst [vmem:[#allocation2] sm:$0xff] %v4200
        %4203 = vst [vmem:[#allocation2 + $0x8] sm:$0xff] %v4201
        %p4204 = scmp.eq.s32.totalorder %s34, 1
        // Predicated region
        $region57: #{linear4bit.1} parent=35 // pred_check
          %p4205 = pneg %p4204
        $region58: #{linear4bit.1} parent=35 // pred_check_branch
          %4207 = sbr.rel (%p4205) target = $region60
        $region59: #{linear4bit.1} parent=35 // pred_region
          %v4208 = vld [vmem:[#allocation2] sm:$0xff]
          %v4209 = vld [vmem:[#allocation2 + $0x8] sm:$0xff]
          %v4210 = vld [vmem:[%s322] sm:$0x1]
          %v4212 = vlaneseq
          %v4213 = vshrl.u32 %v4212, 7
          %v4214 = vsub.s32 0, %v4213
          %v4215 = vrot.slane %v4210, %v4214
          %v4217 = vadd.f32 %v4208, %v4215
          %v4218 = vadd.f32 %v4209, %v4215
          %4219 = vst [vmem:[%s360] sm:$0xff] %v4217
          %4220 = vst [vmem:[%s360 + $0x8] sm:$0xff] %v4218
        $region60: #{linear4bit.1} parent=35 // pred_fallthru
          _
        %s4221 = sand.u32 %s166, 1
        %s4222 = scalar_lea.sflag [#allocation5], %s4221
        %s4223 = sand.u32 %s166, 1
        %s4224 = smul.addr %s4223, 16
        %s4225 = scalar_lea.vmem [#allocation11], %s4224
        // Predicated region
        $region61: #{linear4bit.1} parent=35 // pred_check
          %p4226 = pneg %p176
        $region62: #{linear4bit.1} parent=35 // pred_check_branch
          %4228 = sbr.rel (%p4226) target = $region64
        $region63: #{linear4bit.1} parent=35 // pred_region
          %s4229 = smul.u32 2, %s32
          %s4231 = ssub.s32 256, 256
          %4232 = vsyncadd %s4222, %s4231
          %s4233 = smul.addr %s4229, 3
          %s4234 = sadd.s32 %s33, %s4233
          %s4235 = smul.addr %s4234, 128
          %s4236 = scalar_lea.hbm %s4, %s4235
          %s4237 = sshll.u32 %s4225, 4
          %s4238 = int_to_ptr.vmem [resolvable:$true] %s4237
          %4243 = dma.vmem_to_hbm [thread:$0]  %s4238, 256, %s4236, %s4222, 128, 384, 8
        $region64: #{linear4bit.1} parent=35 // pred_fallthru
          _
      $region36: #{linear4bit.1} parent=5 // pred_fallthru
        _
      %p4244 = scmp.le.s32.totalorder 2, %s22
      // Predicated region
      $region65: #{linear4bit.1} parent=5 // pred_check
        %p4245 = pneg %p4244
      $region66: #{linear4bit.1} parent=5 // pred_check_branch
        %4247 = sbr.rel (%p4245) target = $region68
      $region67: #{linear4bit.1} parent=5 // pred_region
        %s4248 = ssub.s32 %s22, 2
        // Predicated region
        $region69: #{linear4bit.1} parent=67 // pred_check
          %p4249 = pneg %p182
        $region70: #{linear4bit.1} parent=67 // pred_check_branch
          %4251 = sbr.rel (%p4249) target = $region72
        $region71: #{linear4bit.1} parent=67 // pred_region
          %s4252 = sand.u32 %s167, 1
          %s4253 = scalar_lea.sflag [#allocation5], %s4252
          %s4254 = sand.u32 %s167, 1
          %s4255 = smul.addr %s4254, 16
          %s4256 = scalar_lea.vmem [#allocation11], %s4255
          %4257 = dma.done %s4253, 256
        $region72: #{linear4bit.1} parent=67 // pred_fallthru
          _
      $region68: #{linear4bit.1} parent=5 // pred_fallthru
        _
    $region6: #{linear4bit.1} parent=1 // loop_footer
      %s26 = sadd.s32 1, %s22
    $region7: #{linear4bit.1} parent=1 // loop_footer_branch
      %21 = sbr.rel target = $region3
    $region8: #{linear4bit.1} parent=1 // loop_exit
      _
    %4258 = vsyncpa [#allocation4], 1
    %s4259 = scalar_lea.sflag [#allocation4], 1
    %4260 = vsyncpa %s4259, 1
    %4261 = vsyncpa [#allocation7], 1
    %s4262 = scalar_lea.sflag [#allocation7], 1
    %4263 = vsyncpa %s4262, 1
    %4264 = vsyncpa [#allocation10], 1
    %s4265 = scalar_lea.sflag [#allocation10], 1
    %4266 = vsyncpa %s4265, 1
    %4267 = vsyncpa [#allocation5], 1
    %s4268 = scalar_lea.sflag [#allocation5], 1
    %4269 = vsyncpa %s4268, 1

</llo_original>
